<compile_context>
chip_gen: v5e
topology: v5e:2x2
jax: 0.10.0
libtpu: 0.0.40
codegen_flags: <defaults>
</compile_context>

<pallas_src>
import collections

import jax
import jax.numpy as jnp
from jax.experimental import pallas as pl
from jax.experimental.pallas import tpu as pltpu

# ----------------------------- constants (match the torch module) ------------
POS_WEIGHT = 10.0      # BCEWithLogitsLoss(pos_weight=10.0)
IOU_SMOOTH = 1.0       # IoULoss smooth term (BEV-LaneDet soft-IoU)
VAR_WEIGHT = 1.0       # NDPushPullLoss(1.0, 1.0, 1.0, 5.0, 200)
DIST_WEIGHT = 1.0
MARGIN_VAR = 1.0
MARGIN_DIST = 5.0
IGNORE_LABEL = 200
KMAX = 4               # max instance id assumed present in gt (< IGNORE_LABEL)
KPAD = 8               # instance rows padded to a full sublane group
LANES = 128
_VMEM_LIMIT = 32 * 1024 * 1024


def _cparams(*semantics):
    return pltpu.CompilerParams(dimension_semantics=tuple(semantics),
                                vmem_limit_bytes=_VMEM_LIMIT)


def _pick_lane_tile(p, max_tile=1024):
    """Largest multiple-of-128 divisor of p (<= max_tile), else full extent."""
    if p <= max_tile:
        return p
    for t in range(max_tile - max_tile % 128, 127, -128):
        if p % t == 0:
            return t
    return p


def _pick_row_tile(rows, max_tile=512):
    """Largest multiple-of-8 divisor of rows (<= max_tile), else full extent."""
    if rows <= max_tile:
        return rows
    for t in range(max_tile - max_tile % 8, 7, -8):
        if rows % t == 0:
            return t
    return rows


# ----------------------------- Pallas kernels --------------------------------
def _heads_kernel(x_ref, w_ref, b_ref, o_ref):
    # lane-dense 1x1-conv heads:  (Cout, Cin) @ (Cin, TP) + (Cout, 1)
    o_ref[...] = jnp.dot(w_ref[...], x_ref[...],
                         preferred_element_type=jnp.float32) + b_ref[...]


def _softplus_neg(x):
    # softplus(-x) = -log(sigmoid(x)); stable; sigmoid(x) = exp(-softplus(-x)).
    # (log(1+e) form is numerically equivalent to log1p here and proven to lower.)
    return jnp.maximum(-x, 0.0) + jnp.log(1.0 + jnp.exp(-jnp.abs(x)))


def _pixel_loss_kernel(head_ref, gseg_ref, goff_ref, gz_ref, iseg_ref,
                       bce_ref, inter_ref, total_ref, offb_ref, zsq_ref,
                       bce2_ref, inter2_ref, total2_ref):
    # Fused per-pixel losses on the head output block (8, TR, 128):
    #   ch 0: BEV seg logits, ch 3: offset_y logits, ch 4: z, ch 5: 2D seg logits.
    @pl.when(pl.program_id(1) == 0)
    def _():
        for r in (bce_ref, inter_ref, total_ref, offb_ref, zsq_ref,
                  bce2_ref, inter2_ref, total2_ref):
            r[...] = jnp.zeros_like(r)

    seg = gseg_ref[...]                         # (TR, 128) in {0, 1}

    # ---- BEV seg: pos-weighted BCE-with-logits + soft-IoU partials ----------
    x = head_ref[0]
    sp_pos = _softplus_neg(x)                   # -log sigmoid(x)
    sp_neg = sp_pos + x                         # -log(1 - sigmoid(x))
    sig = jnp.exp(-sp_pos)                      # sigmoid(x), reuses softplus
    bce_ref[...] += jnp.sum(POS_WEIGHT * seg * sp_pos + (1.0 - seg) * sp_neg,
                            axis=0, keepdims=True)
    inter_ref[...] += jnp.sum(sig * seg, axis=0, keepdims=True)
    total_ref[...] += jnp.sum(sig + seg, axis=0, keepdims=True)

    # ---- offset: BCELoss(gt_seg * sigmoid(off), gt_offset_y) in logit space --
    # With gt_seg in {0,1}: seg=1 -> -log p = softplus(-off), -log(1-p)=softplus(off)
    #                       seg=0 -> p = 0 -> -log p clamps to 100, -log(1-p)=0
    off = head_ref[3]
    sp_noff = _softplus_neg(off)
    sp_poff = sp_noff + off
    t_off = goff_ref[...]
    is_fg = seg > 0.5
    neg_log_p = jnp.where(is_fg, jnp.minimum(sp_noff, 100.0), 100.0)
    neg_log_1mp = jnp.where(is_fg, jnp.minimum(sp_poff, 100.0), 0.0)
    offb_ref[...] += jnp.sum(t_off * neg_log_p + (1.0 - t_off) * neg_log_1mp,
                             axis=0, keepdims=True)

    # ---- z: MSELoss(gt_seg * z, gt_z) ----------------------------------------
    err = seg * head_ref[4] - gz_ref[...]
    zsq_ref[...] += jnp.sum(err * err, axis=0, keepdims=True)

    # ---- 2D seg loss on channel 5 vs image_gt_segment ------------------------
    x2 = head_ref[5]
    t2 = iseg_ref[...]
    sp_pos2 = _softplus_neg(x2)
    sp_neg2 = sp_pos2 + x2
    sig2 = jnp.exp(-sp_pos2)
    bce2_ref[...] += jnp.sum(POS_WEIGHT * t2 * sp_pos2 + (1.0 - t2) * sp_neg2,
                             axis=0, keepdims=True)
    inter2_ref[...] += jnp.sum(sig2 * t2, axis=0, keepdims=True)
    total2_ref[...] += jnp.sum(sig2 + t2, axis=0, keepdims=True)


def _seg_loss_kernel(pred_ref, gt_ref, bce_ref, inter_ref, total_ref):
    # Standalone seg loss (used by the homography-warped branch).
    @pl.when(pl.program_id(1) == 0)
    def _():
        bce_ref[...] = jnp.zeros_like(bce_ref)
        inter_ref[...] = jnp.zeros_like(inter_ref)
        total_ref[...] = jnp.zeros_like(total_ref)
    x = pred_ref[...]
    t = gt_ref[...]
    sp_pos = _softplus_neg(x)
    sp_neg = sp_pos + x
    sig = jnp.exp(-sp_pos)
    bce_ref[...] += jnp.sum(POS_WEIGHT * t * sp_pos + (1.0 - t) * sp_neg,
                            axis=0, keepdims=True)
    inter_ref[...] += jnp.sum(sig * t, axis=0, keepdims=True)
    total_ref[...] += jnp.sum(sig + t, axis=0, keepdims=True)


def _pushpull_kernel(emb_ref, inst_ref, pull_ref, push_ref, cnt_ref):
    # NDPushPullLoss(1,1,1,5,200) with a static KMAX instance-id budget.
    # Centers / counts / distances computed with one-hot MXU matmuls instead of
    # per-instance cross-lane reductions.
    @pl.when(pl.program_id(0) == 0)
    def _():
        pull_ref[...] = jnp.zeros_like(pull_ref)
        push_ref[...] = jnp.zeros_like(push_ref)
        cnt_ref[...] = jnp.zeros_like(cnt_ref)

    emb = emb_ref[...]                       # (Ce, P)
    inst = inst_ref[...]                     # (1, P) float instance ids
    P = emb.shape[1]

    # one-hot instance masks (KPAD, P); rows with id > KMAX are dead.
    ids_i = jax.lax.broadcasted_iota(jnp.int32, (KPAD, P), 0) + 1
    ids_f = ids_i.astype(jnp.float32)
    onehot = jnp.where((inst == ids_f) & (ids_i <= KMAX), 1.0, 0.0)
    cnt = jnp.sum(onehot, axis=1, keepdims=True)             # (KPAD, 1)
    valid = jnp.where(cnt > 0.0, 1.0, 0.0)
    safe = jnp.maximum(cnt, 1.0)

    # instance centers via MXU: (KPAD, P) . (Ce, P)^T -> (KPAD, Ce)
    sums = jax.lax.dot_general(onehot, emb, (((1,), (1,)), ((), ())),
                               preferred_element_type=jnp.float32)
    centers = sums / safe

    # pull: per-pixel distance to own center via ||e||^2 - 2 e.c + ||c||^2
    e_sq = jnp.sum(emb * emb, axis=0, keepdims=True)          # (1, P)
    c_sq = jnp.sum(centers * centers, axis=1, keepdims=True)  # (KPAD, 1)
    ec = jnp.dot(centers, emb, preferred_element_type=jnp.float32)   # (KPAD, P)
    dist = jnp.sqrt(jnp.maximum(e_sq - 2.0 * ec + c_sq, 0.0))
    pull_tile = valid * onehot * jnp.maximum(dist - MARGIN_VAR, 0.0) / safe
    pull_b = jnp.sum(jnp.sum(pull_tile, axis=1, keepdims=True),
                     axis=0, keepdims=True)                   # (1, 1)

    # push: pairwise center distances, also on the MXU.
    cc = jax.lax.dot_general(centers, centers, (((1,), (1,)), ((), ())),
                             preferred_element_type=jnp.float32)     # (KPAD, KPAD)
    ri = jax.lax.broadcasted_iota(jnp.int32, (KPAD, KPAD), 0)
    ci = jax.lax.broadcasted_iota(jnp.int32, (KPAD, KPAD), 1)
    eye = jnp.where(ri == ci, 1.0, 0.0)
    csq_row = jnp.sum(cc * eye, axis=0, keepdims=True)        # (1, KPAD) = diag(cc)
    cd = jnp.sqrt(jnp.maximum(c_sq + csq_row - 2.0 * cc, 0.0))
    ones_p = jnp.ones((1, P), jnp.float32)
    cnt_row = jax.lax.dot_general(ones_p, onehot, (((1,), (1,)), ((), ())),
                                  preferred_element_type=jnp.float32)  # (1, KPAD)
    valid_row = jnp.where(cnt_row > 0.0, 1.0, 0.0)
    pair_valid = valid * valid_row                            # (KPAD, KPAD)
    push_tile = pair_valid * (1.0 - eye) * jnp.maximum(MARGIN_DIST - cd, 0.0)
    push_b = jnp.sum(jnp.sum(push_tile, axis=1, keepdims=True),
                     axis=0, keepdims=True)                   # (1, 1)
    cnt_b = jnp.sum(valid, axis=0, keepdims=True)             # (1, 1)

    pull_ref[...] += pull_b
    push_ref[...] += push_b
    cnt_ref[...] += cnt_b


# ----------------------------- kernel wrappers --------------------------------
def fused_heads(x_bcp, w_t, b):
    """x_bcp: (B, Cin, P); w_t: (Cout, Cin); b: (Cout, 1) -> (B, Cout, P)."""
    B, Cin, P = x_bcp.shape
    Cout = w_t.shape[0]
    TP = _pick_lane_tile(P)
    grid = (B, P // TP)
    return pl.pallas_call(
        _heads_kernel,
        out_shape=jax.ShapeDtypeStruct((B, Cout, P), jnp.float32),
        grid=grid,
        in_specs=[pl.BlockSpec((None, Cin, TP), lambda b_, p: (b_, 0, p)),
                  pl.BlockSpec((Cout, Cin), lambda b_, p: (0, 0)),
                  pl.BlockSpec((Cout, 1), lambda b_, p: (0, 0))],
        out_specs=pl.BlockSpec((None, Cout, TP), lambda b_, p: (b_, 0, p)),
        compiler_params=_cparams("parallel", "parallel"),
    )(x_bcp, w_t, b)


def fused_pixel_losses(head_out, gt_seg, gt_offset_y, gt_z, image_gt_segment):
    """All per-pixel losses in one pass over the head output."""
    B, Cout, P = head_out.shape
    assert P % LANES == 0
    R = P // LANES
    head4 = head_out.reshape(B, Cout, R, LANES)
    gseg = gt_seg.reshape(B, R, LANES).astype(jnp.float32)
    goff = gt_offset_y.reshape(B, R, LANES).astype(jnp.float32)
    gz = gt_z.reshape(B, R, LANES).astype(jnp.float32)
    iseg = image_gt_segment.reshape(B, R, LANES).astype(jnp.float32)
    TR = _pick_row_tile(R)
    grid = (B, R // TR)
    head_spec = pl.BlockSpec((None, Cout, TR, LANES), lambda b, r: (b, 0, r, 0))
    gt_spec = pl.BlockSpec((None, TR, LANES), lambda b, r: (b, r, 0))
    acc_spec = pl.BlockSpec((None, 1, LANES), lambda b, r: (b, 0, 0))
    outs = pl.pallas_call(
        _pixel_loss_kernel,
        out_shape=(jax.ShapeDtypeStruct((B, 1, LANES), jnp.float32),) * 8,
        grid=grid,
        in_specs=[head_spec, gt_spec, gt_spec, gt_spec, gt_spec],
        out_specs=(acc_spec,) * 8,
        compiler_params=_cparams("parallel", "arbitrary"),
    )(head4, gseg, goff, gz, iseg)
    bce, inter, total, offb, zsq, bce2, inter2, total2 = outs
    n = float(B * P)

    def _seg(bce_p, inter_p, total_p):
        i_s = jnp.sum(inter_p)
        u_s = jnp.sum(total_p) - i_s
        iou = (i_s + IOU_SMOOTH) / (u_s + IOU_SMOOTH)
        return jnp.sum(bce_p) / n + (1.0 - iou)

    loss_seg = _seg(bce, inter, total)
    loss_seg_2d = _seg(bce2, inter2, total2)
    loss_offset = jnp.sum(offb) / n
    loss_z = jnp.sum(zsq) / n
    return loss_seg, loss_seg_2d, loss_offset, loss_z


def seg_bce_iou_loss(pred_img, gt_img):
    """BCEWithLogits(pos_weight=10) + IoULoss(sigmoid(pred), gt) on NCHW maps."""
    B = pred_img.shape[0]
    P = pred_img.shape[-2] * pred_img.shape[-1]
    assert P % LANES == 0
    R = P // LANES
    pred_s = pred_img.reshape(B, R, LANES).astype(jnp.float32)
    gt_s = gt_img.reshape(B, R, LANES).astype(jnp.float32)
    TR = _pick_row_tile(R)
    grid = (B, R // TR)
    row_spec = pl.BlockSpec((None, TR, LANES), lambda b, r: (b, r, 0))
    acc_spec = pl.BlockSpec((None, 1, LANES), lambda b, r: (b, 0, 0))
    bce, inter, total = pl.pallas_call(
        _seg_loss_kernel,
        out_shape=(jax.ShapeDtypeStruct((B, 1, LANES), jnp.float32),) * 3,
        grid=grid,
        in_specs=[row_spec, row_spec],
        out_specs=(acc_spec,) * 3,
        compiler_params=_cparams("parallel", "arbitrary"),
    )(pred_s, gt_s)
    n = float(B * P)
    inter_s = jnp.sum(inter)
    union_s = jnp.sum(total) - inter_s
    iou = (inter_s + IOU_SMOOTH) / (union_s + IOU_SMOOTH)
    return jnp.sum(bce) / n + (1.0 - iou)


def pushpull_loss(emb_bcp, gt_instance):
    """emb_bcp: (B, Ce, P); gt_instance: (B, 1, H, W)."""
    # TODO(synk): torch.unique-based dynamic instance discovery has no static
    # Pallas equivalent; instance ids are assumed to lie in {0,...,KMAX}.
    B, Ce, P = emb_bcp.shape
    inst = gt_instance.reshape(B, 1, P).astype(jnp.float32)
    emb_f = emb_bcp.astype(jnp.float32)
    pull, push, cnt = pl.pallas_call(
        _pushpull_kernel,
        out_shape=(jax.ShapeDtypeStruct((1, LANES), jnp.float32),) * 3,
        grid=(B,),
        in_specs=[pl.BlockSpec((None, Ce, P), lambda b: (b, 0, 0)),
                  pl.BlockSpec((None, 1, P), lambda b: (b, 0, 0))],
        out_specs=(pl.BlockSpec((1, LANES), lambda b: (0, 0)),) * 3,
        compiler_params=_cparams("arbitrary"),
    )(emb_f, inst)
    # TODO(synk): push is normalized by the instance count (as in v1); verify
    # against the reference NDPushPullLoss pair-count normalization.
    C = jnp.maximum(cnt[0, 0], 1.0)     # guard: no instances -> loss 0, not NaN
    return (DIST_WEIGHT * push[0, 0] + VAR_WEIGHT * pull[0, 0]) / C


# ----------------------------- homography helpers (glue) ----------------------
def _inv3x3(m):
    a, b, c = m[..., 0, 0], m[..., 0, 1], m[..., 0, 2]
    d, e, f = m[..., 1, 0], m[..., 1, 1], m[..., 1, 2]
    g, h, i = m[..., 2, 0], m[..., 2, 1], m[..., 2, 2]
    A = e * i - f * h
    Bc = -(d * i - f * g)
    Cc = d * h - e * g
    D = -(b * i - c * h)
    E = a * i - c * g
    F = -(a * h - b * g)
    G = b * f - c * e
    Hc = -(a * f - c * d)
    I = a * e - b * d
    det = a * A + b * Bc + c * Cc
    adj = jnp.stack([jnp.stack([A, D, G], -1),
                     jnp.stack([Bc, E, Hc], -1),
                     jnp.stack([Cc, F, I], -1)], -2)
    return adj / det[..., None, None]


def _normal_transform_pixel(h, w):
    wd = float(w - 1) if w != 1 else 1e-14
    hd = float(h - 1) if h != 1 else 1e-14
    return jnp.array([[2.0 / wd, 0.0, -1.0],
                      [0.0, 2.0 / hd, -1.0],
                      [0.0, 0.0, 1.0]], jnp.float32)


def denormalize_homography(h_norm, dsize_src, dsize_dst):
    n_src = _normal_transform_pixel(*dsize_src)[None]
    n_dst = _normal_transform_pixel(*dsize_dst)[None]
    return _inv3x3(n_dst) @ (h_norm @ n_src)


def _normalize_homography(h_pix, dsize_src, dsize_dst):
    n_src = _normal_transform_pixel(*dsize_src)[None]
    n_dst = _normal_transform_pixel(*dsize_dst)[None]
    return n_dst @ (h_pix @ _inv3x3(n_src))


def warp_perspective(src, M, dsize):
    # TODO(synk): the data-dependent bilinear gather (grid_sample) has no clean
    # Pallas TPU equivalent; implemented in plain JAX with kornia semantics.
    B, C, H, W = src.shape
    h_out, w_out = dsize
    dst_norm_src_norm = _normalize_homography(M, (H, W), (h_out, w_out))
    src_norm_dst_norm = _inv3x3(dst_norm_src_norm)
    xs = jnp.linspace(-1.0, 1.0, w_out, dtype=jnp.float32)
    ys = jnp.linspace(-1.0, 1.0, h_out, dtype=jnp.float32)
    gx, gy = jnp.meshgrid(xs, ys)
    pts = jnp.stack([gx.ravel(), gy.ravel(),
                     jnp.ones(h_out * w_out, jnp.float32)], -1)        # (N, 3)
    tp = jnp.einsum('bij,nj->bni', src_norm_dst_norm, pts)             # (B, N, 3)
    zd = tp[..., 2:3]
    zd = jnp.where(jnp.abs(zd) > 1e-8, zd, 1e-8)
    xy = tp[..., :2] / zd
    sx = (xy[..., 0] + 1.0) * 0.5 * (W - 1)
    sy = (xy[..., 1] + 1.0) * 0.5 * (H - 1)
    x0 = jnp.floor(sx)
    y0 = jnp.floor(sy)
    wx1 = sx - x0
    wx0 = 1.0 - wx1
    wy1 = sy - y0
    wy0 = 1.0 - wy1
    flat = src.reshape(B, C, H * W)
    N = h_out * w_out

    def tap(ix, iy, wgt):
        valid = ((ix >= 0) & (ix <= W - 1) & (iy >= 0) & (iy <= H - 1)).astype(src.dtype)
        idx = (jnp.clip(iy, 0, H - 1) * W + jnp.clip(ix, 0, W - 1)).astype(jnp.int32)
        idx = jnp.broadcast_to(idx[:, None, :], (B, C, N))
        g = jnp.take_along_axis(flat, idx, axis=2)
        return g * (valid * wgt)[:, None, :]

    out = (tap(x0, y0, wx0 * wy0) + tap(x0 + 1.0, y0, wx1 * wy0) +
           tap(x0, y0 + 1.0, wx0 * wy1) + tap(x0 + 1.0, y0 + 1.0, wx1 * wy1))
    return out.reshape(B, C, h_out, w_out)


# ----------------------------- synthetic wrapped model ------------------------
def make_params(key, cin):
    k1, k2, k3 = jax.random.split(key, 3)
    return {
        'w_bev': 0.1 * jax.random.normal(k1, (cin, 5), jnp.float32),
        'b_bev': jnp.zeros((1, 5), jnp.float32),
        'w_2d': 0.1 * jax.random.normal(k2, (cin, 3), jnp.float32),
        'b_2d': jnp.zeros((1, 3), jnp.float32),
        'homography': jnp.eye(3, dtype=jnp.float32)
                      + 0.02 * jax.random.normal(k3, (3, 3), jnp.float32),
    }


def synthetic_model(params, inputs, images_gt, configs):
    # inputs: (B, Cin, H, W) NCHW.  Both prediction heads are fused into a single
    # lane-dense (Cout=8, pixels) Pallas matmul — one HBM read of the features.
    # Channel layout: 0 pred, 1:3 emb, 3 offset_y, 4 z, 5 pred_2d, 6:8 emb_2d.
    B, Cin, H, W = inputs.shape
    x_bcp = inputs.reshape(B, Cin, H * W).astype(jnp.float32)
    w_all_t = jnp.transpose(
        jnp.concatenate([params['w_bev'], params['w_2d']], axis=1))   # (8, Cin)
    b_all = jnp.transpose(
        jnp.concatenate([params['b_bev'], params['b_2d']], axis=1))   # (8, 1)
    head_out = fused_heads(x_bcp, w_all_t, b_all)                     # (B, 8, H*W)
    hm = jnp.broadcast_to(params['homography'][None], (B, 3, 3))
    return head_out, hm


# ----------------------------- Combine_Model_and_Loss.forward (train=True) ----
def combine_model_and_loss_forward(params, inputs, images_gt, configs,
                                   gt_seg, gt_instance, gt_offset_y, gt_z,
                                   image_gt_segment, image_gt_instance):
    head_out, homograph_matrix = synthetic_model(params, inputs, images_gt, configs)
    B = head_out.shape[0]
    H, W = inputs.shape[2], inputs.shape[3]

    # fused per-pixel losses straight off the (B, 8, P) head output
    loss_seg, loss_seg_2d, loss_offset_m, loss_z_m = fused_pixel_losses(
        head_out, gt_seg, gt_offset_y, gt_z, image_gt_segment)

    # embedding push-pull losses
    emb = head_out[:, 1:3, :]
    emb_2d = head_out[:, 6:8, :]
    loss_emb = pushpull_loss(emb, gt_instance)
    loss_emb_2d = pushpull_loss(emb_2d, image_gt_instance)

    loss_total = (3.0 * loss_seg + 0.5 * loss_emb)[None]
    loss_total_2d = (3.0 * loss_seg_2d + 0.5 * loss_emb_2d)[None]
    loss_offset = (60.0 * loss_offset_m)[None]
    loss_z = (30.0 * loss_z_m)[None]

    # homography branch
    pred_2d = head_out[:, 5:6, :].reshape(B, 1, H, W)
    emb_2d_img = emb_2d.reshape(B, 2, H, W)
    hm_inv = _inv3x3(homograph_matrix)                              # torch.inverse
    norm = jnp.sqrt(jnp.sum(hm_inv * hm_inv, axis=(1, 2), keepdims=True))
    hm_inv = hm_inv / jnp.maximum(norm, 1e-6)                       # F.normalize p=2 dim=(1,2)
    hm_inv = denormalize_homography(hm_inv, (H, W), (H, W))
    pred_2d_h_invs = warp_perspective(pred_2d, hm_inv, configs.output_2d_shape)
    emb_2d_h_invs = warp_perspective(emb_2d_img, hm_inv, configs.output_2d_shape)
    loss_seg_hg = seg_bce_iou_loss(pred_2d_h_invs, image_gt_segment)
    ho, wo = emb_2d_h_invs.shape[2], emb_2d_h_invs.shape[3]
    loss_emb_hg = pushpull_loss(emb_2d_h_invs.reshape(B, 2, ho * wo), image_gt_instance)
    loss_total_hg = 3.0 * loss_seg_hg + 0.5 * loss_emb_hg

    pred = head_out[:, 0:1, :].reshape(B, 1, H, W)
    return (pred, loss_total, loss_total_2d, loss_offset, loss_z,
            homograph_matrix, hm_inv, loss_total_hg, loss_seg_hg, loss_emb_hg)


# ----------------------------- driver -----------------------------------------
if __name__ == "__main__":
    Configs = collections.namedtuple("Configs", ["output_2d_shape"])
    B, CIN, H, W = 2, 32, 16, 16
    configs = Configs(output_2d_shape=(H, W))

    keys = jax.random.split(jax.random.PRNGKey(0), 10)
    params = make_params(keys[0], CIN)
    inputs = jax.random.normal(keys[1], (B, CIN, H, W), jnp.float32)
    images_gt = jax.random.normal(keys[2], (B, 2, H, W), jnp.float32)
    gt_seg = (jax.random.uniform(keys[3], (B, 1, H, W)) < 0.3).astype(jnp.float32)
    gt_instance = jax.random.randint(keys[4], (B, 1, H, W), 0, KMAX + 1).astype(jnp.float32)
    gt_offset_y = gt_seg * jax.random.uniform(keys[5], (B, 1, H, W))
    gt_z = jax.random.normal(keys[6], (B, 1, H, W), jnp.float32)
    image_gt_segment = (jax.random.uniform(keys[7], (B, 1, H, W)) < 0.3).astype(jnp.float32)
    image_gt_instance = jax.random.randint(keys[8], (B, 1, H, W), 0, KMAX + 1).astype(jnp.float32)

    def fwd(inp, img_gt, seg, inst, offy, zz, img_seg, img_inst):
        return combine_model_and_loss_forward(params, inp, img_gt, configs,
                                              seg, inst, offy, zz, img_seg, img_inst)

    out = jax.jit(fwd)(inputs, images_gt, gt_seg, gt_instance, gt_offset_y, gt_z,
                       image_gt_segment, image_gt_instance)
    jax.block_until_ready(out)
    print("KERNEL_OK")
</pallas_src>

<mosaic_0001>
module attributes {stable_mosaic.version = 11 : i64} {
  func.func @_heads_kernel(%arg0: i32, %arg1: i32, %arg2: memref<1x32x256xf32, #tpu.memory_space<vmem>>, %arg3: memref<8x32xf32, #tpu.memory_space<vmem>>, %arg4: memref<8x1xf32, #tpu.memory_space<vmem>>, %arg5: memref<1x8x256xf32, #tpu.memory_space<vmem>>) attributes {dimension_semantics = [#tpu.dimension_semantics<parallel>, #tpu.dimension_semantics<parallel>], iteration_bounds = array<i64: 2, 1>, scalar_prefetch = 0 : i64, scratch_operands = 0 : i64, tpu.core_type = #tpu.core_type<tc>, window_params = [{transform_indices = @transform_0, window_bounds = array<i64: 1, 32, 256>}, {pipeline_mode = #tpu.pipeline_mode<synchronous>, transform_indices = @transform_1, window_bounds = array<i64: 8, 32>}, {pipeline_mode = #tpu.pipeline_mode<synchronous>, transform_indices = @transform_2, window_bounds = array<i64: 8, 1>}, {transform_indices = @transform_3, window_bounds = array<i64: 1, 8, 256>}]} {
    %c0 = arith.constant 0 : index
    %c0_0 = arith.constant 0 : index
    %0 = vector.load %arg3[%c0, %c0_0] : memref<8x32xf32, #tpu.memory_space<vmem>>, vector<8x32xf32>
    %c0_1 = arith.constant 0 : index
    %c0_2 = arith.constant 0 : index
    %c0_3 = arith.constant 0 : index
    %1 = vector.load %arg2[%c0_1, %c0_2, %c0_3] : memref<1x32x256xf32, #tpu.memory_space<vmem>>, vector<1x32x256xf32>
    %2 = vector.shape_cast %1 : vector<1x32x256xf32> to vector<32x256xf32>
    %cst = arith.constant dense<0.000000e+00> : vector<8x256xf32>
    %3 = tpu.matmul %0, %2, %cst {dimension_numbers = #tpu.dot_dimension_numbers<[1], [0], [0], [1], [0, 0, 1, 1], [], []>} : vector<8x32xf32>, vector<32x256xf32>, vector<8x256xf32> -> vector<8x256xf32>
    %c0_4 = arith.constant 0 : index
    %c0_5 = arith.constant 0 : index
    %4 = vector.load %arg4[%c0_4, %c0_5] : memref<8x1xf32, #tpu.memory_space<vmem>>, vector<8x1xf32>
    %5 = vector.broadcast %4 : vector<8x1xf32> to vector<8x256xf32>
    %6 = arith.addf %3, %5 : vector<8x256xf32>
    %c0_6 = arith.constant 0 : index
    %c0_7 = arith.constant 0 : index
    %c0_8 = arith.constant 0 : index
    %7 = vector.load %arg5[%c0_6, %c0_7, %c0_8] : memref<1x8x256xf32, #tpu.memory_space<vmem>>, vector<1x8x256xf32>
    %8 = vector.shape_cast %7 : vector<1x8x256xf32> to vector<8x256xf32>
    %9 = vector.shape_cast %6 : vector<8x256xf32> to vector<1x8x256xf32>
    tpu.vector_store %arg5[%c0_6, %c0_7, %c0_8], %9 {strides = array<i32>} : memref<1x8x256xf32, #tpu.memory_space<vmem>>, vector<1x8x256xf32>,
    return
  }
  func.func @transform_0(%arg0: i32, %arg1: i32) -> (i32, i32, i32) {
    %c0_i32 = arith.constant 0 : i32
    %c0_i32_0 = arith.constant 0 : i32
    return %arg0, %c0_i32, %arg1 : i32, i32, i32
  }
  func.func @transform_1(%arg0: i32, %arg1: i32) -> (i32, i32) {
    %c0_i32 = arith.constant 0 : i32
    %c0_i32_0 = arith.constant 0 : i32
    %c0_i32_1 = arith.constant 0 : i32
    return %c0_i32, %c0_i32_0 : i32, i32
  }
  func.func @transform_2(%arg0: i32, %arg1: i32) -> (i32, i32) {
    %c0_i32 = arith.constant 0 : i32
    %c0_i32_0 = arith.constant 0 : i32
    %c0_i32_1 = arith.constant 0 : i32
    return %c0_i32, %c0_i32_0 : i32, i32
  }
  func.func @transform_3(%arg0: i32, %arg1: i32) -> (i32, i32, i32) {
    %c0_i32 = arith.constant 0 : i32
    %c0_i32_0 = arith.constant 0 : i32
    return %arg0, %c0_i32, %arg1 : i32, i32, i32
  }
}

module attributes {stable_mosaic.version = 11 : i64} {
  func.func @_pushpull_kernel(%arg0: i32, %arg1: memref<1x2x256xf32, #tpu.memory_space<vmem>>, %arg2: memref<1x1x256xf32, #tpu.memory_space<vmem>>, %arg3: memref<1x128xf32, #tpu.memory_space<vmem>>, %arg4: memref<1x128xf32, #tpu.memory_space<vmem>>, %arg5: memref<1x128xf32, #tpu.memory_space<vmem>>) attributes {dimension_semantics = [#tpu.dimension_semantics<arbitrary>], iteration_bounds = array<i64: 2>, scalar_prefetch = 0 : i64, scratch_operands = 0 : i64, tpu.core_type = #tpu.core_type<tc>, window_params = [{transform_indices = @transform_0, window_bounds = array<i64: 1, 2, 256>}, {transform_indices = @transform_1, window_bounds = array<i64: 1, 1, 256>}, {pipeline_mode = #tpu.pipeline_mode<synchronous>, transform_indices = @transform_2, window_bounds = array<i64: 1, 128>}, {pipeline_mode = #tpu.pipeline_mode<synchronous>, transform_indices = @transform_3, window_bounds = array<i64: 1, 128>}, {pipeline_mode = #tpu.pipeline_mode<synchronous>, transform_indices = @transform_4, window_bounds = array<i64: 1, 128>}]} {
    %c0_i32 = arith.constant 0 : i32
    %0 = arith.cmpi eq, %arg0, %c0_i32 : i32
    %1 = arith.extui %0 : i1 to i32
    %c0_i32_0 = arith.constant 0 : i32
    %2 = arith.cmpi ne, %1, %c0_i32_0 : i32
    scf.if %2 {
      %cst_51 = arith.constant 0.000000e+00 : f32
      %115 = vector.broadcast %cst_51 : f32 to vector<1x128xf32>
      %c0_52 = arith.constant 0 : index
      %c0_53 = arith.constant 0 : index
      %116 = vector.load %arg3[%c0_52, %c0_53] : memref<1x128xf32, #tpu.memory_space<vmem>>, vector<1x128xf32>
      tpu.vector_store %arg3[%c0_52, %c0_53], %115 {strides = array<i32>} : memref<1x128xf32, #tpu.memory_space<vmem>>, vector<1x128xf32>,
      %cst_54 = arith.constant 0.000000e+00 : f32
      %117 = vector.broadcast %cst_54 : f32 to vector<1x128xf32>
      %c0_55 = arith.constant 0 : index
      %c0_56 = arith.constant 0 : index
      %118 = vector.load %arg4[%c0_55, %c0_56] : memref<1x128xf32, #tpu.memory_space<vmem>>, vector<1x128xf32>
      tpu.vector_store %arg4[%c0_55, %c0_56], %117 {strides = array<i32>} : memref<1x128xf32, #tpu.memory_space<vmem>>, vector<1x128xf32>,
      %cst_57 = arith.constant 0.000000e+00 : f32
      %119 = vector.broadcast %cst_57 : f32 to vector<1x128xf32>
      %c0_58 = arith.constant 0 : index
      %c0_59 = arith.constant 0 : index
      %120 = vector.load %arg5[%c0_58, %c0_59] : memref<1x128xf32, #tpu.memory_space<vmem>>, vector<1x128xf32>
      tpu.vector_store %arg5[%c0_58, %c0_59], %119 {strides = array<i32>} : memref<1x128xf32, #tpu.memory_space<vmem>>, vector<1x128xf32>,
    } else {
    }
    %c0 = arith.constant 0 : index
    %c0_1 = arith.constant 0 : index
    %c0_2 = arith.constant 0 : index
    %3 = vector.load %arg1[%c0, %c0_1, %c0_2] : memref<1x2x256xf32, #tpu.memory_space<vmem>>, vector<1x2x256xf32>
    %4 = vector.shape_cast %3 : vector<1x2x256xf32> to vector<2x256xf32>
    %c0_3 = arith.constant 0 : index
    %c0_4 = arith.constant 0 : index
    %c0_5 = arith.constant 0 : index
    %5 = vector.load %arg2[%c0_3, %c0_4, %c0_5] : memref<1x1x256xf32, #tpu.memory_space<vmem>>, vector<1x1x256xf32>
    %6 = vector.shape_cast %5 : vector<1x1x256xf32> to vector<1x256xf32>
    %7 = tpu.iota {dimensions = array<i32: 0>} : vector<8x256xi32>
    %c1_i32 = arith.constant 1 : i32
    %8 = vector.broadcast %c1_i32 : i32 to vector<8x256xi32>
    %9 = arith.addi %7, %8 : vector<8x256xi32>
    %10 = arith.sitofp %9 : vector<8x256xi32> to vector<8x256xf32>
    %11 = vector.broadcast %6 : vector<1x256xf32> to vector<8x256xf32>
    %12 = arith.cmpf oeq, %11, %10 : vector<8x256xf32>
    %c4_i32 = arith.constant 4 : i32
    %13 = vector.broadcast %c4_i32 : i32 to vector<8x256xi32>
    %14 = arith.cmpi sle, %9, %13 : vector<8x256xi32>
    %15 = arith.andi %12, %14 : vector<8x256xi1>
    %cst = arith.constant 1.000000e+00 : f32
    %cst_6 = arith.constant 0.000000e+00 : f32
    %16 = vector.broadcast %cst : f32 to vector<8x256xf32>
    %17 = vector.broadcast %cst_6 : f32 to vector<8x256xf32>
    %18 = arith.select %15, %16, %17 : vector<8x256xi1>, vector<8x256xf32>
    %cst_7 = arith.constant dense<0.000000e+00> : vector<8xf32>
    %19 = vector.multi_reduction <add>, %18, %cst_7 [1] : vector<8x256xf32> to vector<8xf32>
    %20 = vector.shape_cast %19 : vector<8xf32> to vector<8x1xf32>
    %cst_8 = arith.constant 0.000000e+00 : f32
    %21 = vector.broadcast %cst_8 : f32 to vector<8x1xf32>
    %22 = arith.cmpf ogt, %20, %21 : vector<8x1xf32>
    %cst_9 = arith.constant 1.000000e+00 : f32
    %cst_10 = arith.constant 0.000000e+00 : f32
    %23 = vector.broadcast %cst_9 : f32 to vector<8x1xf32>
    %24 = vector.broadcast %cst_10 : f32 to vector<8x1xf32>
    %25 = arith.select %22, %23, %24 : vector<8x1xi1>, vector<8x1xf32>
    %cst_11 = arith.constant 1.000000e+00 : f32
    %26 = vector.broadcast %cst_11 : f32 to vector<8x1xf32>
    %27 = arith.maximumf %20, %26 : vector<8x1xf32>
    %cst_12 = arith.constant dense<0.000000e+00> : vector<8x2xf32>
    %28 = tpu.matmul %18, %4, %cst_12 {dimension_numbers = #tpu.dot_dimension_numbers<[1], [1], [0], [0], [0, 0, 1, 0], [], []>} : vector<8x256xf32>, vector<2x256xf32>, vector<8x2xf32> -> vector<8x2xf32>
    %29 = vector.broadcast %27 : vector<8x1xf32> to vector<8x2xf32>
    %30 = arith.divf %28, %29 : vector<8x2xf32>
    %31 = arith.mulf %4, %4 : vector<2x256xf32>
    %cst_13 = arith.constant dense<0.000000e+00> : vector<256xf32>
    %32 = vector.multi_reduction <add>, %31, %cst_13 [0] : vector<2x256xf32> to vector<256xf32>
    %33 = vector.shape_cast %32 : vector<256xf32> to vector<1x256xf32>
    %34 = arith.mulf %30, %30 : vector<8x2xf32>
    %cst_14 = arith.constant dense<0.000000e+00> : vector<8xf32>
    %35 = vector.multi_reduction <add>, %34, %cst_14 [1] : vector<8x2xf32> to vector<8xf32>
    %36 = vector.shape_cast %35 : vector<8xf32> to vector<8x1xf32>
    %cst_15 = arith.constant dense<0.000000e+00> : vector<8x256xf32>
    %37 = tpu.matmul %30, %4, %cst_15 {dimension_numbers = #tpu.dot_dimension_numbers<[1], [0], [0], [1], [0, 0, 1, 1], [], []>} : vector<8x2xf32>, vector<2x256xf32>, vector<8x256xf32> -> vector<8x256xf32>
    %cst_16 = arith.constant 2.000000e+00 : f32
    %38 = vector.broadcast %cst_16 : f32 to vector<8x256xf32>
    %39 = arith.mulf %38, %37 : vector<8x256xf32>
    %40 = vector.broadcast %33 : vector<1x256xf32> to vector<8x256xf32>
    %41 = arith.subf %40, %39 : vector<8x256xf32>
    %42 = vector.broadcast %36 : vector<8x1xf32> to vector<8x256xf32>
    %43 = arith.addf %41, %42 : vector<8x256xf32>
    %cst_17 = arith.constant 0.000000e+00 : f32
    %44 = vector.broadcast %cst_17 : f32 to vector<8x256xf32>
    %45 = arith.maximumf %43, %44 : vector<8x256xf32>
    %46 = math.sqrt %45 : vector<8x256xf32>
    %47 = vector.broadcast %25 : vector<8x1xf32> to vector<8x256xf32>
    %48 = arith.mulf %47, %18 : vector<8x256xf32>
    %cst_18 = arith.constant 1.000000e+00 : f32
    %49 = vector.broadcast %cst_18 : f32 to vector<8x256xf32>
    %50 = arith.subf %46, %49 : vector<8x256xf32>
    %cst_19 = arith.constant 0.000000e+00 : f32
    %51 = vector.broadcast %cst_19 : f32 to vector<8x256xf32>
    %52 = arith.maximumf %50, %51 : vector<8x256xf32>
    %53 = arith.mulf %48, %52 : vector<8x256xf32>
    %54 = vector.broadcast %27 : vector<8x1xf32> to vector<8x256xf32>
    %55 = arith.divf %53, %54 : vector<8x256xf32>
    %cst_20 = arith.constant dense<0.000000e+00> : vector<8xf32>
    %56 = vector.multi_reduction <add>, %55, %cst_20 [1] : vector<8x256xf32> to vector<8xf32>
    %57 = vector.shape_cast %56 : vector<8xf32> to vector<8x1xf32>
    %cst_21 = arith.constant dense<0.000000e+00> : vector<1xf32>
    %58 = vector.multi_reduction <add>, %57, %cst_21 [0] : vector<8x1xf32> to vector<1xf32>
    %59 = vector.shape_cast %58 : vector<1xf32> to vector<1x1xf32>
    %cst_22 = arith.constant dense<0.000000e+00> : vector<8x8xf32>
    %60 = tpu.matmul %30, %30, %cst_22 {dimension_numbers = #tpu.dot_dimension_numbers<[1], [1], [0], [0], [0, 0, 1, 0], [], []>} : vector<8x2xf32>, vector<8x2xf32>, vector<8x8xf32> -> vector<8x8xf32>
    %61 = tpu.iota {dimensions = array<i32: 0>} : vector<8x8xi32>
    %62 = tpu.iota {dimensions = array<i32: 1>} : vector<8x8xi32>
    %63 = arith.cmpi eq, %61, %62 : vector<8x8xi32>
    %cst_23 = arith.constant 1.000000e+00 : f32
    %cst_24 = arith.constant 0.000000e+00 : f32
    %64 = vector.broadcast %cst_23 : f32 to vector<8x8xf32>
    %65 = vector.broadcast %cst_24 : f32 to vector<8x8xf32>
    %66 = arith.select %63, %64, %65 : vector<8x8xi1>, vector<8x8xf32>
    %67 = arith.mulf %60, %66 : vector<8x8xf32>
    %cst_25 = arith.constant dense<0.000000e+00> : vector<8xf32>
    %68 = vector.multi_reduction <add>, %67, %cst_25 [0] : vector<8x8xf32> to vector<8xf32>
    %69 = vector.shape_cast %68 : vector<8xf32> to vector<1x8xf32>
    %70 = vector.broadcast %36 : vector<8x1xf32> to vector<8x8xf32>
    %71 = vector.broadcast %69 : vector<1x8xf32> to vector<8x8xf32>
    %72 = arith.addf %70, %71 : vector<8x8xf32>
    %cst_26 = arith.constant 2.000000e+00 : f32
    %73 = vector.broadcast %cst_26 : f32 to vector<8x8xf32>
    %74 = arith.mulf %73, %60 : vector<8x8xf32>
    %75 = arith.subf %72, %74 : vector<8x8xf32>
    %cst_27 = arith.constant 0.000000e+00 : f32
    %76 = vector.broadcast %cst_27 : f32 to vector<8x8xf32>
    %77 = arith.maximumf %75, %76 : vector<8x8xf32>
    %78 = math.sqrt %77 : vector<8x8xf32>
    %cst_28 = arith.constant 1.000000e+00 : f32
    %79 = vector.broadcast %cst_28 : f32 to vector<1x256xf32>
    %cst_29 = arith.constant dense<0.000000e+00> : vector<1x8xf32>
    %80 = tpu.matmul %79, %18, %cst_29 {dimension_numbers = #tpu.dot_dimension_numbers<[1], [1], [0], [0], [0, 0, 1, 0], [], []>} : vector<1x256xf32>, vector<8x256xf32>, vector<1x8xf32> -> vector<1x8xf32>
    %cst_30 = arith.constant 0.000000e+00 : f32
    %81 = vector.broadcast %cst_30 : f32 to vector<1x8xf32>
    %82 = arith.cmpf ogt, %80, %81 : vector<1x8xf32>
    %cst_31 = arith.constant 1.000000e+00 : f32
    %cst_32 = arith.constant 0.000000e+00 : f32
    %83 = vector.broadcast %cst_31 : f32 to vector<1x8xf32>
    %84 = vector.broadcast %cst_32 : f32 to vector<1x8xf32>
    %85 = arith.select %82, %83, %84 : vector<1x8xi1>, vector<1x8xf32>
    %86 = vector.broadcast %25 : vector<8x1xf32> to vector<8x8xf32>
    %87 = vector.broadcast %85 : vector<1x8xf32> to vector<8x8xf32>
    %88 = arith.mulf %86, %87 : vector<8x8xf32>
    %cst_33 = arith.constant 1.000000e+00 : f32
    %89 = vector.broadcast %cst_33 : f32 to vector<8x8xf32>
    %90 = arith.subf %89, %66 : vector<8x8xf32>
    %91 = arith.mulf %88, %90 : vector<8x8xf32>
    %cst_34 = arith.constant 5.000000e+00 : f32
    %92 = vector.broadcast %cst_34 : f32 to vector<8x8xf32>
    %93 = arith.subf %92, %78 : vector<8x8xf32>
    %cst_35 = arith.constant 0.000000e+00 : f32
    %94 = vector.broadcast %cst_35 : f32 to vector<8x8xf32>
    %95 = arith.maximumf %93, %94 : vector<8x8xf32>
    %96 = arith.mulf %91, %95 : vector<8x8xf32>
    %cst_36 = arith.constant dense<0.000000e+00> : vector<8xf32>
    %97 = vector.multi_reduction <add>, %96, %cst_36 [1] : vector<8x8xf32> to vector<8xf32>
    %98 = vector.shape_cast %97 : vector<8xf32> to vector<8x1xf32>
    %cst_37 = arith.constant dense<0.000000e+00> : vector<1xf32>
    %99 = vector.multi_reduction <add>, %98, %cst_37 [0] : vector<8x1xf32> to vector<1xf32>
    %100 = vector.shape_cast %99 : vector<1xf32> to vector<1x1xf32>
    %cst_38 = arith.constant dense<0.000000e+00> : vector<1xf32>
    %101 = vector.multi_reduction <add>, %25, %cst_38 [0] : vector<8x1xf32> to vector<1xf32>
    %102 = vector.shape_cast %101 : vector<1xf32> to vector<1x1xf32>
    %c0_39 = arith.constant 0 : index
    %c0_40 = arith.constant 0 : index
    %103 = vector.load %arg3[%c0_39, %c0_40] : memref<1x128xf32, #tpu.memory_space<vmem>>, vector<1x128xf32>
    %104 = vector.broadcast %59 : vector<1x1xf32> to vector<1x128xf32>
    %105 = arith.addf %103, %104 : vector<1x128xf32>
    %c0_41 = arith.constant 0 : index
    %c0_42 = arith.constant 0 : index
    %106 = vector.load %arg3[%c0_41, %c0_42] : memref<1x128xf32, #tpu.memory_space<vmem>>, vector<1x128xf32>
    tpu.vector_store %arg3[%c0_41, %c0_42], %105 {strides = array<i32>} : memref<1x128xf32, #tpu.memory_space<vmem>>, vector<1x128xf32>,
    %c0_43 = arith.constant 0 : index
    %c0_44 = arith.constant 0 : index
    %107 = vector.load %arg4[%c0_43, %c0_44] : memref<1x128xf32, #tpu.memory_space<vmem>>, vector<1x128xf32>
    %108 = vector.broadcast %100 : vector<1x1xf32> to vector<1x128xf32>
    %109 = arith.addf %107, %108 : vector<1x128xf32>
    %c0_45 = arith.constant 0 : index
    %c0_46 = arith.constant 0 : index
    %110 = vector.load %arg4[%c0_45, %c0_46] : memref<1x128xf32, #tpu.memory_space<vmem>>, vector<1x128xf32>
    tpu.vector_store %arg4[%c0_45, %c0_46], %109 {strides = array<i32>} : memref<1x128xf32, #tpu.memory_space<vmem>>, vector<1x128xf32>,
    %c0_47 = arith.constant 0 : index
    %c0_48 = arith.constant 0 : index
    %111 = vector.load %arg5[%c0_47, %c0_48] : memref<1x128xf32, #tpu.memory_space<vmem>>, vector<1x128xf32>
    %112 = vector.broadcast %102 : vector<1x1xf32> to vector<1x128xf32>
    %113 = arith.addf %111, %112 : vector<1x128xf32>
    %c0_49 = arith.constant 0 : index
    %c0_50 = arith.constant 0 : index
    %114 = vector.load %arg5[%c0_49, %c0_50] : memref<1x128xf32, #tpu.memory_space<vmem>>, vector<1x128xf32>
    tpu.vector_store %arg5[%c0_49, %c0_50], %113 {strides = array<i32>} : memref<1x128xf32, #tpu.memory_space<vmem>>, vector<1x128xf32>,
    return
  }
  func.func @transform_0(%arg0: i32) -> (i32, i32, i32) {
    %c0_i32 = arith.constant 0 : i32
    %c0_i32_0 = arith.constant 0 : i32
    %c0_i32_1 = arith.constant 0 : i32
    return %arg0, %c0_i32, %c0_i32_0 : i32, i32, i32
  }
  func.func @transform_1(%arg0: i32) -> (i32, i32, i32) {
    %c0_i32 = arith.constant 0 : i32
    %c0_i32_0 = arith.constant 0 : i32
    %c0_i32_1 = arith.constant 0 : i32
    return %arg0, %c0_i32, %c0_i32_0 : i32, i32, i32
  }
  func.func @transform_2(%arg0: i32) -> (i32, i32) {
    %c0_i32 = arith.constant 0 : i32
    %c0_i32_0 = arith.constant 0 : i32
    %c0_i32_1 = arith.constant 0 : i32
    return %c0_i32, %c0_i32_0 : i32, i32
  }
  func.func @transform_3(%arg0: i32) -> (i32, i32) {
    %c0_i32 = arith.constant 0 : i32
    %c0_i32_0 = arith.constant 0 : i32
    %c0_i32_1 = arith.constant 0 : i32
    return %c0_i32, %c0_i32_0 : i32, i32
  }
  func.func @transform_4(%arg0: i32) -> (i32, i32) {
    %c0_i32 = arith.constant 0 : i32
    %c0_i32_0 = arith.constant 0 : i32
    %c0_i32_1 = arith.constant 0 : i32
    return %c0_i32, %c0_i32_0 : i32, i32
  }
}

module attributes {stable_mosaic.version = 11 : i64} {
  func.func @_pixel_loss_kernel(%arg0: i32, %arg1: i32, %arg2: memref<1x8x2x128xf32, #tpu.memory_space<vmem>>, %arg3: memref<1x2x128xf32, #tpu.memory_space<vmem>>, %arg4: memref<1x2x128xf32, #tpu.memory_space<vmem>>, %arg5: memref<1x2x128xf32, #tpu.memory_space<vmem>>, %arg6: memref<1x2x128xf32, #tpu.memory_space<vmem>>, %arg7: memref<1x1x128xf32, #tpu.memory_space<vmem>>, %arg8: memref<1x1x128xf32, #tpu.memory_space<vmem>>, %arg9: memref<1x1x128xf32, #tpu.memory_space<vmem>>, %arg10: memref<1x1x128xf32, #tpu.memory_space<vmem>>, %arg11: memref<1x1x128xf32, #tpu.memory_space<vmem>>, %arg12: memref<1x1x128xf32, #tpu.memory_space<vmem>>, %arg13: memref<1x1x128xf32, #tpu.memory_space<vmem>>, %arg14: memref<1x1x128xf32, #tpu.memory_space<vmem>>) attributes {dimension_semantics = [#tpu.dimension_semantics<parallel>, #tpu.dimension_semantics<arbitrary>], iteration_bounds = array<i64: 2, 1>, scalar_prefetch = 0 : i64, scratch_operands = 0 : i64, tpu.core_type = #tpu.core_type<tc>, window_params = [{transform_indices = @transform_0, window_bounds = array<i64: 1, 8, 2, 128>}, {transform_indices = @transform_1, window_bounds = array<i64: 1, 2, 128>}, {transform_indices = @transform_2, window_bounds = array<i64: 1, 2, 128>}, {transform_indices = @transform_3, window_bounds = array<i64: 1, 2, 128>}, {transform_indices = @transform_4, window_bounds = array<i64: 1, 2, 128>}, {transform_indices = @transform_5, window_bounds = array<i64: 1, 1, 128>}, {transform_indices = @transform_6, window_bounds = array<i64: 1, 1, 128>}, {transform_indices = @transform_7, window_bounds = array<i64: 1, 1, 128>}, {transform_indices = @transform_8, window_bounds = array<i64: 1, 1, 128>}, {transform_indices = @transform_9, window_bounds = array<i64: 1, 1, 128>}, {transform_indices = @transform_10, window_bounds = array<i64: 1, 1, 128>}, {transform_indices = @transform_11, window_bounds = array<i64: 1, 1, 128>}, {transform_indices = @transform_12, window_bounds = array<i64: 1, 1, 128>}]} {
    %c0_i32 = arith.constant 0 : i32
    %0 = arith.cmpi eq, %arg1, %c0_i32 : i32
    %1 = arith.extui %0 : i1 to i32
    %c0_i32_0 = arith.constant 0 : i32
    %2 = arith.cmpi ne, %1, %c0_i32_0 : i32
    scf.if %2 {
      %cst_104 = arith.constant 0.000000e+00 : f32
      %164 = vector.broadcast %cst_104 : f32 to vector<1x128xf32>
      %c0_105 = arith.constant 0 : index
      %c0_106 = arith.constant 0 : index
      %c0_107 = arith.constant 0 : index
      %165 = vector.load %arg7[%c0_105, %c0_106, %c0_107] : memref<1x1x128xf32, #tpu.memory_space<vmem>>, vector<1x1x128xf32>
      %166 = vector.shape_cast %165 : vector<1x1x128xf32> to vector<1x128xf32>
      %167 = vector.shape_cast %164 : vector<1x128xf32> to vector<1x1x128xf32>
      tpu.vector_store %arg7[%c0_105, %c0_106, %c0_107], %167 {strides = array<i32>} : memref<1x1x128xf32, #tpu.memory_space<vmem>>, vector<1x1x128xf32>,
      %cst_108 = arith.constant 0.000000e+00 : f32
      %168 = vector.broadcast %cst_108 : f32 to vector<1x128xf32>
      %c0_109 = arith.constant 0 : index
      %c0_110 = arith.constant 0 : index
      %c0_111 = arith.constant 0 : index
      %169 = vector.load %arg8[%c0_109, %c0_110, %c0_111] : memref<1x1x128xf32, #tpu.memory_space<vmem>>, vector<1x1x128xf32>
      %170 = vector.shape_cast %169 : vector<1x1x128xf32> to vector<1x128xf32>
      %171 = vector.shape_cast %168 : vector<1x128xf32> to vector<1x1x128xf32>
      tpu.vector_store %arg8[%c0_109, %c0_110, %c0_111], %171 {strides = array<i32>} : memref<1x1x128xf32, #tpu.memory_space<vmem>>, vector<1x1x128xf32>,
      %cst_112 = arith.constant 0.000000e+00 : f32
      %172 = vector.broadcast %cst_112 : f32 to vector<1x128xf32>
      %c0_113 = arith.constant 0 : index
      %c0_114 = arith.constant 0 : index
      %c0_115 = arith.constant 0 : index
      %173 = vector.load %arg9[%c0_113, %c0_114, %c0_115] : memref<1x1x128xf32, #tpu.memory_space<vmem>>, vector<1x1x128xf32>
      %174 = vector.shape_cast %173 : vector<1x1x128xf32> to vector<1x128xf32>
      %175 = vector.shape_cast %172 : vector<1x128xf32> to vector<1x1x128xf32>
      tpu.vector_store %arg9[%c0_113, %c0_114, %c0_115], %175 {strides = array<i32>} : memref<1x1x128xf32, #tpu.memory_space<vmem>>, vector<1x1x128xf32>,
      %cst_116 = arith.constant 0.000000e+00 : f32
      %176 = vector.broadcast %cst_116 : f32 to vector<1x128xf32>
      %c0_117 = arith.constant 0 : index
      %c0_118 = arith.constant 0 : index
      %c0_119 = arith.constant 0 : index
      %177 = vector.load %arg10[%c0_117, %c0_118, %c0_119] : memref<1x1x128xf32, #tpu.memory_space<vmem>>, vector<1x1x128xf32>
      %178 = vector.shape_cast %177 : vector<1x1x128xf32> to vector<1x128xf32>
      %179 = vector.shape_cast %176 : vector<1x128xf32> to vector<1x1x128xf32>
      tpu.vector_store %arg10[%c0_117, %c0_118, %c0_119], %179 {strides = array<i32>} : memref<1x1x128xf32, #tpu.memory_space<vmem>>, vector<1x1x128xf32>,
      %cst_120 = arith.constant 0.000000e+00 : f32
      %180 = vector.broadcast %cst_120 : f32 to vector<1x128xf32>
      %c0_121 = arith.constant 0 : index
      %c0_122 = arith.constant 0 : index
      %c0_123 = arith.constant 0 : index
      %181 = vector.load %arg11[%c0_121, %c0_122, %c0_123] : memref<1x1x128xf32, #tpu.memory_space<vmem>>, vector<1x1x128xf32>
      %182 = vector.shape_cast %181 : vector<1x1x128xf32> to vector<1x128xf32>
      %183 = vector.shape_cast %180 : vector<1x128xf32> to vector<1x1x128xf32>
      tpu.vector_store %arg11[%c0_121, %c0_122, %c0_123], %183 {strides = array<i32>} : memref<1x1x128xf32, #tpu.memory_space<vmem>>, vector<1x1x128xf32>,
      %cst_124 = arith.constant 0.000000e+00 : f32
      %184 = vector.broadcast %cst_124 : f32 to vector<1x128xf32>
      %c0_125 = arith.constant 0 : index
      %c0_126 = arith.constant 0 : index
      %c0_127 = arith.constant 0 : index
      %185 = vector.load %arg12[%c0_125, %c0_126, %c0_127] : memref<1x1x128xf32, #tpu.memory_space<vmem>>, vector<1x1x128xf32>
      %186 = vector.shape_cast %185 : vector<1x1x128xf32> to vector<1x128xf32>
      %187 = vector.shape_cast %184 : vector<1x128xf32> to vector<1x1x128xf32>
      tpu.vector_store %arg12[%c0_125, %c0_126, %c0_127], %187 {strides = array<i32>} : memref<1x1x128xf32, #tpu.memory_space<vmem>>, vector<1x1x128xf32>,
      %cst_128 = arith.constant 0.000000e+00 : f32
      %188 = vector.broadcast %cst_128 : f32 to vector<1x128xf32>
      %c0_129 = arith.constant 0 : index
      %c0_130 = arith.constant 0 : index
      %c0_131 = arith.constant 0 : index
      %189 = vector.load %arg13[%c0_129, %c0_130, %c0_131] : memref<1x1x128xf32, #tpu.memory_space<vmem>>, vector<1x1x128xf32>
      %190 = vector.shape_cast %189 : vector<1x1x128xf32> to vector<1x128xf32>
      %191 = vector.shape_cast %188 : vector<1x128xf32> to vector<1x1x128xf32>
      tpu.vector_store %arg13[%c0_129, %c0_130, %c0_131], %191 {strides = array<i32>} : memref<1x1x128xf32, #tpu.memory_space<vmem>>, vector<1x1x128xf32>,
      %cst_132 = arith.constant 0.000000e+00 : f32
      %192 = vector.broadcast %cst_132 : f32 to vector<1x128xf32>
      %c0_133 = arith.constant 0 : index
      %c0_134 = arith.constant 0 : index
      %c0_135 = arith.constant 0 : index
      %193 = vector.load %arg14[%c0_133, %c0_134, %c0_135] : memref<1x1x128xf32, #tpu.memory_space<vmem>>, vector<1x1x128xf32>
      %194 = vector.shape_cast %193 : vector<1x1x128xf32> to vector<1x128xf32>
      %195 = vector.shape_cast %192 : vector<1x128xf32> to vector<1x1x128xf32>
      tpu.vector_store %arg14[%c0_133, %c0_134, %c0_135], %195 {strides = array<i32>} : memref<1x1x128xf32, #tpu.memory_space<vmem>>, vector<1x1x128xf32>,
    } else {
    }
    %c0 = arith.constant 0 : index
    %c0_1 = arith.constant 0 : index
    %c0_2 = arith.constant 0 : index
    %3 = vector.load %arg3[%c0, %c0_1, %c0_2] : memref<1x2x128xf32, #tpu.memory_space<vmem>>, vector<1x2x128xf32>
    %4 = vector.shape_cast %3 : vector<1x2x128xf32> to vector<2x128xf32>
    %c0_3 = arith.constant 0 : index
    %c0_4 = arith.constant 0 : index
    %c0_5 = arith.constant 0 : index
    %c0_6 = arith.constant 0 : index
    %5 = vector.load %arg2[%c0_3, %c0_4, %c0_5, %c0_6] : memref<1x8x2x128xf32, #tpu.memory_space<vmem>>, vector<1x1x2x128xf32>
    %6 = vector.shape_cast %5 : vector<1x1x2x128xf32> to vector<2x128xf32>
    %cst = arith.constant 0.000000e+00 : f32
    %7 = vector.broadcast %cst : f32 to vector<2x128xf32>
    %8 = arith.subf %7, %6 : vector<2x128xf32>
    %cst_7 = arith.constant 0.000000e+00 : f32
    %9 = vector.broadcast %cst_7 : f32 to vector<2x128xf32>
    %10 = arith.maximumf %8, %9 : vector<2x128xf32>
    %11 = math.absf %6 : vector<2x128xf32>
    %cst_8 = arith.constant 0.000000e+00 : f32
    %12 = vector.broadcast %cst_8 : f32 to vector<2x128xf32>
    %13 = arith.subf %12, %11 : vector<2x128xf32>
    %14 = math.exp %13 : vector<2x128xf32>
    %cst_9 = arith.constant 1.000000e+00 : f32
    %15 = vector.broadcast %cst_9 : f32 to vector<2x128xf32>
    %16 = arith.addf %15, %14 : vector<2x128xf32>
    %17 = math.log %16 : vector<2x128xf32>
    %18 = arith.addf %10, %17 : vector<2x128xf32>
    %19 = arith.addf %18, %6 : vector<2x128xf32>
    %cst_10 = arith.constant 0.000000e+00 : f32
    %20 = vector.broadcast %cst_10 : f32 to vector<2x128xf32>
    %21 = arith.subf %20, %18 : vector<2x128xf32>
    %22 = math.exp %21 : vector<2x128xf32>
    %c0_11 = arith.constant 0 : index
    %c0_12 = arith.constant 0 : index
    %c0_13 = arith.constant 0 : index
    %23 = vector.load %arg7[%c0_11, %c0_12, %c0_13] : memref<1x1x128xf32, #tpu.memory_space<vmem>>, vector<1x1x128xf32>
    %24 = vector.shape_cast %23 : vector<1x1x128xf32> to vector<1x128xf32>
    %cst_14 = arith.constant 1.000000e+01 : f32
    %25 = vector.broadcast %cst_14 : f32 to vector<2x128xf32>
    %26 = arith.mulf %25, %4 : vector<2x128xf32>
    %27 = arith.mulf %26, %18 : vector<2x128xf32>
    %cst_15 = arith.constant 1.000000e+00 : f32
    %28 = vector.broadcast %cst_15 : f32 to vector<2x128xf32>
    %29 = arith.subf %28, %4 : vector<2x128xf32>
    %30 = arith.mulf %29, %19 : vector<2x128xf32>
    %31 = arith.addf %27, %30 : vector<2x128xf32>
    %cst_16 = arith.constant dense<0.000000e+00> : vector<128xf32>
    %32 = vector.multi_reduction <add>, %31, %cst_16 [0] : vector<2x128xf32> to vector<128xf32>
    %33 = vector.shape_cast %32 : vector<128xf32> to vector<1x128xf32>
    %34 = arith.addf %24, %33 : vector<1x128xf32>
    %c0_17 = arith.constant 0 : index
    %c0_18 = arith.constant 0 : index
    %c0_19 = arith.constant 0 : index
    %35 = vector.load %arg7[%c0_17, %c0_18, %c0_19] : memref<1x1x128xf32, #tpu.memory_space<vmem>>, vector<1x1x128xf32>
    %36 = vector.shape_cast %35 : vector<1x1x128xf32> to vector<1x128xf32>
    %37 = vector.shape_cast %34 : vector<1x128xf32> to vector<1x1x128xf32>
    tpu.vector_store %arg7[%c0_17, %c0_18, %c0_19], %37 {strides = array<i32>} : memref<1x1x128xf32, #tpu.memory_space<vmem>>, vector<1x1x128xf32>,
    %c0_20 = arith.constant 0 : index
    %c0_21 = arith.constant 0 : index
    %c0_22 = arith.constant 0 : index
    %38 = vector.load %arg8[%c0_20, %c0_21, %c0_22] : memref<1x1x128xf32, #tpu.memory_space<vmem>>, vector<1x1x128xf32>
    %39 = vector.shape_cast %38 : vector<1x1x128xf32> to vector<1x128xf32>
    %40 = arith.mulf %22, %4 : vector<2x128xf32>
    %cst_23 = arith.constant dense<0.000000e+00> : vector<128xf32>
    %41 = vector.multi_reduction <add>, %40, %cst_23 [0] : vector<2x128xf32> to vector<128xf32>
    %42 = vector.shape_cast %41 : vector<128xf32> to vector<1x128xf32>
    %43 = arith.addf %39, %42 : vector<1x128xf32>
    %c0_24 = arith.constant 0 : index
    %c0_25 = arith.constant 0 : index
    %c0_26 = arith.constant 0 : index
    %44 = vector.load %arg8[%c0_24, %c0_25, %c0_26] : memref<1x1x128xf32, #tpu.memory_space<vmem>>, vector<1x1x128xf32>
    %45 = vector.shape_cast %44 : vector<1x1x128xf32> to vector<1x128xf32>
    %46 = vector.shape_cast %43 : vector<1x128xf32> to vector<1x1x128xf32>
    tpu.vector_store %arg8[%c0_24, %c0_25, %c0_26], %46 {strides = array<i32>} : memref<1x1x128xf32, #tpu.memory_space<vmem>>, vector<1x1x128xf32>,
    %c0_27 = arith.constant 0 : index
    %c0_28 = arith.constant 0 : index
    %c0_29 = arith.constant 0 : index
    %47 = vector.load %arg9[%c0_27, %c0_28, %c0_29] : memref<1x1x128xf32, #tpu.memory_space<vmem>>, vector<1x1x128xf32>
    %48 = vector.shape_cast %47 : vector<1x1x128xf32> to vector<1x128xf32>
    %49 = arith.addf %22, %4 : vector<2x128xf32>
    %cst_30 = arith.constant dense<0.000000e+00> : vector<128xf32>
    %50 = vector.multi_reduction <add>, %49, %cst_30 [0] : vector<2x128xf32> to vector<128xf32>
    %51 = vector.shape_cast %50 : vector<128xf32> to vector<1x128xf32>
    %52 = arith.addf %48, %51 : vector<1x128xf32>
    %c0_31 = arith.constant 0 : index
    %c0_32 = arith.constant 0 : index
    %c0_33 = arith.constant 0 : index
    %53 = vector.load %arg9[%c0_31, %c0_32, %c0_33] : memref<1x1x128xf32, #tpu.memory_space<vmem>>, vector<1x1x128xf32>
    %54 = vector.shape_cast %53 : vector<1x1x128xf32> to vector<1x128xf32>
    %55 = vector.shape_cast %52 : vector<1x128xf32> to vector<1x1x128xf32>
    tpu.vector_store %arg9[%c0_31, %c0_32, %c0_33], %55 {strides = array<i32>} : memref<1x1x128xf32, #tpu.memory_space<vmem>>, vector<1x1x128xf32>,
    %c0_34 = arith.constant 0 : index
    %c3 = arith.constant 3 : index
    %c0_35 = arith.constant 0 : index
    %c0_36 = arith.constant 0 : index
    %56 = vector.load %arg2[%c0_34, %c3, %c0_35, %c0_36] : memref<1x8x2x128xf32, #tpu.memory_space<vmem>>, vector<1x1x2x128xf32>
    %57 = vector.shape_cast %56 : vector<1x1x2x128xf32> to vector<2x128xf32>
    %cst_37 = arith.constant 0.000000e+00 : f32
    %58 = vector.broadcast %cst_37 : f32 to vector<2x128xf32>
    %59 = arith.subf %58, %57 : vector<2x128xf32>
    %cst_38 = arith.constant 0.000000e+00 : f32
    %60 = vector.broadcast %cst_38 : f32 to vector<2x128xf32>
    %61 = arith.maximumf %59, %60 : vector<2x128xf32>
    %62 = math.absf %57 : vector<2x128xf32>
    %cst_39 = arith.constant 0.000000e+00 : f32
    %63 = vector.broadcast %cst_39 : f32 to vector<2x128xf32>
    %64 = arith.subf %63, %62 : vector<2x128xf32>
    %65 = math.exp %64 : vector<2x128xf32>
    %cst_40 = arith.constant 1.000000e+00 : f32
    %66 = vector.broadcast %cst_40 : f32 to vector<2x128xf32>
    %67 = arith.addf %66, %65 : vector<2x128xf32>
    %68 = math.log %67 : vector<2x128xf32>
    %69 = arith.addf %61, %68 : vector<2x128xf32>
    %70 = arith.addf %69, %57 : vector<2x128xf32>
    %c0_41 = arith.constant 0 : index
    %c0_42 = arith.constant 0 : index
    %c0_43 = arith.constant 0 : index
    %71 = vector.load %arg4[%c0_41, %c0_42, %c0_43] : memref<1x2x128xf32, #tpu.memory_space<vmem>>, vector<1x2x128xf32>
    %72 = vector.shape_cast %71 : vector<1x2x128xf32> to vector<2x128xf32>
    %cst_44 = arith.constant 5.000000e-01 : f32
    %73 = vector.broadcast %cst_44 : f32 to vector<2x128xf32>
    %74 = arith.cmpf ogt, %4, %73 : vector<2x128xf32>
    %cst_45 = arith.constant 1.000000e+02 : f32
    %75 = vector.broadcast %cst_45 : f32 to vector<2x128xf32>
    %76 = arith.minimumf %69, %75 : vector<2x128xf32>
    %cst_46 = arith.constant 1.000000e+02 : f32
    %77 = vector.broadcast %cst_46 : f32 to vector<2x128xf32>
    %78 = arith.select %74, %76, %77 : vector<2x128xi1>, vector<2x128xf32>
    %cst_47 = arith.constant 1.000000e+02 : f32
    %79 = vector.broadcast %cst_47 : f32 to vector<2x128xf32>
    %80 = arith.minimumf %70, %79 : vector<2x128xf32>
    %cst_48 = arith.constant 0.000000e+00 : f32
    %81 = vector.broadcast %cst_48 : f32 to vector<2x128xf32>
    %82 = arith.select %74, %80, %81 : vector<2x128xi1>, vector<2x128xf32>
    %c0_49 = arith.constant 0 : index
    %c0_50 = arith.constant 0 : index
    %c0_51 = arith.constant 0 : index
    %83 = vector.load %arg10[%c0_49, %c0_50, %c0_51] : memref<1x1x128xf32, #tpu.memory_space<vmem>>, vector<1x1x128xf32>
    %84 = vector.shape_cast %83 : vector<1x1x128xf32> to vector<1x128xf32>
    %85 = arith.mulf %72, %78 : vector<2x128xf32>
    %cst_52 = arith.constant 1.000000e+00 : f32
    %86 = vector.broadcast %cst_52 : f32 to vector<2x128xf32>
    %87 = arith.subf %86, %72 : vector<2x128xf32>
    %88 = arith.mulf %87, %82 : vector<2x128xf32>
    %89 = arith.addf %85, %88 : vector<2x128xf32>
    %cst_53 = arith.constant dense<0.000000e+00> : vector<128xf32>
    %90 = vector.multi_reduction <add>, %89, %cst_53 [0] : vector<2x128xf32> to vector<128xf32>
    %91 = vector.shape_cast %90 : vector<128xf32> to vector<1x128xf32>
    %92 = arith.addf %84, %91 : vector<1x128xf32>
    %c0_54 = arith.constant 0 : index
    %c0_55 = arith.constant 0 : index
    %c0_56 = arith.constant 0 : index
    %93 = vector.load %arg10[%c0_54, %c0_55, %c0_56] : memref<1x1x128xf32, #tpu.memory_space<vmem>>, vector<1x1x128xf32>
    %94 = vector.shape_cast %93 : vector<1x1x128xf32> to vector<1x128xf32>
    %95 = vector.shape_cast %92 : vector<1x128xf32> to vector<1x1x128xf32>
    tpu.vector_store %arg10[%c0_54, %c0_55, %c0_56], %95 {strides = array<i32>} : memref<1x1x128xf32, #tpu.memory_space<vmem>>, vector<1x1x128xf32>,
    %c0_57 = arith.constant 0 : index
    %c4 = arith.constant 4 : index
    %c0_58 = arith.constant 0 : index
    %c0_59 = arith.constant 0 : index
    %96 = vector.load %arg2[%c0_57, %c4, %c0_58, %c0_59] : memref<1x8x2x128xf32, #tpu.memory_space<vmem>>, vector<1x1x2x128xf32>
    %97 = vector.shape_cast %96 : vector<1x1x2x128xf32> to vector<2x128xf32>
    %98 = arith.mulf %4, %97 : vector<2x128xf32>
    %c0_60 = arith.constant 0 : index
    %c0_61 = arith.constant 0 : index
    %c0_62 = arith.constant 0 : index
    %99 = vector.load %arg5[%c0_60, %c0_61, %c0_62] : memref<1x2x128xf32, #tpu.memory_space<vmem>>, vector<1x2x128xf32>
    %100 = vector.shape_cast %99 : vector<1x2x128xf32> to vector<2x128xf32>
    %101 = arith.subf %98, %100 : vector<2x128xf32>
    %c0_63 = arith.constant 0 : index
    %c0_64 = arith.constant 0 : index
    %c0_65 = arith.constant 0 : index
    %102 = vector.load %arg11[%c0_63, %c0_64, %c0_65] : memref<1x1x128xf32, #tpu.memory_space<vmem>>, vector<1x1x128xf32>
    %103 = vector.shape_cast %102 : vector<1x1x128xf32> to vector<1x128xf32>
    %104 = arith.mulf %101, %101 : vector<2x128xf32>
    %cst_66 = arith.constant dense<0.000000e+00> : vector<128xf32>
    %105 = vector.multi_reduction <add>, %104, %cst_66 [0] : vector<2x128xf32> to vector<128xf32>
    %106 = vector.shape_cast %105 : vector<128xf32> to vector<1x128xf32>
    %107 = arith.addf %103, %106 : vector<1x128xf32>
    %c0_67 = arith.constant 0 : index
    %c0_68 = arith.constant 0 : index
    %c0_69 = arith.constant 0 : index
    %108 = vector.load %arg11[%c0_67, %c0_68, %c0_69] : memref<1x1x128xf32, #tpu.memory_space<vmem>>, vector<1x1x128xf32>
    %109 = vector.shape_cast %108 : vector<1x1x128xf32> to vector<1x128xf32>
    %110 = vector.shape_cast %107 : vector<1x128xf32> to vector<1x1x128xf32>
    tpu.vector_store %arg11[%c0_67, %c0_68, %c0_69], %110 {strides = array<i32>} : memref<1x1x128xf32, #tpu.memory_space<vmem>>, vector<1x1x128xf32>,
    %c0_70 = arith.constant 0 : index
    %c5 = arith.constant 5 : index
    %c0_71 = arith.constant 0 : index
    %c0_72 = arith.constant 0 : index
    %111 = vector.load %arg2[%c0_70, %c5, %c0_71, %c0_72] : memref<1x8x2x128xf32, #tpu.memory_space<vmem>>, vector<1x1x2x128xf32>
    %112 = vector.shape_cast %111 : vector<1x1x2x128xf32> to vector<2x128xf32>
    %c0_73 = arith.constant 0 : index
    %c0_74 = arith.constant 0 : index
    %c0_75 = arith.constant 0 : index
    %113 = vector.load %arg6[%c0_73, %c0_74, %c0_75] : memref<1x2x128xf32, #tpu.memory_space<vmem>>, vector<1x2x128xf32>
    %114 = vector.shape_cast %113 : vector<1x2x128xf32> to vector<2x128xf32>
    %cst_76 = arith.constant 0.000000e+00 : f32
    %115 = vector.broadcast %cst_76 : f32 to vector<2x128xf32>
    %116 = arith.subf %115, %112 : vector<2x128xf32>
    %cst_77 = arith.constant 0.000000e+00 : f32
    %117 = vector.broadcast %cst_77 : f32 to vector<2x128xf32>
    %118 = arith.maximumf %116, %117 : vector<2x128xf32>
    %119 = math.absf %112 : vector<2x128xf32>
    %cst_78 = arith.constant 0.000000e+00 : f32
    %120 = vector.broadcast %cst_78 : f32 to vector<2x128xf32>
    %121 = arith.subf %120, %119 : vector<2x128xf32>
    %122 = math.exp %121 : vector<2x128xf32>
    %cst_79 = arith.constant 1.000000e+00 : f32
    %123 = vector.broadcast %cst_79 : f32 to vector<2x128xf32>
    %124 = arith.addf %123, %122 : vector<2x128xf32>
    %125 = math.log %124 : vector<2x128xf32>
    %126 = arith.addf %118, %125 : vector<2x128xf32>
    %127 = arith.addf %126, %112 : vector<2x128xf32>
    %cst_80 = arith.constant 0.000000e+00 : f32
    %128 = vector.broadcast %cst_80 : f32 to vector<2x128xf32>
    %129 = arith.subf %128, %126 : vector<2x128xf32>
    %130 = math.exp %129 : vector<2x128xf32>
    %c0_81 = arith.constant 0 : index
    %c0_82 = arith.constant 0 : index
    %c0_83 = arith.constant 0 : index
    %131 = vector.load %arg12[%c0_81, %c0_82, %c0_83] : memref<1x1x128xf32, #tpu.memory_space<vmem>>, vector<1x1x128xf32>
    %132 = vector.shape_cast %131 : vector<1x1x128xf32> to vector<1x128xf32>
    %cst_84 = arith.constant 1.000000e+01 : f32
    %133 = vector.broadcast %cst_84 : f32 to vector<2x128xf32>
    %134 = arith.mulf %133, %114 : vector<2x128xf32>
    %135 = arith.mulf %134, %126 : vector<2x128xf32>
    %cst_85 = arith.constant 1.000000e+00 : f32
    %136 = vector.broadcast %cst_85 : f32 to vector<2x128xf32>
    %137 = arith.subf %136, %114 : vector<2x128xf32>
    %138 = arith.mulf %137, %127 : vector<2x128xf32>
    %139 = arith.addf %135, %138 : vector<2x128xf32>
    %cst_86 = arith.constant dense<0.000000e+00> : vector<128xf32>
    %140 = vector.multi_reduction <add>, %139, %cst_86 [0] : vector<2x128xf32> to vector<128xf32>
    %141 = vector.shape_cast %140 : vector<128xf32> to vector<1x128xf32>
    %142 = arith.addf %132, %141 : vector<1x128xf32>
    %c0_87 = arith.constant 0 : index
    %c0_88 = arith.constant 0 : index
    %c0_89 = arith.constant 0 : index
    %143 = vector.load %arg12[%c0_87, %c0_88, %c0_89] : memref<1x1x128xf32, #tpu.memory_space<vmem>>, vector<1x1x128xf32>
    %144 = vector.shape_cast %143 : vector<1x1x128xf32> to vector<1x128xf32>
    %145 = vector.shape_cast %142 : vector<1x128xf32> to vector<1x1x128xf32>
    tpu.vector_store %arg12[%c0_87, %c0_88, %c0_89], %145 {strides = array<i32>} : memref<1x1x128xf32, #tpu.memory_space<vmem>>, vector<1x1x128xf32>,
    %c0_90 = arith.constant 0 : index
    %c0_91 = arith.constant 0 : index
    %c0_92 = arith.constant 0 : index
    %146 = vector.load %arg13[%c0_90, %c0_91, %c0_92] : memref<1x1x128xf32, #tpu.memory_space<vmem>>, vector<1x1x128xf32>
    %147 = vector.shape_cast %146 : vector<1x1x128xf32> to vector<1x128xf32>
    %148 = arith.mulf %130, %114 : vector<2x128xf32>
    %cst_93 = arith.constant dense<0.000000e+00> : vector<128xf32>
    %149 = vector.multi_reduction <add>, %148, %cst_93 [0] : vector<2x128xf32> to vector<128xf32>
    %150 = vector.shape_cast %149 : vector<128xf32> to vector<1x128xf32>
    %151 = arith.addf %147, %150 : vector<1x128xf32>
    %c0_94 = arith.constant 0 : index
    %c0_95 = arith.constant 0 : index
    %c0_96 = arith.constant 0 : index
    %152 = vector.load %arg13[%c0_94, %c0_95, %c0_96] : memref<1x1x128xf32, #tpu.memory_space<vmem>>, vector<1x1x128xf32>
    %153 = vector.shape_cast %152 : vector<1x1x128xf32> to vector<1x128xf32>
    %154 = vector.shape_cast %151 : vector<1x128xf32> to vector<1x1x128xf32>
    tpu.vector_store %arg13[%c0_94, %c0_95, %c0_96], %154 {strides = array<i32>} : memref<1x1x128xf32, #tpu.memory_space<vmem>>, vector<1x1x128xf32>,
    %c0_97 = arith.constant 0 : index
    %c0_98 = arith.constant 0 : index
    %c0_99 = arith.constant 0 : index
    %155 = vector.load %arg14[%c0_97, %c0_98, %c0_99] : memref<1x1x128xf32, #tpu.memory_space<vmem>>, vector<1x1x128xf32>
    %156 = vector.shape_cast %155 : vector<1x1x128xf32> to vector<1x128xf32>
    %157 = arith.addf %130, %114 : vector<2x128xf32>
    %cst_100 = arith.constant dense<0.000000e+00> : vector<128xf32>
    %158 = vector.multi_reduction <add>, %157, %cst_100 [0] : vector<2x128xf32> to vector<128xf32>
    %159 = vector.shape_cast %158 : vector<128xf32> to vector<1x128xf32>
    %160 = arith.addf %156, %159 : vector<1x128xf32>
    %c0_101 = arith.constant 0 : index
    %c0_102 = arith.constant 0 : index
    %c0_103 = arith.constant 0 : index
    %161 = vector.load %arg14[%c0_101, %c0_102, %c0_103] : memref<1x1x128xf32, #tpu.memory_space<vmem>>, vector<1x1x128xf32>
    %162 = vector.shape_cast %161 : vector<1x1x128xf32> to vector<1x128xf32>
    %163 = vector.shape_cast %160 : vector<1x128xf32> to vector<1x1x128xf32>
    tpu.vector_store %arg14[%c0_101, %c0_102, %c0_103], %163 {strides = array<i32>} : memref<1x1x128xf32, #tpu.memory_space<vmem>>, vector<1x1x128xf32>,
    return
  }
  func.func @transform_0(%arg0: i32, %arg1: i32) -> (i32, i32, i32, i32) {
    %c0_i32 = arith.constant 0 : i32
    %c0_i32_0 = arith.constant 0 : i32
    %c0_i32_1 = arith.constant 0 : i32
    return %arg0, %c0_i32, %arg1, %c0_i32_0 : i32, i32, i32, i32
  }
  func.func @transform_1(%arg0: i32, %arg1: i32) -> (i32, i32, i32) {
    %c0_i32 = arith.constant 0 : i32
    %c0_i32_0 = arith.constant 0 : i32
    return %arg0, %arg1, %c0_i32 : i32, i32, i32
  }
  func.func @transform_2(%arg0: i32, %arg1: i32) -> (i32, i32, i32) {
    %c0_i32 = arith.constant 0 : i32
    %c0_i32_0 = arith.constant 0 : i32
    return %arg0, %arg1, %c0_i32 : i32, i32, i32
  }
  func.func @transform_3(%arg0: i32, %arg1: i32) -> (i32, i32, i32) {
    %c0_i32 = arith.constant 0 : i32
    %c0_i32_0 = arith.constant 0 : i32
    return %arg0, %arg1, %c0_i32 : i32, i32, i32
  }
  func.func @transform_4(%arg0: i32, %arg1: i32) -> (i32, i32, i32) {
    %c0_i32 = arith.constant 0 : i32
    %c0_i32_0 = arith.constant 0 : i32
    return %arg0, %arg1, %c0_i32 : i32, i32, i32
  }
  func.func @transform_5(%arg0: i32, %arg1: i32) -> (i32, i32, i32) {
    %c0_i32 = arith.constant 0 : i32
    %c0_i32_0 = arith.constant 0 : i32
    %c0_i32_1 = arith.constant 0 : i32
    return %arg0, %c0_i32, %c0_i32_0 : i32, i32, i32
  }
  func.func @transform_6(%arg0: i32, %arg1: i32) -> (i32, i32, i32) {
    %c0_i32 = arith.constant 0 : i32
    %c0_i32_0 = arith.constant 0 : i32
    %c0_i32_1 = arith.constant 0 : i32
    return %arg0, %c0_i32, %c0_i32_0 : i32, i32, i32
  }
  func.func @transform_7(%arg0: i32, %arg1: i32) -> (i32, i32, i32) {
    %c0_i32 = arith.constant 0 : i32
    %c0_i32_0 = arith.constant 0 : i32
    %c0_i32_1 = arith.constant 0 : i32
    return %arg0, %c0_i32, %c0_i32_0 : i32, i32, i32
  }
  func.func @transform_8(%arg0: i32, %arg1: i32) -> (i32, i32, i32) {
    %c0_i32 = arith.constant 0 : i32
    %c0_i32_0 = arith.constant 0 : i32
    %c0_i32_1 = arith.constant 0 : i32
    return %arg0, %c0_i32, %c0_i32_0 : i32, i32, i32
  }
  func.func @transform_9(%arg0: i32, %arg1: i32) -> (i32, i32, i32) {
    %c0_i32 = arith.constant 0 : i32
    %c0_i32_0 = arith.constant 0 : i32
    %c0_i32_1 = arith.constant 0 : i32
    return %arg0, %c0_i32, %c0_i32_0 : i32, i32, i32
  }
  func.func @transform_10(%arg0: i32, %arg1: i32) -> (i32, i32, i32) {
    %c0_i32 = arith.constant 0 : i32
    %c0_i32_0 = arith.constant 0 : i32
    %c0_i32_1 = arith.constant 0 : i32
    return %arg0, %c0_i32, %c0_i32_0 : i32, i32, i32
  }
  func.func @transform_11(%arg0: i32, %arg1: i32) -> (i32, i32, i32) {
    %c0_i32 = arith.constant 0 : i32
    %c0_i32_0 = arith.constant 0 : i32
    %c0_i32_1 = arith.constant 0 : i32
    return %arg0, %c0_i32, %c0_i32_0 : i32, i32, i32
  }
  func.func @transform_12(%arg0: i32, %arg1: i32) -> (i32, i32, i32) {
    %c0_i32 = arith.constant 0 : i32
    %c0_i32_0 = arith.constant 0 : i32
    %c0_i32_1 = arith.constant 0 : i32
    return %arg0, %c0_i32, %c0_i32_0 : i32, i32, i32
  }
}

module attributes {stable_mosaic.version = 11 : i64} {
  func.func @_seg_loss_kernel(%arg0: i32, %arg1: i32, %arg2: memref<1x2x128xf32, #tpu.memory_space<vmem>>, %arg3: memref<1x2x128xf32, #tpu.memory_space<vmem>>, %arg4: memref<1x1x128xf32, #tpu.memory_space<vmem>>, %arg5: memref<1x1x128xf32, #tpu.memory_space<vmem>>, %arg6: memref<1x1x128xf32, #tpu.memory_space<vmem>>) attributes {dimension_semantics = [#tpu.dimension_semantics<parallel>, #tpu.dimension_semantics<arbitrary>], iteration_bounds = array<i64: 2, 1>, scalar_prefetch = 0 : i64, scratch_operands = 0 : i64, tpu.core_type = #tpu.core_type<tc>, window_params = [{transform_indices = @transform_0, window_bounds = array<i64: 1, 2, 128>}, {transform_indices = @transform_1, window_bounds = array<i64: 1, 2, 128>}, {transform_indices = @transform_2, window_bounds = array<i64: 1, 1, 128>}, {transform_indices = @transform_3, window_bounds = array<i64: 1, 1, 128>}, {transform_indices = @transform_4, window_bounds = array<i64: 1, 1, 128>}]} {
    %c0_i32 = arith.constant 0 : i32
    %0 = arith.cmpi eq, %arg1, %c0_i32 : i32
    %1 = arith.extui %0 : i1 to i32
    %c0_i32_0 = arith.constant 0 : i32
    %2 = arith.cmpi ne, %1, %c0_i32_0 : i32
    scf.if %2 {
      %cst_33 = arith.constant 0.000000e+00 : f32
      %56 = vector.broadcast %cst_33 : f32 to vector<1x128xf32>
      %c0_34 = arith.constant 0 : index
      %c0_35 = arith.constant 0 : index
      %c0_36 = arith.constant 0 : index
      %57 = vector.load %arg4[%c0_34, %c0_35, %c0_36] : memref<1x1x128xf32, #tpu.memory_space<vmem>>, vector<1x1x128xf32>
      %58 = vector.shape_cast %57 : vector<1x1x128xf32> to vector<1x128xf32>
      %59 = vector.shape_cast %56 : vector<1x128xf32> to vector<1x1x128xf32>
      tpu.vector_store %arg4[%c0_34, %c0_35, %c0_36], %59 {strides = array<i32>} : memref<1x1x128xf32, #tpu.memory_space<vmem>>, vector<1x1x128xf32>,
      %cst_37 = arith.constant 0.000000e+00 : f32
      %60 = vector.broadcast %cst_37 : f32 to vector<1x128xf32>
      %c0_38 = arith.constant 0 : index
      %c0_39 = arith.constant 0 : index
      %c0_40 = arith.constant 0 : index
      %61 = vector.load %arg5[%c0_38, %c0_39, %c0_40] : memref<1x1x128xf32, #tpu.memory_space<vmem>>, vector<1x1x128xf32>
      %62 = vector.shape_cast %61 : vector<1x1x128xf32> to vector<1x128xf32>
      %63 = vector.shape_cast %60 : vector<1x128xf32> to vector<1x1x128xf32>
      tpu.vector_store %arg5[%c0_38, %c0_39, %c0_40], %63 {strides = array<i32>} : memref<1x1x128xf32, #tpu.memory_space<vmem>>, vector<1x1x128xf32>,
      %cst_41 = arith.constant 0.000000e+00 : f32
      %64 = vector.broadcast %cst_41 : f32 to vector<1x128xf32>
      %c0_42 = arith.constant 0 : index
      %c0_43 = arith.constant 0 : index
      %c0_44 = arith.constant 0 : index
      %65 = vector.load %arg6[%c0_42, %c0_43, %c0_44] : memref<1x1x128xf32, #tpu.memory_space<vmem>>, vector<1x1x128xf32>
      %66 = vector.shape_cast %65 : vector<1x1x128xf32> to vector<1x128xf32>
      %67 = vector.shape_cast %64 : vector<1x128xf32> to vector<1x1x128xf32>
      tpu.vector_store %arg6[%c0_42, %c0_43, %c0_44], %67 {strides = array<i32>} : memref<1x1x128xf32, #tpu.memory_space<vmem>>, vector<1x1x128xf32>,
    } else {
    }
    %c0 = arith.constant 0 : index
    %c0_1 = arith.constant 0 : index
    %c0_2 = arith.constant 0 : index
    %3 = vector.load %arg2[%c0, %c0_1, %c0_2] : memref<1x2x128xf32, #tpu.memory_space<vmem>>, vector<1x2x128xf32>
    %4 = vector.shape_cast %3 : vector<1x2x128xf32> to vector<2x128xf32>
    %c0_3 = arith.constant 0 : index
    %c0_4 = arith.constant 0 : index
    %c0_5 = arith.constant 0 : index
    %5 = vector.load %arg3[%c0_3, %c0_4, %c0_5] : memref<1x2x128xf32, #tpu.memory_space<vmem>>, vector<1x2x128xf32>
    %6 = vector.shape_cast %5 : vector<1x2x128xf32> to vector<2x128xf32>
    %cst = arith.constant 0.000000e+00 : f32
    %7 = vector.broadcast %cst : f32 to vector<2x128xf32>
    %8 = arith.subf %7, %4 : vector<2x128xf32>
    %cst_6 = arith.constant 0.000000e+00 : f32
    %9 = vector.broadcast %cst_6 : f32 to vector<2x128xf32>
    %10 = arith.maximumf %8, %9 : vector<2x128xf32>
    %11 = math.absf %4 : vector<2x128xf32>
    %cst_7 = arith.constant 0.000000e+00 : f32
    %12 = vector.broadcast %cst_7 : f32 to vector<2x128xf32>
    %13 = arith.subf %12, %11 : vector<2x128xf32>
    %14 = math.exp %13 : vector<2x128xf32>
    %cst_8 = arith.constant 1.000000e+00 : f32
    %15 = vector.broadcast %cst_8 : f32 to vector<2x128xf32>
    %16 = arith.addf %15, %14 : vector<2x128xf32>
    %17 = math.log %16 : vector<2x128xf32>
    %18 = arith.addf %10, %17 : vector<2x128xf32>
    %19 = arith.addf %18, %4 : vector<2x128xf32>
    %cst_9 = arith.constant 0.000000e+00 : f32
    %20 = vector.broadcast %cst_9 : f32 to vector<2x128xf32>
    %21 = arith.subf %20, %18 : vector<2x128xf32>
    %22 = math.exp %21 : vector<2x128xf32>
    %c0_10 = arith.constant 0 : index
    %c0_11 = arith.constant 0 : index
    %c0_12 = arith.constant 0 : index
    %23 = vector.load %arg4[%c0_10, %c0_11, %c0_12] : memref<1x1x128xf32, #tpu.memory_space<vmem>>, vector<1x1x128xf32>
    %24 = vector.shape_cast %23 : vector<1x1x128xf32> to vector<1x128xf32>
    %cst_13 = arith.constant 1.000000e+01 : f32
    %25 = vector.broadcast %cst_13 : f32 to vector<2x128xf32>
    %26 = arith.mulf %25, %6 : vector<2x128xf32>
    %27 = arith.mulf %26, %18 : vector<2x128xf32>
    %cst_14 = arith.constant 1.000000e+00 : f32
    %28 = vector.broadcast %cst_14 : f32 to vector<2x128xf32>
    %29 = arith.subf %28, %6 : vector<2x128xf32>
    %30 = arith.mulf %29, %19 : vector<2x128xf32>
    %31 = arith.addf %27, %30 : vector<2x128xf32>
    %cst_15 = arith.constant dense<0.000000e+00> : vector<128xf32>
    %32 = vector.multi_reduction <add>, %31, %cst_15 [0] : vector<2x128xf32> to vector<128xf32>
    %33 = vector.shape_cast %32 : vector<128xf32> to vector<1x128xf32>
    %34 = arith.addf %24, %33 : vector<1x128xf32>
    %c0_16 = arith.constant 0 : index
    %c0_17 = arith.constant 0 : index
    %c0_18 = arith.constant 0 : index
    %35 = vector.load %arg4[%c0_16, %c0_17, %c0_18] : memref<1x1x128xf32, #tpu.memory_space<vmem>>, vector<1x1x128xf32>
    %36 = vector.shape_cast %35 : vector<1x1x128xf32> to vector<1x128xf32>
    %37 = vector.shape_cast %34 : vector<1x128xf32> to vector<1x1x128xf32>
    tpu.vector_store %arg4[%c0_16, %c0_17, %c0_18], %37 {strides = array<i32>} : memref<1x1x128xf32, #tpu.memory_space<vmem>>, vector<1x1x128xf32>,
    %c0_19 = arith.constant 0 : index
    %c0_20 = arith.constant 0 : index
    %c0_21 = arith.constant 0 : index
    %38 = vector.load %arg5[%c0_19, %c0_20, %c0_21] : memref<1x1x128xf32, #tpu.memory_space<vmem>>, vector<1x1x128xf32>
    %39 = vector.shape_cast %38 : vector<1x1x128xf32> to vector<1x128xf32>
    %40 = arith.mulf %22, %6 : vector<2x128xf32>
    %cst_22 = arith.constant dense<0.000000e+00> : vector<128xf32>
    %41 = vector.multi_reduction <add>, %40, %cst_22 [0] : vector<2x128xf32> to vector<128xf32>
    %42 = vector.shape_cast %41 : vector<128xf32> to vector<1x128xf32>
    %43 = arith.addf %39, %42 : vector<1x128xf32>
    %c0_23 = arith.constant 0 : index
    %c0_24 = arith.constant 0 : index
    %c0_25 = arith.constant 0 : index
    %44 = vector.load %arg5[%c0_23, %c0_24, %c0_25] : memref<1x1x128xf32, #tpu.memory_space<vmem>>, vector<1x1x128xf32>
    %45 = vector.shape_cast %44 : vector<1x1x128xf32> to vector<1x128xf32>
    %46 = vector.shape_cast %43 : vector<1x128xf32> to vector<1x1x128xf32>
    tpu.vector_store %arg5[%c0_23, %c0_24, %c0_25], %46 {strides = array<i32>} : memref<1x1x128xf32, #tpu.memory_space<vmem>>, vector<1x1x128xf32>,
    %c0_26 = arith.constant 0 : index
    %c0_27 = arith.constant 0 : index
    %c0_28 = arith.constant 0 : index
    %47 = vector.load %arg6[%c0_26, %c0_27, %c0_28] : memref<1x1x128xf32, #tpu.memory_space<vmem>>, vector<1x1x128xf32>
    %48 = vector.shape_cast %47 : vector<1x1x128xf32> to vector<1x128xf32>
    %49 = arith.addf %22, %6 : vector<2x128xf32>
    %cst_29 = arith.constant dense<0.000000e+00> : vector<128xf32>
    %50 = vector.multi_reduction <add>, %49, %cst_29 [0] : vector<2x128xf32> to vector<128xf32>
    %51 = vector.shape_cast %50 : vector<128xf32> to vector<1x128xf32>
    %52 = arith.addf %48, %51 : vector<1x128xf32>
    %c0_30 = arith.constant 0 : index
    %c0_31 = arith.constant 0 : index
    %c0_32 = arith.constant 0 : index
    %53 = vector.load %arg6[%c0_30, %c0_31, %c0_32] : memref<1x1x128xf32, #tpu.memory_space<vmem>>, vector<1x1x128xf32>
    %54 = vector.shape_cast %53 : vector<1x1x128xf32> to vector<1x128xf32>
    %55 = vector.shape_cast %52 : vector<1x128xf32> to vector<1x1x128xf32>
    tpu.vector_store %arg6[%c0_30, %c0_31, %c0_32], %55 {strides = array<i32>} : memref<1x1x128xf32, #tpu.memory_space<vmem>>, vector<1x1x128xf32>,
    return
  }
  func.func @transform_0(%arg0: i32, %arg1: i32) -> (i32, i32, i32) {
    %c0_i32 = arith.constant 0 : i32
    %c0_i32_0 = arith.constant 0 : i32
    return %arg0, %arg1, %c0_i32 : i32, i32, i32
  }
  func.func @transform_1(%arg0: i32, %arg1: i32) -> (i32, i32, i32) {
    %c0_i32 = arith.constant 0 : i32
    %c0_i32_0 = arith.constant 0 : i32
    return %arg0, %arg1, %c0_i32 : i32, i32, i32
  }
  func.func @transform_2(%arg0: i32, %arg1: i32) -> (i32, i32, i32) {
    %c0_i32 = arith.constant 0 : i32
    %c0_i32_0 = arith.constant 0 : i32
    %c0_i32_1 = arith.constant 0 : i32
    return %arg0, %c0_i32, %c0_i32_0 : i32, i32, i32
  }
  func.func @transform_3(%arg0: i32, %arg1: i32) -> (i32, i32, i32) {
    %c0_i32 = arith.constant 0 : i32
    %c0_i32_0 = arith.constant 0 : i32
    %c0_i32_1 = arith.constant 0 : i32
    return %arg0, %c0_i32, %c0_i32_0 : i32, i32, i32
  }
  func.func @transform_4(%arg0: i32, %arg1: i32) -> (i32, i32, i32) {
    %c0_i32 = arith.constant 0 : i32
    %c0_i32_0 = arith.constant 0 : i32
    %c0_i32_1 = arith.constant 0 : i32
    return %arg0, %c0_i32, %c0_i32_0 : i32, i32, i32
  }
}

</mosaic_0001>

<llo_original>
// kernel: fwd.6
$region0: #{fwd.6}
  #allocation0 [shape = 'u32[]', space=smem, size = 0x4, offset = 0x4, fixed_abs, tag = 'smem constant byte address 0x4 - core index']
  #allocation1 [shape = 'u32[72,128]{1,0:T(1,128)}', space=vmem, size = 0x9000, scoped, tag = 'internal scratch']
  %s0 = inlined_call_operand.vmem [shape: f32[2,32,256], index: 0, kind: input, shape index: {}]
  %s1 = inlined_call_operand.vmem [shape: f32[8,32], index: 1, kind: input, shape index: {}]
  %s2 = inlined_call_operand.vmem [shape: f32[8,1], index: 2, kind: input, shape index: {}]
  %s3 = inlined_call_operand.vmem [shape: f32[2,8,256], index: 3, kind: output, shape index: {}]
  %s4 = sld [smem:[#allocation0]]
  $region45: #{fwd.6} parent=0
    _
  %s6 = ssub.s32 1, %s4
  %s7 = scalar_select 0, %s6, %s4
  loop: start=0, step=1, limit=4
  $region2: #{fwd.6} parent=0 // loop_pre_header
    _
  $region3: #{fwd.6} parent=0 // loop_header
    %s9 = sphi 0, %s13
    %p10 = scmp.ge.s32.totalorder %s9, 4
    %s16 = sphi 0, %s28
    %s17 = sphi 0, %s24
    %s18 = sphi 0, %s16
    %s19 = sphi 0, %s17
    %s20 = sphi 0, %s18
    %s21 = sphi 0, %s19
    %s33 = sphi 0, %s35
    %s36 = sphi 0, %s33
    %s37 = sphi 0, %s36
    %s53 = sphi 0, %s37
    %s57 = sphi 0, %s57
    %s59 = sphi 0, %s57
    %s60 = sphi 0, %s59
    %s74 = sphi 0, %s60
    %s78 = sphi 0, %s78
    %s80 = sphi 0, %s78
    %s81 = sphi 0, %s80
    %s95 = sphi 0, %s81
    %s103 = sphi 0, %s105
    %s106 = sphi 0, %s103
    %s107 = sphi 0, %s106
    %s123 = sphi 0, %s107
  $region4: #{fwd.6} parent=0 // loop_header_branch
    %12 = sbr.rel (%p10) target = $region8
  $region5: #{fwd.6} parent=0 // loop_body
    %s14 = ssub.s32 %s9, 1
    %s15 = ssub.s32 %s9, 2
    %s22 = sadd.s32 1, %s17
    %p23 = scmp.ge.s32.totalorder %s22, 1
    %s24 = scalar_select %p23, 0, %s22
    %s25 = sadd.s32 1, %s16
    %s26 = scalar_select %p23, %s25, %s16
    %p27 = scmp.ge.s32.totalorder %s26, 2
    %s28 = scalar_select %p27, 0, %s26
    %s29 = ssub.s32 %s16, %s28
    %s30 = ssub.s32 %s17, %s24
    %s31 = sor.u32 %s29, %s30
    %p32 = scmp.eq.s32.totalorder %s31, 0
    %s34 = sadd.s32 %s33, 1
    %s35 = scalar_select %p32, %s33, %s34
    %p38 = pneg %p32
    %p39 = scmp.eq.s32.totalorder %s9, 1
    %p40 = por %p38, %p39
    %p41 = scmp.ne.s32.totalorder %s33, %s36
    %p42 = scmp.eq.s32.totalorder %s9, 0
    %p43 = por %p41, %p42
    %p44 = scmp.ne.s32.totalorder %s33, %s36
    %p45 = scmp.eq.s32.totalorder %s14, 1
    %p46 = por %p44, %p45
    %p47 = scmp.ne.s32.totalorder %s36, %s37
    %p48 = scmp.eq.s32.totalorder %s14, 0
    %p49 = por %p47, %p48
    %p50 = scmp.ne.s32.totalorder %s36, %s37
    %p51 = scmp.eq.s32.totalorder %s15, 1
    %p52 = por %p50, %p51
    %p54 = scmp.ne.s32.totalorder %s37, %s53
    %p55 = scmp.eq.s32.totalorder %s15, 0
    %p56 = por %p54, %p55
    %s58 = sadd.s32 %s57, 1
    %p61 = scmp.eq.s32.totalorder %s9, 1
    %p62 = scmp.ne.s32.totalorder %s57, %s59
    %p63 = scmp.eq.s32.totalorder %s9, 0
    %p64 = por %p62, %p63
    %p65 = scmp.ne.s32.totalorder %s57, %s59
    %p66 = scmp.eq.s32.totalorder %s14, 1
    %p67 = por %p65, %p66
    %p68 = scmp.ne.s32.totalorder %s59, %s60
    %p69 = scmp.eq.s32.totalorder %s14, 0
    %p70 = por %p68, %p69
    %p71 = scmp.ne.s32.totalorder %s59, %s60
    %p72 = scmp.eq.s32.totalorder %s15, 1
    %p73 = por %p71, %p72
    %p75 = scmp.ne.s32.totalorder %s60, %s74
    %p76 = scmp.eq.s32.totalorder %s15, 0
    %p77 = por %p75, %p76
    %s79 = sadd.s32 %s78, 1
    %p82 = scmp.eq.s32.totalorder %s9, 1
    %p83 = scmp.ne.s32.totalorder %s78, %s80
    %p84 = scmp.eq.s32.totalorder %s9, 0
    %p85 = por %p83, %p84
    %p86 = scmp.ne.s32.totalorder %s78, %s80
    %p87 = scmp.eq.s32.totalorder %s14, 1
    %p88 = por %p86, %p87
    %p89 = scmp.ne.s32.totalorder %s80, %s81
    %p90 = scmp.eq.s32.totalorder %s14, 0
    %p91 = por %p89, %p90
    %p92 = scmp.ne.s32.totalorder %s80, %s81
    %p93 = scmp.eq.s32.totalorder %s15, 1
    %p94 = por %p92, %p93
    %p96 = scmp.ne.s32.totalorder %s81, %s95
    %p97 = scmp.eq.s32.totalorder %s15, 0
    %p98 = por %p96, %p97
    %s99 = ssub.s32 %s16, %s28
    %s100 = ssub.s32 %s17, %s24
    %s101 = sor.u32 %s99, %s100
    %p102 = scmp.eq.s32.totalorder %s101, 0
    %s104 = sadd.s32 %s103, 1
    %s105 = scalar_select %p102, %s103, %s104
    %p108 = pneg %p102
    %p109 = scmp.eq.s32.totalorder %s9, 1
    %p110 = por %p108, %p109
    %p111 = scmp.ne.s32.totalorder %s103, %s106
    %p112 = scmp.eq.s32.totalorder %s9, 0
    %p113 = por %p111, %p112
    %p114 = scmp.ne.s32.totalorder %s103, %s106
    %p115 = scmp.eq.s32.totalorder %s14, 1
    %p116 = por %p114, %p115
    %p117 = scmp.ne.s32.totalorder %s106, %s107
    %p118 = scmp.eq.s32.totalorder %s14, 0
    %p119 = por %p117, %p118
    %p120 = scmp.ne.s32.totalorder %s106, %s107
    %p121 = scmp.eq.s32.totalorder %s15, 1
    %p122 = por %p120, %p121
    %p124 = scmp.ne.s32.totalorder %s107, %s123
    %p125 = scmp.eq.s32.totalorder %s15, 0
    %p126 = por %p124, %p125
    %p127 = scmp.le.s32.totalorder 1, %s9
    %p128 = scmp.lt.s32.totalorder %s9, 3
    %p129 = pnand %p127, %p128
    %p130 = pneg %p129
    // Predicated region
    $region9: #{fwd.6} parent=5 // pred_check
      _
    $region10: #{fwd.6} parent=5 // pred_check_branch
      %132 = sbr.rel (%p129) target = $region12
    $region11: #{fwd.6} parent=5 // pred_region
      %s133 = ssub.s32 %s9, 1
      // Predicated region
      $region13: #{fwd.6} parent=11 // pred_check
        %p134 = pneg %p70
      $region14: #{fwd.6} parent=11 // pred_check_branch
        %136 = sbr.rel (%p134) target = $region16
      $region15: #{fwd.6} parent=11 // pred_region
        _
      $region16: #{fwd.6} parent=11 // pred_fallthru
        _
      // Predicated region
      $region17: #{fwd.6} parent=11 // pred_check
        %p137 = pneg %p91
      $region18: #{fwd.6} parent=11 // pred_check_branch
        %139 = sbr.rel (%p137) target = $region20
      $region19: #{fwd.6} parent=11 // pred_region
        _
      $region20: #{fwd.6} parent=11 // pred_fallthru
        _
    $region12: #{fwd.6} parent=5 // pred_fallthru
      _
    %p140 = scmp.lt.s32.totalorder %s9, 2
    // Predicated region
    $region21: #{fwd.6} parent=5 // pred_check
      %p141 = pneg %p140
    $region22: #{fwd.6} parent=5 // pred_check_branch
      %143 = sbr.rel (%p141) target = $region24
    $region23: #{fwd.6} parent=5 // pred_region
      // Predicated region
      $region25: #{fwd.6} parent=23 // pred_check
        %p144 = pneg %p43
      $region26: #{fwd.6} parent=23 // pred_check_branch
        %146 = sbr.rel (%p144) target = $region28
      $region27: #{fwd.6} parent=23 // pred_region
        %s147 = smul.u32 2, %s17
        %p148 = scmp.lt.s32.totalorder %s16, 1
        %s149 = scalar_select %p148, %s16, 1
        %p150 = scmp.lt.s32.totalorder %s147, 1
        %s151 = scalar_select %p150, %s147, 1
        %s152 = smul.addr %s149, 8
        %s153 = sadd.s32 %s151, %s152
        %s154 = smul.addr %s153, 8
        %s155 = scalar_lea.vmem %s0, %s154
        %s156 = smul.u32 2, %s17
      $region28: #{fwd.6} parent=23 // pred_fallthru
        _
    $region24: #{fwd.6} parent=5 // pred_fallthru
      _
    %p157 = scmp.le.s32.totalorder 1, %s9
    %p158 = scmp.lt.s32.totalorder %s9, 3
    %p159 = pnand %p157, %p158
    %p160 = pneg %p159
    // Predicated region
    $region29: #{fwd.6} parent=5 // pred_check
      _
    $region30: #{fwd.6} parent=5 // pred_check_branch
      %162 = sbr.rel (%p159) target = $region32
    $region31: #{fwd.6} parent=5 // pred_region
      %s163 = ssub.s32 %s9, 1
      %s164 = smul.u32 2, %s19
      %p165 = scmp.lt.s32.totalorder %s18, 1
      %s166 = scalar_select %p165, %s18, 1
      %p167 = scmp.lt.s32.totalorder %s164, 1
      %s168 = scalar_select %p167, %s164, 1
      %s169 = smul.addr %s166, 8
      %s170 = sadd.s32 %s168, %s169
      %s171 = smul.addr %s170, 8
      %s172 = scalar_lea.vmem %s0, %s171
      %p173 = pneg %p49
      %p174 = pneg %p46
      %p175 = pneg %p70
      %p176 = pneg %p67
      %p177 = pneg %p91
      %p178 = pneg %p88
      %p179 = pneg %p119
      %p180 = pneg %p116
      %s181 = smul.u32 2, %s19
      %p182 = scmp.lt.s32.totalorder %s18, 1
      %s183 = scalar_select %p182, %s18, 1
      %p184 = scmp.lt.s32.totalorder %s181, 1
      %s185 = scalar_select %p184, %s181, 1
      %s186 = smul.addr %s183, 2
      %s187 = sadd.s32 %s185, %s186
      %s188 = smul.addr %s187, 8
      %s189 = scalar_lea.vmem %s3, %s188
      %s190 = smul.u32 2, %s19
      %p191 = scmp.lt.s32.totalorder %s18, 1
      %s192 = scalar_select %p191, %s18, 1
      %p193 = scmp.lt.s32.totalorder %s190, 1
      %s194 = scalar_select %p193, %s190, 1
      %s195 = smul.addr %s192, 8
      %s196 = sadd.s32 %s194, %s195
      %s197 = smul.addr %s196, 8
      %s198 = scalar_lea.vmem %s0, %s197
      %s199 = smul.u32 2, %s19
      %s200 = smul.u32 2, %s19
      %p201 = scmp.lt.s32.totalorder %s18, 1
      %s202 = scalar_select %p201, %s18, 1
      %p203 = scmp.lt.s32.totalorder %s200, 1
      %s204 = scalar_select %p203, %s200, 1
      %s205 = smul.addr %s202, 2
      %s206 = sadd.s32 %s204, %s205
      %s207 = smul.addr %s206, 8
      %s208 = scalar_lea.vmem %s3, %s207
      %s209 = smul.u32 2, %s19
      %v210 = vld [vmem:[%s1] sm:$0xff]
      %v211 = vld [vmem:[%s198] sm:$0xff]
      %v212 = vld [vmem:[%s198 + $0x8] sm:$0xff]
      %v213 = vld [vmem:[%s198 + $0x10] sm:$0xff]
      %v214 = vld [vmem:[%s198 + $0x18] sm:$0xff]
      %v215 = vld [vmem:[%s198 + $0x20] sm:$0xff]
      %v216 = vld [vmem:[%s198 + $0x28] sm:$0xff]
      %v217 = vld [vmem:[%s198 + $0x30] sm:$0xff]
      %v218 = vld [vmem:[%s198 + $0x38] sm:$0xff]
      %v219 = vld [vmem:[%s2] sm:$0xff]
      %221 = vset.pattern.permute.xlu0 0
      %222 = vperm.xlu0 %221, %v219
      %v223 = vpop.permute.xlu0 %222
      %vm225 = vcmask 261120
      %v227 = vsel %vm225, %v210, 0
      %229 = vmatpush.msra.mxu0 0.0
      %230 = vmatpush.msra.mxu0 0.0
      %231 = vmatpush.msra.mxu0 0.0
      %232 = vmatpush.msra.mxu0 0.0
      %233 = vmatpush.msra.mxu0 0.0
      %234 = vmatpush.msra.mxu0 0.0
      %235 = vmatpush.msra.mxu0 0.0
      %236 = vmatpush.msra.mxu0 0.0
      %237 = vmatpush.msra.mxu0 0.0
      %238 = vmatpush.msra.mxu0 0.0
      %239 = vmatpush.msra.mxu0 0.0
      %240 = vmatpush.msra.mxu0 0.0
      %241 = vmatpush.msra.mxu0 %v217
      %242 = vmatpush.msra.mxu0 %v215
      %243 = vmatpush.msra.mxu0 %v213
      %244 = vmatpush.msra.mxu0 %v211
      %245 = vmatmul.f32.gmra.mxu0 %v227
      %v246 = vpop.f32.mrf.mxu0
      %v247 = vadd.f32 %v223, %v246
      %248 = vdwg.mxu0
      %249 = vmatpush.msra.mxu0 0.0
      %250 = vmatpush.msra.mxu0 0.0
      %251 = vmatpush.msra.mxu0 0.0
      %252 = vmatpush.msra.mxu0 0.0
      %253 = vmatpush.msra.mxu0 0.0
      %254 = vmatpush.msra.mxu0 0.0
      %255 = vmatpush.msra.mxu0 0.0
      %256 = vmatpush.msra.mxu0 0.0
      %257 = vmatpush.msra.mxu0 0.0
      %258 = vmatpush.msra.mxu0 0.0
      %259 = vmatpush.msra.mxu0 0.0
      %260 = vmatpush.msra.mxu0 0.0
      %261 = vmatpush.msra.mxu0 %v218
      %262 = vmatpush.msra.mxu0 %v216
      %263 = vmatpush.msra.mxu0 %v214
      %264 = vmatpush.msra.mxu0 %v212
      %265 = vmatmul.f32.gmra.mxu0 %v227
      %v266 = vpop.f32.mrf.mxu0
      %v267 = vadd.f32 %v223, %v266
      %268 = vdwg.mxu0
      %269 = vst [vmem:[%s208] sm:$0xff] %v247
      %270 = vst [vmem:[%s208 + $0x8] sm:$0xff] %v267
      %s271 = smul.u32 2, %s19
      %p272 = scmp.lt.s32.totalorder %s18, 1
      %s273 = scalar_select %p272, %s18, 1
      %p274 = scmp.lt.s32.totalorder %s271, 1
      %s275 = scalar_select %p274, %s271, 1
      %s276 = smul.addr %s273, 2
      %s277 = sadd.s32 %s275, %s276
      %s278 = smul.addr %s277, 8
      %s279 = scalar_lea.vmem %s3, %s278
      // Predicated region
      $region33: #{fwd.6} parent=31 // pred_check
        %p280 = pneg %p116
      $region34: #{fwd.6} parent=31 // pred_check_branch
        %282 = sbr.rel (%p280) target = $region36
      $region35: #{fwd.6} parent=31 // pred_region
        %s283 = smul.u32 2, %s19
      $region36: #{fwd.6} parent=31 // pred_fallthru
        _
    $region32: #{fwd.6} parent=5 // pred_fallthru
      _
    %p284 = scmp.le.s32.totalorder 2, %s9
    // Predicated region
    $region37: #{fwd.6} parent=5 // pred_check
      %p285 = pneg %p284
    $region38: #{fwd.6} parent=5 // pred_check_branch
      %287 = sbr.rel (%p285) target = $region40
    $region39: #{fwd.6} parent=5 // pred_region
      %s288 = ssub.s32 %s9, 2
      // Predicated region
      $region41: #{fwd.6} parent=39 // pred_check
        %p289 = pneg %p122
      $region42: #{fwd.6} parent=39 // pred_check_branch
        %291 = sbr.rel (%p289) target = $region44
      $region43: #{fwd.6} parent=39 // pred_region
        %s292 = smul.u32 2, %s21
        %p293 = scmp.lt.s32.totalorder %s20, 1
        %s294 = scalar_select %p293, %s20, 1
        %p295 = scmp.lt.s32.totalorder %s292, 1
        %s296 = scalar_select %p295, %s292, 1
        %s297 = smul.addr %s294, 2
        %s298 = sadd.s32 %s296, %s297
        %s299 = smul.addr %s298, 8
        %s300 = scalar_lea.vmem %s3, %s299
      $region44: #{fwd.6} parent=39 // pred_fallthru
        _
    $region40: #{fwd.6} parent=5 // pred_fallthru
      _
  $region6: #{fwd.6} parent=0 // loop_footer
    %s13 = sadd.s32 1, %s9
  $region7: #{fwd.6} parent=0 // loop_footer_branch
    %8 = sbr.rel target = $region3
  $region8: #{fwd.6} parent=0 // loop_exit
    _

// kernel: fwd.8
$region0: #{fwd.8}
  #allocation0 [shape = 'u32[]', space=smem, size = 0x4, offset = 0x4, fixed_abs, tag = 'smem constant byte address 0x4 - core index']
  #allocation1 [shape = 'u32[72,128]{1,0:T(1,128)}', space=vmem, size = 0x9000, scoped, tag = 'internal scratch']
  %s0 = inlined_call_operand.vmem [shape: f32[2,2,256], index: 0, kind: input, shape index: {}]
  %s1 = inlined_call_operand.vmem [shape: f32[2,1,256], index: 1, kind: input, shape index: {}]
  %s2 = inlined_call_operand.vmem [shape: f32[1,128], index: 2, kind: output, shape index: {0}]
  %s3 = inlined_call_operand.vmem [shape: f32[1,128], index: 3, kind: output, shape index: {1}]
  %s4 = inlined_call_operand.vmem [shape: f32[1,128], index: 4, kind: output, shape index: {2}]
  %5 = xla_tuple %s2, %s3, %s4
  %s6 = sld [smem:[#allocation0]]
  $region61: #{fwd.8} parent=0
    _
  %s8 = ssub.s32 1, %s6
  %s9 = scalar_select 0, %s8, %s6
  loop: start=0, step=1, limit=4
  $region2: #{fwd.8} parent=0 // loop_pre_header
    _
  $region3: #{fwd.8} parent=0 // loop_header
    %s11 = sphi 0, %s15
    %p12 = scmp.ge.s32.totalorder %s11, 4
    %s21 = sphi 0, %s23
    %s24 = sphi 0, %s21
    %s25 = sphi 0, %s24
    %s41 = sphi 0, %s25
    %s47 = sphi 0, %s49
    %s50 = sphi 0, %s47
    %s51 = sphi 0, %s50
    %s67 = sphi 0, %s51
    %s71 = sphi 0, %s71
    %s73 = sphi 0, %s71
    %s74 = sphi 0, %s73
    %s88 = sphi 0, %s74
    %s92 = sphi 0, %s92
    %s94 = sphi 0, %s92
    %s95 = sphi 0, %s94
    %s109 = sphi 0, %s95
    %s113 = sphi 0, %s113
    %s115 = sphi 0, %s113
    %s116 = sphi 0, %s115
    %s130 = sphi 0, %s116
  $region4: #{fwd.8} parent=0 // loop_header_branch
    %14 = sbr.rel (%p12) target = $region8
  $region5: #{fwd.8} parent=0 // loop_body
    %s16 = ssub.s32 %s11, 1
    %s17 = ssub.s32 %s11, 2
    %s18 = sadd.s32 %s11, 1
    %s19 = ssub.s32 %s11, %s18
    %p20 = scmp.eq.s32.totalorder %s19, 0
    %s22 = sadd.s32 %s21, 1
    %s23 = scalar_select %p20, %s21, %s22
    %p26 = pneg %p20
    %p27 = scmp.eq.s32.totalorder %s11, 1
    %p28 = por %p26, %p27
    %p29 = scmp.ne.s32.totalorder %s21, %s24
    %p30 = scmp.eq.s32.totalorder %s11, 0
    %p31 = por %p29, %p30
    %p32 = scmp.ne.s32.totalorder %s21, %s24
    %p33 = scmp.eq.s32.totalorder %s16, 1
    %p34 = por %p32, %p33
    %p35 = scmp.ne.s32.totalorder %s24, %s25
    %p36 = scmp.eq.s32.totalorder %s16, 0
    %p37 = por %p35, %p36
    %p38 = scmp.ne.s32.totalorder %s24, %s25
    %p39 = scmp.eq.s32.totalorder %s17, 1
    %p40 = por %p38, %p39
    %p42 = scmp.ne.s32.totalorder %s25, %s41
    %p43 = scmp.eq.s32.totalorder %s17, 0
    %p44 = por %p42, %p43
    %s45 = ssub.s32 %s11, %s18
    %p46 = scmp.eq.s32.totalorder %s45, 0
    %s48 = sadd.s32 %s47, 1
    %s49 = scalar_select %p46, %s47, %s48
    %p52 = pneg %p46
    %p53 = scmp.eq.s32.totalorder %s11, 1
    %p54 = por %p52, %p53
    %p55 = scmp.ne.s32.totalorder %s47, %s50
    %p56 = scmp.eq.s32.totalorder %s11, 0
    %p57 = por %p55, %p56
    %p58 = scmp.ne.s32.totalorder %s47, %s50
    %p59 = scmp.eq.s32.totalorder %s16, 1
    %p60 = por %p58, %p59
    %p61 = scmp.ne.s32.totalorder %s50, %s51
    %p62 = scmp.eq.s32.totalorder %s16, 0
    %p63 = por %p61, %p62
    %p64 = scmp.ne.s32.totalorder %s50, %s51
    %p65 = scmp.eq.s32.totalorder %s17, 1
    %p66 = por %p64, %p65
    %p68 = scmp.ne.s32.totalorder %s51, %s67
    %p69 = scmp.eq.s32.totalorder %s17, 0
    %p70 = por %p68, %p69
    %s72 = sadd.s32 %s71, 1
    %p75 = scmp.eq.s32.totalorder %s11, 1
    %p76 = scmp.ne.s32.totalorder %s71, %s73
    %p77 = scmp.eq.s32.totalorder %s11, 0
    %p78 = por %p76, %p77
    %p79 = scmp.ne.s32.totalorder %s71, %s73
    %p80 = scmp.eq.s32.totalorder %s16, 1
    %p81 = por %p79, %p80
    %p82 = scmp.ne.s32.totalorder %s73, %s74
    %p83 = scmp.eq.s32.totalorder %s16, 0
    %p84 = por %p82, %p83
    %p85 = scmp.ne.s32.totalorder %s73, %s74
    %p86 = scmp.eq.s32.totalorder %s17, 1
    %p87 = por %p85, %p86
    %p89 = scmp.ne.s32.totalorder %s74, %s88
    %p90 = scmp.eq.s32.totalorder %s17, 0
    %p91 = por %p89, %p90
    %s93 = sadd.s32 %s92, 1
    %p96 = scmp.eq.s32.totalorder %s11, 1
    %p97 = scmp.ne.s32.totalorder %s92, %s94
    %p98 = scmp.eq.s32.totalorder %s11, 0
    %p99 = por %p97, %p98
    %p100 = scmp.ne.s32.totalorder %s92, %s94
    %p101 = scmp.eq.s32.totalorder %s16, 1
    %p102 = por %p100, %p101
    %p103 = scmp.ne.s32.totalorder %s94, %s95
    %p104 = scmp.eq.s32.totalorder %s16, 0
    %p105 = por %p103, %p104
    %p106 = scmp.ne.s32.totalorder %s94, %s95
    %p107 = scmp.eq.s32.totalorder %s17, 1
    %p108 = por %p106, %p107
    %p110 = scmp.ne.s32.totalorder %s95, %s109
    %p111 = scmp.eq.s32.totalorder %s17, 0
    %p112 = por %p110, %p111
    %s114 = sadd.s32 %s113, 1
    %p117 = scmp.eq.s32.totalorder %s11, 1
    %p118 = scmp.ne.s32.totalorder %s113, %s115
    %p119 = scmp.eq.s32.totalorder %s11, 0
    %p120 = por %p118, %p119
    %p121 = scmp.ne.s32.totalorder %s113, %s115
    %p122 = scmp.eq.s32.totalorder %s16, 1
    %p123 = por %p121, %p122
    %p124 = scmp.ne.s32.totalorder %s115, %s116
    %p125 = scmp.eq.s32.totalorder %s16, 0
    %p126 = por %p124, %p125
    %p127 = scmp.ne.s32.totalorder %s115, %s116
    %p128 = scmp.eq.s32.totalorder %s17, 1
    %p129 = por %p127, %p128
    %p131 = scmp.ne.s32.totalorder %s116, %s130
    %p132 = scmp.eq.s32.totalorder %s17, 0
    %p133 = por %p131, %p132
    %p134 = scmp.le.s32.totalorder 1, %s11
    %p135 = scmp.lt.s32.totalorder %s11, 3
    %p136 = pnand %p134, %p135
    %p137 = pneg %p136
    // Predicated region
    $region9: #{fwd.8} parent=5 // pred_check
      _
    $region10: #{fwd.8} parent=5 // pred_check_branch
      %139 = sbr.rel (%p136) target = $region12
    $region11: #{fwd.8} parent=5 // pred_region
      %s140 = ssub.s32 %s11, 1
    $region12: #{fwd.8} parent=5 // pred_fallthru
      _
    %p141 = scmp.lt.s32.totalorder %s11, 2
    // Predicated region
    $region13: #{fwd.8} parent=5 // pred_check
      %p142 = pneg %p141
    $region14: #{fwd.8} parent=5 // pred_check_branch
      %144 = sbr.rel (%p142) target = $region16
    $region15: #{fwd.8} parent=5 // pred_region
      // Predicated region
      $region17: #{fwd.8} parent=15 // pred_check
        %p145 = pneg %p31
      $region18: #{fwd.8} parent=15 // pred_check_branch
        %147 = sbr.rel (%p145) target = $region20
      $region19: #{fwd.8} parent=15 // pred_region
        %p148 = scmp.lt.s32.totalorder %s11, 1
        %s149 = scalar_select %p148, %s11, 1
        %s150 = smul.addr %s149, 2
        %s151 = smul.addr %s150, 2
        %s152 = scalar_lea.vmem %s0, %s151
      $region20: #{fwd.8} parent=15 // pred_fallthru
        _
      // Predicated region
      $region21: #{fwd.8} parent=15 // pred_check
        %p153 = pneg %p57
      $region22: #{fwd.8} parent=15 // pred_check_branch
        %155 = sbr.rel (%p153) target = $region24
      $region23: #{fwd.8} parent=15 // pred_region
        %p156 = scmp.lt.s32.totalorder %s11, 1
        %s157 = scalar_select %p156, %s11, 1
        %s158 = smul.addr %s157, 2
        %s159 = scalar_lea.vmem %s1, %s158
      $region24: #{fwd.8} parent=15 // pred_fallthru
        _
    $region16: #{fwd.8} parent=5 // pred_fallthru
      _
    %p160 = scmp.le.s32.totalorder 1, %s11
    %p161 = scmp.lt.s32.totalorder %s11, 3
    %p162 = pnand %p160, %p161
    %p163 = pneg %p162
    // Predicated region
    $region25: #{fwd.8} parent=5 // pred_check
      _
    $region26: #{fwd.8} parent=5 // pred_check_branch
      %165 = sbr.rel (%p162) target = $region28
    $region27: #{fwd.8} parent=5 // pred_region
      %s166 = ssub.s32 %s11, 1
      %p167 = scmp.lt.s32.totalorder %s16, 1
      %s168 = scalar_select %p167, %s16, 1
      %s169 = smul.addr %s168, 2
      %s170 = smul.addr %s169, 2
      %s171 = scalar_lea.vmem %s0, %s170
      %p172 = pneg %p37
      %p173 = pneg %p34
      %p174 = scmp.lt.s32.totalorder %s16, 1
      %s175 = scalar_select %p174, %s16, 1
      %s176 = smul.addr %s175, 2
      %s177 = scalar_lea.vmem %s1, %s176
      %p178 = pneg %p63
      %p179 = pneg %p60
      %p180 = pneg %p84
      %p181 = pneg %p81
      %p182 = pneg %p105
      %p183 = pneg %p102
      %p184 = pneg %p126
      %p185 = pneg %p123
      %p186 = scmp.lt.s32.totalorder %s16, 1
      %s187 = scalar_select %p186, %s16, 1
      %s188 = smul.addr %s187, 2
      %s189 = smul.addr %s188, 2
      %s190 = scalar_lea.vmem %s0, %s189
      %p191 = scmp.lt.s32.totalorder %s16, 1
      %s192 = scalar_select %p191, %s16, 1
      %s193 = smul.addr %s192, 2
      %s194 = scalar_lea.vmem %s1, %s193
      %p195 = scmp.eq.s32.totalorder %s16, 0
      // Predicated region
      $region29: #{fwd.8} parent=27 // pred_check
        %p196 = pneg %p195
      $region30: #{fwd.8} parent=27 // pred_check_branch
        %198 = sbr.rel (%p196) target = $region32
      $region31: #{fwd.8} parent=27 // pred_region
        %199 = vst [vmem:[%s2] sm:$0x1] 0.0
        %200 = vst [vmem:[%s3] sm:$0x1] 0.0
        %201 = vst [vmem:[%s4] sm:$0x1] 0.0
      $region32: #{fwd.8} parent=27 // pred_fallthru
        _
      %v202 = vld [vmem:[%s190] sm:$0xf]
      %v203 = vld [vmem:[%s194] sm:$0x3]
      %v204 = vlaneseq
      %v205 = vshrl.u32 %v204, 7
      %v206 = vadd.s32 %v205, 1
      %v207 = vcvt.s32.f32 %v206
      %v209 = vperm.slane %v203, 0
      %v210 = vperm.slane %v203, 1
      %vm213 = vcmp.eq.f32.partialorder %v209, %v207
      %vm214 = vcmp.eq.f32.partialorder %v210, %v207
      %vm215 = vcmp.le.s32.totalorder %v206, 4
      %vm216 = vmand %vm213, %vm215
      %vm217 = vmand %vm214, %vm215
      %v218 = vsel %vm216, 1.0, 0.0
      %v219 = vsel %vm217, 1.0, 0.0
      %v220 = vadd.f32 %v218, %v219
      %221 = vadd.xlane.f32.xlu0 %v220
      %v222 = vpop.xlane.xlu0 %221
      %vm223 = vcmp.gt.f32.partialorder %v222, 0.0
      %v224 = vsel %vm223, 1.0, 0.0
      %v225 = vmax.f32 %v222, 1.0
      %227 = vst [vmem:[#allocation1] ss:$4 sm:$0xff] %v202
      %v228 = vld.sshfl [vmem:[#allocation1] sm:$0xff pattern:$0x73625140]
      %v229 = vld.sshfl [vmem:[#allocation1 + $0x8] sm:$0xff pattern:$0x73625140]
      %232 = vmatpush.xpose.msra.mxu0 0.0
      %233 = vmatpush.xpose.msra.mxu0 0.0
      %234 = vmatpush.xpose.msra.mxu0 0.0
      %235 = vmatpush.xpose.msra.mxu0 0.0
      %236 = vmatpush.xpose.msra.mxu0 0.0
      %237 = vmatpush.xpose.msra.mxu0 0.0
      %238 = vmatpush.xpose.msra.mxu0 0.0
      %239 = vmatpush.xpose.msra.mxu0 0.0
      %240 = vmatpush.xpose.msra.mxu0 0.0
      %241 = vmatpush.xpose.msra.mxu0 0.0
      %242 = vmatpush.xpose.msra.mxu0 0.0
      %243 = vmatpush.xpose.msra.mxu0 0.0
      %244 = vmatpush.xpose.msra.mxu0 0.0
      %245 = vmatpush.xpose.msra.mxu0 0.0
      %246 = vmatpush.xpose.msra.mxu0 0.0
      %247 = vmatpush.xpose.msra.mxu0 %v228
      %248 = vmatmul.f32.gmra.mxu0 %v218
      %v249 = vpop.f32.mrf.mxu0
      %v250 = vadd.f32 0.0, %v249
      %251 = vdwg.mxu0
      %252 = vmatpush.xpose.msra.mxu0 0.0
      %253 = vmatpush.xpose.msra.mxu0 0.0
      %254 = vmatpush.xpose.msra.mxu0 0.0
      %255 = vmatpush.xpose.msra.mxu0 0.0
      %256 = vmatpush.xpose.msra.mxu0 0.0
      %257 = vmatpush.xpose.msra.mxu0 0.0
      %258 = vmatpush.xpose.msra.mxu0 0.0
      %259 = vmatpush.xpose.msra.mxu0 0.0
      %260 = vmatpush.xpose.msra.mxu0 0.0
      %261 = vmatpush.xpose.msra.mxu0 0.0
      %262 = vmatpush.xpose.msra.mxu0 0.0
      %263 = vmatpush.xpose.msra.mxu0 0.0
      %264 = vmatpush.xpose.msra.mxu0 0.0
      %265 = vmatpush.xpose.msra.mxu0 0.0
      %266 = vmatpush.xpose.msra.mxu0 0.0
      %267 = vmatpush.xpose.msra.mxu0 %v229
      %268 = vmatmul.f32.gmra.mxu0 %v219
      %v269 = vpop.f32.mrf.mxu0
      %v270 = vadd.f32 %v250, %v269
      %271 = vdwg.mxu0
      %v272 = vrcp.pop %v225
      %v273 = vmul.f32 %v225, %v272
      %v274 = vsub.f32 1.0, %v273
      %v275 = vmul.f32 %v272, %v274
      %v276 = vadd.f32 %v272, %v275
      %vm277 = vweird.f32 %v225
      %vm278 = vweird.f32 %v272
      %vm279 = vmor %vm277, %vm278
      %v280 = vsel %vm279, %v272, %v276
      %v281 = vand.u32 2147483647, %v225
      %vm282 = vcmp.eq.f32.partialorder %v281, 8.507059e+37
      %v283 = vand.u32 %v225, 2147483648
      %v284 = vor.u32 1.1754944e-38, %v283
      %v285 = vsel %vm282, %v284, %v280
      %v286 = vmul.f32 %v270, %v285
      %v287 = vmul.f32 %v202, %v202
      %289 = vst [vmem:[#allocation1] ss:$4 sm:$0xff] %v287
      %v290 = vld.sshfl [vmem:[#allocation1] sm:$0xff pattern:$0x73625140]
      %v291 = vld.sshfl [vmem:[#allocation1 + $0x8] sm:$0xff pattern:$0x73625140]
      %vm294 = vcmask 1041408
      %v295 = vsel %vm294, %v290, 0.0
      %v296 = vrot.slane %v295, 4
      %v297 = vadd.f32 %v295, %v296
      %v298 = vrot.slane %v297, 2
      %v299 = vadd.f32 %v297, %v298
      %v300 = vrot.slane %v299, 1
      %v301 = vadd.f32 %v299, %v300
      %v302 = vsel %vm294, %v291, 0.0
      %v303 = vrot.slane %v302, 4
      %v304 = vadd.f32 %v302, %v303
      %v305 = vrot.slane %v304, 2
      %v306 = vadd.f32 %v304, %v305
      %v307 = vrot.slane %v306, 1
      %v308 = vadd.f32 %v306, %v307
      %v309 = vmul.f32 %v286, %v286
      %vm310 = vcmask 15360
      %v311 = vsel %vm310, %v309, 0.0
      %312 = vadd.xlane.f32.xlu0 %v311
      %v313 = vpop.xlane.xlu0 %312
      %314 = vst [vmem:[#allocation1] ss:$4 sm:$0xff] %v202
      %v315 = vld.sshfl [vmem:[#allocation1] sm:$0xff pattern:$0x73625140]
      %v316 = vld.sshfl [vmem:[#allocation1 + $0x8] sm:$0xff pattern:$0x73625140]
      %v318 = vsel %vm310, %v286, 0
      %v320 = vsel %vm294, %v315, 0
      %v322 = vsel %vm294, %v316, 0
      %324 = vmatpush.msra.mxu0 0.0
      %325 = vmatpush.msra.mxu0 0.0
      %326 = vmatpush.msra.mxu0 0.0
      %327 = vmatpush.msra.mxu0 0.0
      %328 = vmatpush.msra.mxu0 0.0
      %329 = vmatpush.msra.mxu0 0.0
      %330 = vmatpush.msra.mxu0 0.0
      %331 = vmatpush.msra.mxu0 0.0
      %332 = vmatpush.msra.mxu0 0.0
      %333 = vmatpush.msra.mxu0 0.0
      %334 = vmatpush.msra.mxu0 0.0
      %335 = vmatpush.msra.mxu0 0.0
      %336 = vmatpush.msra.mxu0 0.0
      %337 = vmatpush.msra.mxu0 0.0
      %338 = vmatpush.msra.mxu0 0.0
      %339 = vmatpush.msra.mxu0 %v320
      %340 = vmatmul.f32.gmra.mxu0 %v318
      %v341 = vpop.f32.mrf.mxu0
      %v342 = vadd.f32 0.0, %v341
      %343 = vdwg.mxu0
      %344 = vmatpush.msra.mxu0 0.0
      %345 = vmatpush.msra.mxu0 0.0
      %346 = vmatpush.msra.mxu0 0.0
      %347 = vmatpush.msra.mxu0 0.0
      %348 = vmatpush.msra.mxu0 0.0
      %349 = vmatpush.msra.mxu0 0.0
      %350 = vmatpush.msra.mxu0 0.0
      %351 = vmatpush.msra.mxu0 0.0
      %352 = vmatpush.msra.mxu0 0.0
      %353 = vmatpush.msra.mxu0 0.0
      %354 = vmatpush.msra.mxu0 0.0
      %355 = vmatpush.msra.mxu0 0.0
      %356 = vmatpush.msra.mxu0 0.0
      %357 = vmatpush.msra.mxu0 0.0
      %358 = vmatpush.msra.mxu0 0.0
      %359 = vmatpush.msra.mxu0 %v322
      %360 = vmatmul.f32.gmra.mxu0 %v318
      %v361 = vpop.f32.mrf.mxu0
      %v362 = vadd.f32 0.0, %v361
      %363 = vdwg.mxu0
      %v364 = vmul.f32 %v342, 2.0
      %v365 = vmul.f32 %v362, 2.0
      %v366 = vsub.f32 %v301, %v364
      %v367 = vsub.f32 %v308, %v365
      %v368 = vadd.f32 %v366, %v313
      %v369 = vadd.f32 %v367, %v313
      %v370 = vmax.f32 %v368, 0.0
      %v371 = vmax.f32 %v369, 0.0
      %v372 = vrsqrt.pop %v370
      %v373 = vmul.f32 %v372, %v370
      %v374 = vmul.f32 %v373, %v372
      %v375 = vmul.f32 0.5, %v374
      %v376 = vsub.f32 1.5, %v375
      %v377 = vmul.f32 %v372, %v376
      %v378 = vmul.f32 %v370, %v377
      %vm379 = vcmp.eq.f32.partialorder %v370, inf
      %v380 = vsel %vm379, %v370, %v378
      %vm381 = vcmp.eq.f32.partialorder %v370, 0.0
      %v382 = vand.u32 %v370, 2147483648
      %v383 = vsel %vm381, %v382, %v380
      %v384 = vrsqrt.pop %v371
      %v385 = vmul.f32 %v384, %v371
      %v386 = vmul.f32 %v385, %v384
      %v387 = vmul.f32 0.5, %v386
      %v388 = vsub.f32 1.5, %v387
      %v389 = vmul.f32 %v384, %v388
      %v390 = vmul.f32 %v371, %v389
      %vm391 = vcmp.eq.f32.partialorder %v371, inf
      %v392 = vsel %vm391, %v371, %v390
      %vm393 = vcmp.eq.f32.partialorder %v371, 0.0
      %v394 = vand.u32 %v371, 2147483648
      %v395 = vsel %vm393, %v394, %v392
      %v396 = vmul.f32 %v224, %v218
      %v397 = vmul.f32 %v224, %v219
      %v398 = vsub.f32 %v383, 1.0
      %v399 = vsub.f32 %v395, 1.0
      %v400 = vmax.f32 %v398, 0.0
      %v401 = vmax.f32 %v399, 0.0
      %v402 = vmul.f32 %v396, %v400
      %v403 = vmul.f32 %v397, %v401
      %v404 = vmul.f32 %v402, %v285
      %v405 = vmul.f32 %v403, %v285
      %v406 = vadd.f32 %v404, %v405
      %407 = vadd.xlane.f32.xlu0 %v406
      %v408 = vpop.xlane.xlu0 %407
      %v409 = vrot.slane %v408, 4
      %v410 = vadd.f32 %v408, %v409
      %v411 = vrot.slane %v410, 2
      %v412 = vadd.f32 %v410, %v411
      %v413 = vrot.slane %v412, 1
      %v414 = vadd.f32 %v412, %v413
      %415 = vmatpush.xpose.msra.mxu0 0.0
      %416 = vmatpush.xpose.msra.mxu0 0.0
      %417 = vmatpush.xpose.msra.mxu0 0.0
      %418 = vmatpush.xpose.msra.mxu0 0.0
      %419 = vmatpush.xpose.msra.mxu0 0.0
      %420 = vmatpush.xpose.msra.mxu0 0.0
      %421 = vmatpush.xpose.msra.mxu0 0.0
      %422 = vmatpush.xpose.msra.mxu0 0.0
      %423 = vmatpush.xpose.msra.mxu0 0.0
      %424 = vmatpush.xpose.msra.mxu0 0.0
      %425 = vmatpush.xpose.msra.mxu0 0.0
      %426 = vmatpush.xpose.msra.mxu0 0.0
      %427 = vmatpush.xpose.msra.mxu0 0.0
      %428 = vmatpush.xpose.msra.mxu0 0.0
      %429 = vmatpush.xpose.msra.mxu0 0.0
      %430 = vmatpush.xpose.msra.mxu0 %v318
      %431 = vmatmul.f32.gmra.mxu0 %v318
      %v432 = vpop.f32.mrf.mxu0
      %v433 = vadd.f32 0.0, %v432
      %434 = vdwg.mxu0
      %v435 = vlaneseq
      %v436 = vand.u32 %v435, 127
      %vm437 = vcmp.eq.s32.totalorder %v205, %v436
      %v438 = vsel %vm437, 1.0, 0.0
      %v439 = vmul.f32 %v433, %v438
      %vm440 = vcmask 64512
      %v441 = vsel %vm440, %v439, 0.0
      %v442 = vrot.slane %v441, 4
      %v443 = vadd.f32 %v441, %v442
      %v444 = vrot.slane %v443, 2
      %v445 = vadd.f32 %v443, %v444
      %v446 = vrot.slane %v445, 1
      %v447 = vadd.f32 %v445, %v446
      %v448 = vadd.f32 %v313, %v447
      %v449 = vmul.f32 %v433, 2.0
      %v450 = vsub.f32 %v448, %v449
      %v451 = vmax.f32 %v450, 0.0
      %v452 = vrsqrt.pop %v451
      %v453 = vmul.f32 %v452, %v451
      %v454 = vmul.f32 %v453, %v452
      %v455 = vmul.f32 0.5, %v454
      %v456 = vsub.f32 1.5, %v455
      %v457 = vmul.f32 %v452, %v456
      %v458 = vmul.f32 %v451, %v457
      %vm459 = vcmp.eq.f32.partialorder %v451, inf
      %v460 = vsel %vm459, %v451, %v458
      %vm461 = vcmp.eq.f32.partialorder %v451, 0.0
      %v462 = vand.u32 %v451, 2147483648
      %v463 = vsel %vm461, %v462, %v460
      %464 = vmatpush.xpose.msra.mxu0 0.0
      %465 = vmatpush.xpose.msra.mxu0 0.0
      %466 = vmatpush.xpose.msra.mxu0 0.0
      %467 = vmatpush.xpose.msra.mxu0 0.0
      %468 = vmatpush.xpose.msra.mxu0 0.0
      %469 = vmatpush.xpose.msra.mxu0 0.0
      %470 = vmatpush.xpose.msra.mxu0 0.0
      %471 = vmatpush.xpose.msra.mxu0 0.0
      %472 = vmatpush.xpose.msra.mxu0 0.0
      %473 = vmatpush.xpose.msra.mxu0 0.0
      %474 = vmatpush.xpose.msra.mxu0 0.0
      %475 = vmatpush.xpose.msra.mxu0 0.0
      %476 = vmatpush.xpose.msra.mxu0 0.0
      %477 = vmatpush.xpose.msra.mxu0 0.0
      %478 = vmatpush.xpose.msra.mxu0 0.0
      %479 = vmatpush.xpose.msra.mxu0 %v218
      %480 = vmatmul.f32.gmra.mxu0 1.0
      %v481 = vpop.f32.mrf.mxu0
      %v482 = vadd.f32 0.0, %v481
      %483 = vdwg.mxu0
      %484 = vmatpush.xpose.msra.mxu0 0.0
      %485 = vmatpush.xpose.msra.mxu0 0.0
      %486 = vmatpush.xpose.msra.mxu0 0.0
      %487 = vmatpush.xpose.msra.mxu0 0.0
      %488 = vmatpush.xpose.msra.mxu0 0.0
      %489 = vmatpush.xpose.msra.mxu0 0.0
      %490 = vmatpush.xpose.msra.mxu0 0.0
      %491 = vmatpush.xpose.msra.mxu0 0.0
      %492 = vmatpush.xpose.msra.mxu0 0.0
      %493 = vmatpush.xpose.msra.mxu0 0.0
      %494 = vmatpush.xpose.msra.mxu0 0.0
      %495 = vmatpush.xpose.msra.mxu0 0.0
      %496 = vmatpush.xpose.msra.mxu0 0.0
      %497 = vmatpush.xpose.msra.mxu0 0.0
      %498 = vmatpush.xpose.msra.mxu0 0.0
      %499 = vmatpush.xpose.msra.mxu0 %v219
      %500 = vmatmul.f32.gmra.mxu0 1.0
      %v501 = vpop.f32.mrf.mxu0
      %v502 = vadd.f32 %v482, %v501
      %503 = vdwg.mxu0
      %vm504 = vcmp.gt.f32.partialorder %v502, 0.0
      %v505 = vsel %vm504, 1.0, 0.0
      %v506 = vperm.slane %v505, 0
      %v507 = vmul.f32 %v224, %v506
      %v508 = vsub.f32 1.0, %v438
      %v509 = vmul.f32 %v507, %v508
      %v510 = vsub.f32 5.0, %v463
      %v511 = vmax.f32 %v510, 0.0
      %v512 = vmul.f32 %v509, %v511
      %v513 = vsel %vm440, %v512, 0.0
      %514 = vadd.xlane.f32.xlu0 %v513
      %v515 = vpop.xlane.xlu0 %514
      %v516 = vrot.slane %v515, 4
      %v517 = vadd.f32 %v515, %v516
      %v518 = vrot.slane %v517, 2
      %v519 = vadd.f32 %v517, %v518
      %v520 = vrot.slane %v519, 1
      %v521 = vadd.f32 %v519, %v520
      %v522 = vrot.slane %v224, 4
      %v523 = vadd.f32 %v224, %v522
      %v524 = vrot.slane %v523, 2
      %v525 = vadd.f32 %v523, %v524
      %v526 = vrot.slane %v525, 1
      %v527 = vadd.f32 %v525, %v526
      %v528 = vld [vmem:[%s2] sm:$0x1]
      %v529 = vadd.f32 %v528, %v414
      %530 = vst [vmem:[%s2] sm:$0x1] %v529
      %v531 = vld [vmem:[%s3] sm:$0x1]
      %v532 = vadd.f32 %v531, %v521
      %533 = vst [vmem:[%s3] sm:$0x1] %v532
      %v534 = vld [vmem:[%s4] sm:$0x1]
      %v535 = vadd.f32 %v534, %v527
      %536 = vst [vmem:[%s4] sm:$0x1] %v535
      // Predicated region
      $region33: #{fwd.8} parent=27 // pred_check
        %p537 = pneg %p81
      $region34: #{fwd.8} parent=27 // pred_check_branch
        %539 = sbr.rel (%p537) target = $region36
      $region35: #{fwd.8} parent=27 // pred_region
        _
      $region36: #{fwd.8} parent=27 // pred_fallthru
        _
      // Predicated region
      $region37: #{fwd.8} parent=27 // pred_check
        %p540 = pneg %p102
      $region38: #{fwd.8} parent=27 // pred_check_branch
        %542 = sbr.rel (%p540) target = $region40
      $region39: #{fwd.8} parent=27 // pred_region
        _
      $region40: #{fwd.8} parent=27 // pred_fallthru
        _
      // Predicated region
      $region41: #{fwd.8} parent=27 // pred_check
        %p543 = pneg %p123
      $region42: #{fwd.8} parent=27 // pred_check_branch
        %545 = sbr.rel (%p543) target = $region44
      $region43: #{fwd.8} parent=27 // pred_region
        _
      $region44: #{fwd.8} parent=27 // pred_fallthru
        _
      // Predicated region
      $region45: #{fwd.8} parent=27 // pred_check
        %p546 = pneg %p81
      $region46: #{fwd.8} parent=27 // pred_check_branch
        %548 = sbr.rel (%p546) target = $region48
      $region47: #{fwd.8} parent=27 // pred_region
        _
      $region48: #{fwd.8} parent=27 // pred_fallthru
        _
      // Predicated region
      $region49: #{fwd.8} parent=27 // pred_check
        %p549 = pneg %p102
      $region50: #{fwd.8} parent=27 // pred_check_branch
        %551 = sbr.rel (%p549) target = $region52
      $region51: #{fwd.8} parent=27 // pred_region
        _
      $region52: #{fwd.8} parent=27 // pred_fallthru
        _
      // Predicated region
      $region53: #{fwd.8} parent=27 // pred_check
        %p552 = pneg %p123
      $region54: #{fwd.8} parent=27 // pred_check_branch
        %554 = sbr.rel (%p552) target = $region56
      $region55: #{fwd.8} parent=27 // pred_region
        _
      $region56: #{fwd.8} parent=27 // pred_fallthru
        _
    $region28: #{fwd.8} parent=5 // pred_fallthru
      _
    %p555 = scmp.le.s32.totalorder 2, %s11
    // Predicated region
    $region57: #{fwd.8} parent=5 // pred_check
      %p556 = pneg %p555
    $region58: #{fwd.8} parent=5 // pred_check_branch
      %558 = sbr.rel (%p556) target = $region60
    $region59: #{fwd.8} parent=5 // pred_region
      %s559 = ssub.s32 %s11, 2
    $region60: #{fwd.8} parent=5 // pred_fallthru
      _
  $region6: #{fwd.8} parent=0 // loop_footer
    %s15 = sadd.s32 1, %s11
  $region7: #{fwd.8} parent=0 // loop_footer_branch
    %10 = sbr.rel target = $region3
  $region8: #{fwd.8} parent=0 // loop_exit
    _

// kernel: fwd.7
$region0: #{fwd.7}
  #allocation0 [shape = 'u32[]', space=smem, size = 0x4, offset = 0x4, fixed_abs, tag = 'smem constant byte address 0x4 - core index']
  #allocation1 [shape = 'u32[72,128]{1,0:T(1,128)}', space=vmem, size = 0x9000, scoped, tag = 'internal scratch']
  %s0 = inlined_call_operand.vmem [shape: f32[2,8,2,128], index: 0, kind: input, shape index: {}]
  %s1 = inlined_call_operand.vmem [shape: f32[2,2,128], index: 1, kind: input, shape index: {}]
  %s2 = inlined_call_operand.vmem [shape: f32[2,2,128], index: 2, kind: input, shape index: {}]
  %s3 = inlined_call_operand.vmem [shape: f32[2,2,128], index: 3, kind: input, shape index: {}]
  %s4 = inlined_call_operand.vmem [shape: f32[2,2,128], index: 4, kind: input, shape index: {}]
  %s5 = inlined_call_operand.vmem [shape: f32[2,1,128], index: 5, kind: output, shape index: {0}]
  %s6 = inlined_call_operand.vmem [shape: f32[2,1,128], index: 6, kind: output, shape index: {1}]
  %s7 = inlined_call_operand.vmem [shape: f32[2,1,128], index: 7, kind: output, shape index: {2}]
  %s8 = inlined_call_operand.vmem [shape: f32[2,1,128], index: 8, kind: output, shape index: {3}]
  %s9 = inlined_call_operand.vmem [shape: f32[2,1,128], index: 9, kind: output, shape index: {4}]
  %s10 = inlined_call_operand.vmem [shape: f32[2,1,128], index: 10, kind: output, shape index: {5}]
  %s11 = inlined_call_operand.vmem [shape: f32[2,1,128], index: 11, kind: output, shape index: {6}]
  %s12 = inlined_call_operand.vmem [shape: f32[2,1,128], index: 12, kind: output, shape index: {7}]
  %13 = xla_tuple %s5, %s6, %s7, %s8, %s9, %s10, %s11, %s12
  %s14 = sld [smem:[#allocation0]]
  $region113: #{fwd.7} parent=0
    _
  %s16 = ssub.s32 1, %s14
  %s17 = scalar_select 0, %s16, %s14
  loop: start=0, step=1, limit=4
  $region2: #{fwd.7} parent=0 // loop_pre_header
    _
  $region3: #{fwd.7} parent=0 // loop_header
    %s19 = sphi 0, %s23
    %p20 = scmp.ge.s32.totalorder %s19, 4
    %s26 = sphi 0, %s38
    %s27 = sphi 0, %s34
    %s28 = sphi 0, %s26
    %s29 = sphi 0, %s27
    %s30 = sphi 0, %s28
    %s31 = sphi 0, %s29
    %s43 = sphi 0, %s45
    %s46 = sphi 0, %s43
    %s47 = sphi 0, %s46
    %s63 = sphi 0, %s47
    %s71 = sphi 0, %s73
    %s74 = sphi 0, %s71
    %s75 = sphi 0, %s74
    %s91 = sphi 0, %s75
    %s99 = sphi 0, %s101
    %s102 = sphi 0, %s99
    %s103 = sphi 0, %s102
    %s119 = sphi 0, %s103
    %s127 = sphi 0, %s129
    %s130 = sphi 0, %s127
    %s131 = sphi 0, %s130
    %s147 = sphi 0, %s131
    %s155 = sphi 0, %s157
    %s158 = sphi 0, %s155
    %s159 = sphi 0, %s158
    %s175 = sphi 0, %s159
    %s181 = sphi 0, %s183
    %s184 = sphi 0, %s181
    %s185 = sphi 0, %s184
    %s201 = sphi 0, %s185
    %s207 = sphi 0, %s209
    %s210 = sphi 0, %s207
    %s211 = sphi 0, %s210
    %s227 = sphi 0, %s211
    %s233 = sphi 0, %s235
    %s236 = sphi 0, %s233
    %s237 = sphi 0, %s236
    %s253 = sphi 0, %s237
    %s259 = sphi 0, %s261
    %s262 = sphi 0, %s259
    %s263 = sphi 0, %s262
    %s279 = sphi 0, %s263
    %s285 = sphi 0, %s287
    %s288 = sphi 0, %s285
    %s289 = sphi 0, %s288
    %s305 = sphi 0, %s289
    %s311 = sphi 0, %s313
    %s314 = sphi 0, %s311
    %s315 = sphi 0, %s314
    %s331 = sphi 0, %s315
    %s337 = sphi 0, %s339
    %s340 = sphi 0, %s337
    %s341 = sphi 0, %s340
    %s357 = sphi 0, %s341
    %s363 = sphi 0, %s365
    %s366 = sphi 0, %s363
    %s367 = sphi 0, %s366
    %s383 = sphi 0, %s367
  $region4: #{fwd.7} parent=0 // loop_header_branch
    %22 = sbr.rel (%p20) target = $region8
  $region5: #{fwd.7} parent=0 // loop_body
    %s24 = ssub.s32 %s19, 1
    %s25 = ssub.s32 %s19, 2
    %s32 = sadd.s32 1, %s27
    %p33 = scmp.ge.s32.totalorder %s32, 1
    %s34 = scalar_select %p33, 0, %s32
    %s35 = sadd.s32 1, %s26
    %s36 = scalar_select %p33, %s35, %s26
    %p37 = scmp.ge.s32.totalorder %s36, 2
    %s38 = scalar_select %p37, 0, %s36
    %s39 = ssub.s32 %s26, %s38
    %s40 = ssub.s32 %s27, %s34
    %s41 = sor.u32 %s39, %s40
    %p42 = scmp.eq.s32.totalorder %s41, 0
    %s44 = sadd.s32 %s43, 1
    %s45 = scalar_select %p42, %s43, %s44
    %p48 = pneg %p42
    %p49 = scmp.eq.s32.totalorder %s19, 1
    %p50 = por %p48, %p49
    %p51 = scmp.ne.s32.totalorder %s43, %s46
    %p52 = scmp.eq.s32.totalorder %s19, 0
    %p53 = por %p51, %p52
    %p54 = scmp.ne.s32.totalorder %s43, %s46
    %p55 = scmp.eq.s32.totalorder %s24, 1
    %p56 = por %p54, %p55
    %p57 = scmp.ne.s32.totalorder %s46, %s47
    %p58 = scmp.eq.s32.totalorder %s24, 0
    %p59 = por %p57, %p58
    %p60 = scmp.ne.s32.totalorder %s46, %s47
    %p61 = scmp.eq.s32.totalorder %s25, 1
    %p62 = por %p60, %p61
    %p64 = scmp.ne.s32.totalorder %s47, %s63
    %p65 = scmp.eq.s32.totalorder %s25, 0
    %p66 = por %p64, %p65
    %s67 = ssub.s32 %s26, %s38
    %s68 = ssub.s32 %s27, %s34
    %s69 = sor.u32 %s67, %s68
    %p70 = scmp.eq.s32.totalorder %s69, 0
    %s72 = sadd.s32 %s71, 1
    %s73 = scalar_select %p70, %s71, %s72
    %p76 = pneg %p70
    %p77 = scmp.eq.s32.totalorder %s19, 1
    %p78 = por %p76, %p77
    %p79 = scmp.ne.s32.totalorder %s71, %s74
    %p80 = scmp.eq.s32.totalorder %s19, 0
    %p81 = por %p79, %p80
    %p82 = scmp.ne.s32.totalorder %s71, %s74
    %p83 = scmp.eq.s32.totalorder %s24, 1
    %p84 = por %p82, %p83
    %p85 = scmp.ne.s32.totalorder %s74, %s75
    %p86 = scmp.eq.s32.totalorder %s24, 0
    %p87 = por %p85, %p86
    %p88 = scmp.ne.s32.totalorder %s74, %s75
    %p89 = scmp.eq.s32.totalorder %s25, 1
    %p90 = por %p88, %p89
    %p92 = scmp.ne.s32.totalorder %s75, %s91
    %p93 = scmp.eq.s32.totalorder %s25, 0
    %p94 = por %p92, %p93
    %s95 = ssub.s32 %s26, %s38
    %s96 = ssub.s32 %s27, %s34
    %s97 = sor.u32 %s95, %s96
    %p98 = scmp.eq.s32.totalorder %s97, 0
    %s100 = sadd.s32 %s99, 1
    %s101 = scalar_select %p98, %s99, %s100
    %p104 = pneg %p98
    %p105 = scmp.eq.s32.totalorder %s19, 1
    %p106 = por %p104, %p105
    %p107 = scmp.ne.s32.totalorder %s99, %s102
    %p108 = scmp.eq.s32.totalorder %s19, 0
    %p109 = por %p107, %p108
    %p110 = scmp.ne.s32.totalorder %s99, %s102
    %p111 = scmp.eq.s32.totalorder %s24, 1
    %p112 = por %p110, %p111
    %p113 = scmp.ne.s32.totalorder %s102, %s103
    %p114 = scmp.eq.s32.totalorder %s24, 0
    %p115 = por %p113, %p114
    %p116 = scmp.ne.s32.totalorder %s102, %s103
    %p117 = scmp.eq.s32.totalorder %s25, 1
    %p118 = por %p116, %p117
    %p120 = scmp.ne.s32.totalorder %s103, %s119
    %p121 = scmp.eq.s32.totalorder %s25, 0
    %p122 = por %p120, %p121
    %s123 = ssub.s32 %s26, %s38
    %s124 = ssub.s32 %s27, %s34
    %s125 = sor.u32 %s123, %s124
    %p126 = scmp.eq.s32.totalorder %s125, 0
    %s128 = sadd.s32 %s127, 1
    %s129 = scalar_select %p126, %s127, %s128
    %p132 = pneg %p126
    %p133 = scmp.eq.s32.totalorder %s19, 1
    %p134 = por %p132, %p133
    %p135 = scmp.ne.s32.totalorder %s127, %s130
    %p136 = scmp.eq.s32.totalorder %s19, 0
    %p137 = por %p135, %p136
    %p138 = scmp.ne.s32.totalorder %s127, %s130
    %p139 = scmp.eq.s32.totalorder %s24, 1
    %p140 = por %p138, %p139
    %p141 = scmp.ne.s32.totalorder %s130, %s131
    %p142 = scmp.eq.s32.totalorder %s24, 0
    %p143 = por %p141, %p142
    %p144 = scmp.ne.s32.totalorder %s130, %s131
    %p145 = scmp.eq.s32.totalorder %s25, 1
    %p146 = por %p144, %p145
    %p148 = scmp.ne.s32.totalorder %s131, %s147
    %p149 = scmp.eq.s32.totalorder %s25, 0
    %p150 = por %p148, %p149
    %s151 = ssub.s32 %s26, %s38
    %s152 = ssub.s32 %s27, %s34
    %s153 = sor.u32 %s151, %s152
    %p154 = scmp.eq.s32.totalorder %s153, 0
    %s156 = sadd.s32 %s155, 1
    %s157 = scalar_select %p154, %s155, %s156
    %p160 = pneg %p154
    %p161 = scmp.eq.s32.totalorder %s19, 1
    %p162 = por %p160, %p161
    %p163 = scmp.ne.s32.totalorder %s155, %s158
    %p164 = scmp.eq.s32.totalorder %s19, 0
    %p165 = por %p163, %p164
    %p166 = scmp.ne.s32.totalorder %s155, %s158
    %p167 = scmp.eq.s32.totalorder %s24, 1
    %p168 = por %p166, %p167
    %p169 = scmp.ne.s32.totalorder %s158, %s159
    %p170 = scmp.eq.s32.totalorder %s24, 0
    %p171 = por %p169, %p170
    %p172 = scmp.ne.s32.totalorder %s158, %s159
    %p173 = scmp.eq.s32.totalorder %s25, 1
    %p174 = por %p172, %p173
    %p176 = scmp.ne.s32.totalorder %s159, %s175
    %p177 = scmp.eq.s32.totalorder %s25, 0
    %p178 = por %p176, %p177
    %s179 = ssub.s32 %s26, %s38
    %p180 = scmp.eq.s32.totalorder %s179, 0
    %s182 = sadd.s32 %s181, 1
    %s183 = scalar_select %p180, %s181, %s182
    %p186 = pneg %p180
    %p187 = scmp.eq.s32.totalorder %s19, 1
    %p188 = por %p186, %p187
    %p189 = scmp.ne.s32.totalorder %s181, %s184
    %p190 = scmp.eq.s32.totalorder %s19, 0
    %p191 = por %p189, %p190
    %p192 = scmp.ne.s32.totalorder %s181, %s184
    %p193 = scmp.eq.s32.totalorder %s24, 1
    %p194 = por %p192, %p193
    %p195 = scmp.ne.s32.totalorder %s184, %s185
    %p196 = scmp.eq.s32.totalorder %s24, 0
    %p197 = por %p195, %p196
    %p198 = scmp.ne.s32.totalorder %s184, %s185
    %p199 = scmp.eq.s32.totalorder %s25, 1
    %p200 = por %p198, %p199
    %p202 = scmp.ne.s32.totalorder %s185, %s201
    %p203 = scmp.eq.s32.totalorder %s25, 0
    %p204 = por %p202, %p203
    %s205 = ssub.s32 %s26, %s38
    %p206 = scmp.eq.s32.totalorder %s205, 0
    %s208 = sadd.s32 %s207, 1
    %s209 = scalar_select %p206, %s207, %s208
    %p212 = pneg %p206
    %p213 = scmp.eq.s32.totalorder %s19, 1
    %p214 = por %p212, %p213
    %p215 = scmp.ne.s32.totalorder %s207, %s210
    %p216 = scmp.eq.s32.totalorder %s19, 0
    %p217 = por %p215, %p216
    %p218 = scmp.ne.s32.totalorder %s207, %s210
    %p219 = scmp.eq.s32.totalorder %s24, 1
    %p220 = por %p218, %p219
    %p221 = scmp.ne.s32.totalorder %s210, %s211
    %p222 = scmp.eq.s32.totalorder %s24, 0
    %p223 = por %p221, %p222
    %p224 = scmp.ne.s32.totalorder %s210, %s211
    %p225 = scmp.eq.s32.totalorder %s25, 1
    %p226 = por %p224, %p225
    %p228 = scmp.ne.s32.totalorder %s211, %s227
    %p229 = scmp.eq.s32.totalorder %s25, 0
    %p230 = por %p228, %p229
    %s231 = ssub.s32 %s26, %s38
    %p232 = scmp.eq.s32.totalorder %s231, 0
    %s234 = sadd.s32 %s233, 1
    %s235 = scalar_select %p232, %s233, %s234
    %p238 = pneg %p232
    %p239 = scmp.eq.s32.totalorder %s19, 1
    %p240 = por %p238, %p239
    %p241 = scmp.ne.s32.totalorder %s233, %s236
    %p242 = scmp.eq.s32.totalorder %s19, 0
    %p243 = por %p241, %p242
    %p244 = scmp.ne.s32.totalorder %s233, %s236
    %p245 = scmp.eq.s32.totalorder %s24, 1
    %p246 = por %p244, %p245
    %p247 = scmp.ne.s32.totalorder %s236, %s237
    %p248 = scmp.eq.s32.totalorder %s24, 0
    %p249 = por %p247, %p248
    %p250 = scmp.ne.s32.totalorder %s236, %s237
    %p251 = scmp.eq.s32.totalorder %s25, 1
    %p252 = por %p250, %p251
    %p254 = scmp.ne.s32.totalorder %s237, %s253
    %p255 = scmp.eq.s32.totalorder %s25, 0
    %p256 = por %p254, %p255
    %s257 = ssub.s32 %s26, %s38
    %p258 = scmp.eq.s32.totalorder %s257, 0
    %s260 = sadd.s32 %s259, 1
    %s261 = scalar_select %p258, %s259, %s260
    %p264 = pneg %p258
    %p265 = scmp.eq.s32.totalorder %s19, 1
    %p266 = por %p264, %p265
    %p267 = scmp.ne.s32.totalorder %s259, %s262
    %p268 = scmp.eq.s32.totalorder %s19, 0
    %p269 = por %p267, %p268
    %p270 = scmp.ne.s32.totalorder %s259, %s262
    %p271 = scmp.eq.s32.totalorder %s24, 1
    %p272 = por %p270, %p271
    %p273 = scmp.ne.s32.totalorder %s262, %s263
    %p274 = scmp.eq.s32.totalorder %s24, 0
    %p275 = por %p273, %p274
    %p276 = scmp.ne.s32.totalorder %s262, %s263
    %p277 = scmp.eq.s32.totalorder %s25, 1
    %p278 = por %p276, %p277
    %p280 = scmp.ne.s32.totalorder %s263, %s279
    %p281 = scmp.eq.s32.totalorder %s25, 0
    %p282 = por %p280, %p281
    %s283 = ssub.s32 %s26, %s38
    %p284 = scmp.eq.s32.totalorder %s283, 0
    %s286 = sadd.s32 %s285, 1
    %s287 = scalar_select %p284, %s285, %s286
    %p290 = pneg %p284
    %p291 = scmp.eq.s32.totalorder %s19, 1
    %p292 = por %p290, %p291
    %p293 = scmp.ne.s32.totalorder %s285, %s288
    %p294 = scmp.eq.s32.totalorder %s19, 0
    %p295 = por %p293, %p294
    %p296 = scmp.ne.s32.totalorder %s285, %s288
    %p297 = scmp.eq.s32.totalorder %s24, 1
    %p298 = por %p296, %p297
    %p299 = scmp.ne.s32.totalorder %s288, %s289
    %p300 = scmp.eq.s32.totalorder %s24, 0
    %p301 = por %p299, %p300
    %p302 = scmp.ne.s32.totalorder %s288, %s289
    %p303 = scmp.eq.s32.totalorder %s25, 1
    %p304 = por %p302, %p303
    %p306 = scmp.ne.s32.totalorder %s289, %s305
    %p307 = scmp.eq.s32.totalorder %s25, 0
    %p308 = por %p306, %p307
    %s309 = ssub.s32 %s26, %s38
    %p310 = scmp.eq.s32.totalorder %s309, 0
    %s312 = sadd.s32 %s311, 1
    %s313 = scalar_select %p310, %s311, %s312
    %p316 = pneg %p310
    %p317 = scmp.eq.s32.totalorder %s19, 1
    %p318 = por %p316, %p317
    %p319 = scmp.ne.s32.totalorder %s311, %s314
    %p320 = scmp.eq.s32.totalorder %s19, 0
    %p321 = por %p319, %p320
    %p322 = scmp.ne.s32.totalorder %s311, %s314
    %p323 = scmp.eq.s32.totalorder %s24, 1
    %p324 = por %p322, %p323
    %p325 = scmp.ne.s32.totalorder %s314, %s315
    %p326 = scmp.eq.s32.totalorder %s24, 0
    %p327 = por %p325, %p326
    %p328 = scmp.ne.s32.totalorder %s314, %s315
    %p329 = scmp.eq.s32.totalorder %s25, 1
    %p330 = por %p328, %p329
    %p332 = scmp.ne.s32.totalorder %s315, %s331
    %p333 = scmp.eq.s32.totalorder %s25, 0
    %p334 = por %p332, %p333
    %s335 = ssub.s32 %s26, %s38
    %p336 = scmp.eq.s32.totalorder %s335, 0
    %s338 = sadd.s32 %s337, 1
    %s339 = scalar_select %p336, %s337, %s338
    %p342 = pneg %p336
    %p343 = scmp.eq.s32.totalorder %s19, 1
    %p344 = por %p342, %p343
    %p345 = scmp.ne.s32.totalorder %s337, %s340
    %p346 = scmp.eq.s32.totalorder %s19, 0
    %p347 = por %p345, %p346
    %p348 = scmp.ne.s32.totalorder %s337, %s340
    %p349 = scmp.eq.s32.totalorder %s24, 1
    %p350 = por %p348, %p349
    %p351 = scmp.ne.s32.totalorder %s340, %s341
    %p352 = scmp.eq.s32.totalorder %s24, 0
    %p353 = por %p351, %p352
    %p354 = scmp.ne.s32.totalorder %s340, %s341
    %p355 = scmp.eq.s32.totalorder %s25, 1
    %p356 = por %p354, %p355
    %p358 = scmp.ne.s32.totalorder %s341, %s357
    %p359 = scmp.eq.s32.totalorder %s25, 0
    %p360 = por %p358, %p359
    %s361 = ssub.s32 %s26, %s38
    %p362 = scmp.eq.s32.totalorder %s361, 0
    %s364 = sadd.s32 %s363, 1
    %s365 = scalar_select %p362, %s363, %s364
    %p368 = pneg %p362
    %p369 = scmp.eq.s32.totalorder %s19, 1
    %p370 = por %p368, %p369
    %p371 = scmp.ne.s32.totalorder %s363, %s366
    %p372 = scmp.eq.s32.totalorder %s19, 0
    %p373 = por %p371, %p372
    %p374 = scmp.ne.s32.totalorder %s363, %s366
    %p375 = scmp.eq.s32.totalorder %s24, 1
    %p376 = por %p374, %p375
    %p377 = scmp.ne.s32.totalorder %s366, %s367
    %p378 = scmp.eq.s32.totalorder %s24, 0
    %p379 = por %p377, %p378
    %p380 = scmp.ne.s32.totalorder %s366, %s367
    %p381 = scmp.eq.s32.totalorder %s25, 1
    %p382 = por %p380, %p381
    %p384 = scmp.ne.s32.totalorder %s367, %s383
    %p385 = scmp.eq.s32.totalorder %s25, 0
    %p386 = por %p384, %p385
    %p387 = scmp.le.s32.totalorder 1, %s19
    %p388 = scmp.lt.s32.totalorder %s19, 3
    %p389 = pnand %p387, %p388
    %p390 = pneg %p389
    // Predicated region
    $region9: #{fwd.7} parent=5 // pred_check
      _
    $region10: #{fwd.7} parent=5 // pred_check_branch
      %392 = sbr.rel (%p389) target = $region12
    $region11: #{fwd.7} parent=5 // pred_region
      %s393 = ssub.s32 %s19, 1
    $region12: #{fwd.7} parent=5 // pred_fallthru
      _
    %p394 = scmp.lt.s32.totalorder %s19, 2
    // Predicated region
    $region13: #{fwd.7} parent=5 // pred_check
      %p395 = pneg %p394
    $region14: #{fwd.7} parent=5 // pred_check_branch
      %397 = sbr.rel (%p395) target = $region16
    $region15: #{fwd.7} parent=5 // pred_region
      // Predicated region
      $region17: #{fwd.7} parent=15 // pred_check
        %p398 = pneg %p53
      $region18: #{fwd.7} parent=15 // pred_check_branch
        %400 = sbr.rel (%p398) target = $region20
      $region19: #{fwd.7} parent=15 // pred_region
        %p401 = scmp.lt.s32.totalorder %s26, 1
        %s402 = scalar_select %p401, %s26, 1
        %p403 = scmp.lt.s32.totalorder %s27, 0
        %s404 = scalar_select %p403, %s27, 0
        %s405 = smul.addr %s402, 8
        %s406 = sadd.s32 %s404, %s405
        %s407 = smul.addr %s406, 2
        %s408 = scalar_lea.vmem %s0, %s407
      $region20: #{fwd.7} parent=15 // pred_fallthru
        _
      // Predicated region
      $region21: #{fwd.7} parent=15 // pred_check
        %p409 = pneg %p81
      $region22: #{fwd.7} parent=15 // pred_check_branch
        %411 = sbr.rel (%p409) target = $region24
      $region23: #{fwd.7} parent=15 // pred_region
        %p412 = scmp.lt.s32.totalorder %s26, 1
        %s413 = scalar_select %p412, %s26, 1
        %p414 = scmp.lt.s32.totalorder %s27, 0
        %s415 = scalar_select %p414, %s27, 0
        %s416 = sadd.s32 %s415, %s413
        %s417 = smul.addr %s416, 2
        %s418 = scalar_lea.vmem %s1, %s417
      $region24: #{fwd.7} parent=15 // pred_fallthru
        _
      // Predicated region
      $region25: #{fwd.7} parent=15 // pred_check
        %p419 = pneg %p109
      $region26: #{fwd.7} parent=15 // pred_check_branch
        %421 = sbr.rel (%p419) target = $region28
      $region27: #{fwd.7} parent=15 // pred_region
        %p422 = scmp.lt.s32.totalorder %s26, 1
        %s423 = scalar_select %p422, %s26, 1
        %p424 = scmp.lt.s32.totalorder %s27, 0
        %s425 = scalar_select %p424, %s27, 0
        %s426 = sadd.s32 %s425, %s423
        %s427 = smul.addr %s426, 2
        %s428 = scalar_lea.vmem %s2, %s427
      $region28: #{fwd.7} parent=15 // pred_fallthru
        _
      // Predicated region
      $region29: #{fwd.7} parent=15 // pred_check
        %p429 = pneg %p137
      $region30: #{fwd.7} parent=15 // pred_check_branch
        %431 = sbr.rel (%p429) target = $region32
      $region31: #{fwd.7} parent=15 // pred_region
        %p432 = scmp.lt.s32.totalorder %s26, 1
        %s433 = scalar_select %p432, %s26, 1
        %p434 = scmp.lt.s32.totalorder %s27, 0
        %s435 = scalar_select %p434, %s27, 0
        %s436 = sadd.s32 %s435, %s433
        %s437 = smul.addr %s436, 2
        %s438 = scalar_lea.vmem %s3, %s437
      $region32: #{fwd.7} parent=15 // pred_fallthru
        _
      // Predicated region
      $region33: #{fwd.7} parent=15 // pred_check
        %p439 = pneg %p165
      $region34: #{fwd.7} parent=15 // pred_check_branch
        %441 = sbr.rel (%p439) target = $region36
      $region35: #{fwd.7} parent=15 // pred_region
        %p442 = scmp.lt.s32.totalorder %s26, 1
        %s443 = scalar_select %p442, %s26, 1
        %p444 = scmp.lt.s32.totalorder %s27, 0
        %s445 = scalar_select %p444, %s27, 0
        %s446 = sadd.s32 %s445, %s443
        %s447 = smul.addr %s446, 2
        %s448 = scalar_lea.vmem %s4, %s447
      $region36: #{fwd.7} parent=15 // pred_fallthru
        _
    $region16: #{fwd.7} parent=5 // pred_fallthru
      _
    %p449 = scmp.le.s32.totalorder 1, %s19
    %p450 = scmp.lt.s32.totalorder %s19, 3
    %p451 = pnand %p449, %p450
    %p452 = pneg %p451
    // Predicated region
    $region37: #{fwd.7} parent=5 // pred_check
      _
    $region38: #{fwd.7} parent=5 // pred_check_branch
      %454 = sbr.rel (%p451) target = $region40
    $region39: #{fwd.7} parent=5 // pred_region
      %s455 = ssub.s32 %s19, 1
      %p456 = scmp.lt.s32.totalorder %s28, 1
      %s457 = scalar_select %p456, %s28, 1
      %p458 = scmp.lt.s32.totalorder %s29, 0
      %s459 = scalar_select %p458, %s29, 0
      %s460 = smul.addr %s457, 8
      %s461 = sadd.s32 %s459, %s460
      %s462 = smul.addr %s461, 2
      %s463 = scalar_lea.vmem %s0, %s462
      %p464 = pneg %p59
      %p465 = pneg %p56
      %p466 = scmp.lt.s32.totalorder %s28, 1
      %s467 = scalar_select %p466, %s28, 1
      %p468 = scmp.lt.s32.totalorder %s29, 0
      %s469 = scalar_select %p468, %s29, 0
      %s470 = sadd.s32 %s469, %s467
      %s471 = smul.addr %s470, 2
      %s472 = scalar_lea.vmem %s1, %s471
      %p473 = pneg %p87
      %p474 = pneg %p84
      %p475 = scmp.lt.s32.totalorder %s28, 1
      %s476 = scalar_select %p475, %s28, 1
      %p477 = scmp.lt.s32.totalorder %s29, 0
      %s478 = scalar_select %p477, %s29, 0
      %s479 = sadd.s32 %s478, %s476
      %s480 = smul.addr %s479, 2
      %s481 = scalar_lea.vmem %s2, %s480
      %p482 = pneg %p115
      %p483 = pneg %p112
      %p484 = scmp.lt.s32.totalorder %s28, 1
      %s485 = scalar_select %p484, %s28, 1
      %p486 = scmp.lt.s32.totalorder %s29, 0
      %s487 = scalar_select %p486, %s29, 0
      %s488 = sadd.s32 %s487, %s485
      %s489 = smul.addr %s488, 2
      %s490 = scalar_lea.vmem %s3, %s489
      %p491 = pneg %p143
      %p492 = pneg %p140
      %p493 = scmp.lt.s32.totalorder %s28, 1
      %s494 = scalar_select %p493, %s28, 1
      %p495 = scmp.lt.s32.totalorder %s29, 0
      %s496 = scalar_select %p495, %s29, 0
      %s497 = sadd.s32 %s496, %s494
      %s498 = smul.addr %s497, 2
      %s499 = scalar_lea.vmem %s4, %s498
      %p500 = pneg %p171
      %p501 = pneg %p168
      %p502 = pneg %p197
      %p503 = pneg %p194
      %p504 = scmp.lt.s32.totalorder %s28, 1
      %s505 = scalar_select %p504, %s28, 1
      %s506 = scalar_lea.vmem %s5, %s505
      %p507 = pneg %p223
      %p508 = pneg %p220
      %p509 = scmp.lt.s32.totalorder %s28, 1
      %s510 = scalar_select %p509, %s28, 1
      %s511 = scalar_lea.vmem %s6, %s510
      %p512 = pneg %p249
      %p513 = pneg %p246
      %p514 = scmp.lt.s32.totalorder %s28, 1
      %s515 = scalar_select %p514, %s28, 1
      %s516 = scalar_lea.vmem %s7, %s515
      %p517 = pneg %p275
      %p518 = pneg %p272
      %p519 = scmp.lt.s32.totalorder %s28, 1
      %s520 = scalar_select %p519, %s28, 1
      %s521 = scalar_lea.vmem %s8, %s520
      %p522 = pneg %p301
      %p523 = pneg %p298
      %p524 = scmp.lt.s32.totalorder %s28, 1
      %s525 = scalar_select %p524, %s28, 1
      %s526 = scalar_lea.vmem %s9, %s525
      %p527 = pneg %p327
      %p528 = pneg %p324
      %p529 = scmp.lt.s32.totalorder %s28, 1
      %s530 = scalar_select %p529, %s28, 1
      %s531 = scalar_lea.vmem %s10, %s530
      %p532 = pneg %p353
      %p533 = pneg %p350
      %p534 = scmp.lt.s32.totalorder %s28, 1
      %s535 = scalar_select %p534, %s28, 1
      %s536 = scalar_lea.vmem %s11, %s535
      %p537 = pneg %p379
      %p538 = pneg %p376
      %p539 = scmp.lt.s32.totalorder %s28, 1
      %s540 = scalar_select %p539, %s28, 1
      %s541 = scalar_lea.vmem %s12, %s540
      %p542 = scmp.lt.s32.totalorder %s28, 1
      %s543 = scalar_select %p542, %s28, 1
      %p544 = scmp.lt.s32.totalorder %s29, 0
      %s545 = scalar_select %p544, %s29, 0
      %s546 = smul.addr %s543, 8
      %s547 = sadd.s32 %s545, %s546
      %s548 = smul.addr %s547, 2
      %s549 = scalar_lea.vmem %s0, %s548
      %p550 = scmp.lt.s32.totalorder %s28, 1
      %s551 = scalar_select %p550, %s28, 1
      %p552 = scmp.lt.s32.totalorder %s29, 0
      %s553 = scalar_select %p552, %s29, 0
      %s554 = sadd.s32 %s553, %s551
      %s555 = smul.addr %s554, 2
      %s556 = scalar_lea.vmem %s1, %s555
      %p557 = scmp.lt.s32.totalorder %s28, 1
      %s558 = scalar_select %p557, %s28, 1
      %p559 = scmp.lt.s32.totalorder %s29, 0
      %s560 = scalar_select %p559, %s29, 0
      %s561 = sadd.s32 %s560, %s558
      %s562 = smul.addr %s561, 2
      %s563 = scalar_lea.vmem %s2, %s562
      %p564 = scmp.lt.s32.totalorder %s28, 1
      %s565 = scalar_select %p564, %s28, 1
      %p566 = scmp.lt.s32.totalorder %s29, 0
      %s567 = scalar_select %p566, %s29, 0
      %s568 = sadd.s32 %s567, %s565
      %s569 = smul.addr %s568, 2
      %s570 = scalar_lea.vmem %s3, %s569
      %p571 = scmp.lt.s32.totalorder %s28, 1
      %s572 = scalar_select %p571, %s28, 1
      %p573 = scmp.lt.s32.totalorder %s29, 0
      %s574 = scalar_select %p573, %s29, 0
      %s575 = sadd.s32 %s574, %s572
      %s576 = smul.addr %s575, 2
      %s577 = scalar_lea.vmem %s4, %s576
      %p578 = scmp.lt.s32.totalorder %s28, 1
      %s579 = scalar_select %p578, %s28, 1
      %s580 = scalar_lea.vmem %s5, %s579
      %p581 = scmp.lt.s32.totalorder %s28, 1
      %s582 = scalar_select %p581, %s28, 1
      %s583 = scalar_lea.vmem %s6, %s582
      %p584 = scmp.lt.s32.totalorder %s28, 1
      %s585 = scalar_select %p584, %s28, 1
      %s586 = scalar_lea.vmem %s7, %s585
      %p587 = scmp.lt.s32.totalorder %s28, 1
      %s588 = scalar_select %p587, %s28, 1
      %s589 = scalar_lea.vmem %s8, %s588
      %p590 = scmp.lt.s32.totalorder %s28, 1
      %s591 = scalar_select %p590, %s28, 1
      %s592 = scalar_lea.vmem %s9, %s591
      %p593 = scmp.lt.s32.totalorder %s28, 1
      %s594 = scalar_select %p593, %s28, 1
      %s595 = scalar_lea.vmem %s10, %s594
      %p596 = scmp.lt.s32.totalorder %s28, 1
      %s597 = scalar_select %p596, %s28, 1
      %s598 = scalar_lea.vmem %s11, %s597
      %p599 = scmp.lt.s32.totalorder %s28, 1
      %s600 = scalar_select %p599, %s28, 1
      %s601 = scalar_lea.vmem %s12, %s600
      %p602 = scmp.eq.s32.totalorder %s29, 0
      // Predicated region
      $region41: #{fwd.7} parent=39 // pred_check
        %p603 = pneg %p602
      $region42: #{fwd.7} parent=39 // pred_check_branch
        %605 = sbr.rel (%p603) target = $region44
      $region43: #{fwd.7} parent=39 // pred_region
        %606 = vst [vmem:[%s580] sm:$0x1] 0.0
        %607 = vst [vmem:[%s583] sm:$0x1] 0.0
        %608 = vst [vmem:[%s586] sm:$0x1] 0.0
        %609 = vst [vmem:[%s589] sm:$0x1] 0.0
        %610 = vst [vmem:[%s592] sm:$0x1] 0.0
        %611 = vst [vmem:[%s595] sm:$0x1] 0.0
        %612 = vst [vmem:[%s598] sm:$0x1] 0.0
        %613 = vst [vmem:[%s601] sm:$0x1] 0.0
      $region44: #{fwd.7} parent=39 // pred_fallthru
        _
      %v614 = vld [vmem:[%s556] sm:$0x3]
      %v615 = vld [vmem:[%s549] sm:$0x3]
      %v616 = vsub.f32 0.0, %v615
      %v617 = vmax.f32 %v616, 0.0
      %v618 = vand.u32 2147483647, %v615
      %v619 = vsub.f32 0.0, %v618
      %v620 = vmul.f32 %v619, 1.442695
      %v621 = vpow.pop %v620
      %v622 = vadd.f32 %v621, 1.0
      %v623 = vlog2.pop %v622
      %v624 = vmul.f32 %v623, 0.6931472
      %v625 = vadd.f32 %v617, %v624
      %v626 = vadd.f32 %v625, %v615
      %v627 = vsub.f32 0.0, %v625
      %v628 = vmul.f32 %v627, 1.442695
      %v629 = vpow.pop %v628
      %v630 = vld [vmem:[%s580] sm:$0x1]
      %v631 = vmul.f32 %v614, 10.0
      %v632 = vmul.f32 %v631, %v625
      %v633 = vsub.f32 1.0, %v614
      %v634 = vmul.f32 %v633, %v626
      %v635 = vadd.f32 %v632, %v634
      %vm636 = vcmask 1041408
      %v637 = vsel %vm636, %v635, 0.0
      %v638 = vrot.slane %v637, 4
      %v639 = vadd.f32 %v637, %v638
      %v640 = vrot.slane %v639, 2
      %v641 = vadd.f32 %v639, %v640
      %v642 = vrot.slane %v641, 1
      %v643 = vadd.f32 %v641, %v642
      %v644 = vadd.f32 %v630, %v643
      %645 = vst [vmem:[%s580] sm:$0x1] %v644
      %v646 = vld [vmem:[%s583] sm:$0x1]
      %v647 = vmul.f32 %v629, %v614
      %v648 = vsel %vm636, %v647, 0.0
      %v649 = vrot.slane %v648, 4
      %v650 = vadd.f32 %v648, %v649
      %v651 = vrot.slane %v650, 2
      %v652 = vadd.f32 %v650, %v651
      %v653 = vrot.slane %v652, 1
      %v654 = vadd.f32 %v652, %v653
      %v655 = vadd.f32 %v646, %v654
      %656 = vst [vmem:[%s583] sm:$0x1] %v655
      %v657 = vld [vmem:[%s586] sm:$0x1]
      %v658 = vadd.f32 %v629, %v614
      %v659 = vsel %vm636, %v658, 0.0
      %v660 = vrot.slane %v659, 4
      %v661 = vadd.f32 %v659, %v660
      %v662 = vrot.slane %v661, 2
      %v663 = vadd.f32 %v661, %v662
      %v664 = vrot.slane %v663, 1
      %v665 = vadd.f32 %v663, %v664
      %v666 = vadd.f32 %v657, %v665
      %667 = vst [vmem:[%s586] sm:$0x1] %v666
      %s668 = scalar_lea.vmem %s549, 6
      %v669 = vld [vmem:[%s668] sm:$0x3]
      %v670 = vsub.f32 0.0, %v669
      %v671 = vmax.f32 %v670, 0.0
      %v672 = vand.u32 2147483647, %v669
      %v673 = vsub.f32 0.0, %v672
      %v674 = vmul.f32 %v673, 1.442695
      %v675 = vpow.pop %v674
      %v676 = vadd.f32 %v675, 1.0
      %v677 = vlog2.pop %v676
      %v678 = vmul.f32 %v677, 0.6931472
      %v679 = vadd.f32 %v671, %v678
      %v680 = vadd.f32 %v679, %v669
      %v681 = vld [vmem:[%s563] sm:$0x3]
      %vm682 = vcmp.gt.f32.partialorder %v614, 0.5
      %v683 = vmin.f32 %v679, 100.0
      %v684 = vsel %vm682, %v683, 100.0
      %v685 = vmin.f32 %v680, 100.0
      %v686 = vsel %vm682, %v685, 0.0
      %v687 = vld [vmem:[%s589] sm:$0x1]
      %v688 = vmul.f32 %v681, %v684
      %v689 = vsub.f32 1.0, %v681
      %v690 = vmul.f32 %v689, %v686
      %v691 = vadd.f32 %v688, %v690
      %v692 = vsel %vm636, %v691, 0.0
      %v693 = vrot.slane %v692, 4
      %v694 = vadd.f32 %v692, %v693
      %v695 = vrot.slane %v694, 2
      %v696 = vadd.f32 %v694, %v695
      %v697 = vrot.slane %v696, 1
      %v698 = vadd.f32 %v696, %v697
      %v699 = vadd.f32 %v687, %v698
      %700 = vst [vmem:[%s589] sm:$0x1] %v699
      %s701 = scalar_lea.vmem %s549, 8
      %v702 = vld [vmem:[%s701] sm:$0x3]
      %v703 = vmul.f32 %v614, %v702
      %v704 = vld [vmem:[%s570] sm:$0x3]
      %v705 = vsub.f32 %v703, %v704
      %v706 = vld [vmem:[%s592] sm:$0x1]
      %v707 = vmul.f32 %v705, %v705
      %v708 = vsel %vm636, %v707, 0.0
      %v709 = vrot.slane %v708, 4
      %v710 = vadd.f32 %v708, %v709
      %v711 = vrot.slane %v710, 2
      %v712 = vadd.f32 %v710, %v711
      %v713 = vrot.slane %v712, 1
      %v714 = vadd.f32 %v712, %v713
      %v715 = vadd.f32 %v706, %v714
      %716 = vst [vmem:[%s592] sm:$0x1] %v715
      %s717 = scalar_lea.vmem %s549, 10
      %v718 = vld [vmem:[%s717] sm:$0x3]
      %v719 = vld [vmem:[%s577] sm:$0x3]
      %v720 = vsub.f32 0.0, %v718
      %v721 = vmax.f32 %v720, 0.0
      %v722 = vand.u32 2147483647, %v718
      %v723 = vsub.f32 0.0, %v722
      %v724 = vmul.f32 %v723, 1.442695
      %v725 = vpow.pop %v724
      %v726 = vadd.f32 %v725, 1.0
      %v727 = vlog2.pop %v726
      %v728 = vmul.f32 %v727, 0.6931472
      %v729 = vadd.f32 %v721, %v728
      %v730 = vadd.f32 %v729, %v718
      %v731 = vsub.f32 0.0, %v729
      %v732 = vmul.f32 %v731, 1.442695
      %v733 = vpow.pop %v732
      %v734 = vld [vmem:[%s595] sm:$0x1]
      %v735 = vmul.f32 %v719, 10.0
      %v736 = vmul.f32 %v735, %v729
      %v737 = vsub.f32 1.0, %v719
      %v738 = vmul.f32 %v737, %v730
      %v739 = vadd.f32 %v736, %v738
      %v740 = vsel %vm636, %v739, 0.0
      %v741 = vrot.slane %v740, 4
      %v742 = vadd.f32 %v740, %v741
      %v743 = vrot.slane %v742, 2
      %v744 = vadd.f32 %v742, %v743
      %v745 = vrot.slane %v744, 1
      %v746 = vadd.f32 %v744, %v745
      %v747 = vadd.f32 %v734, %v746
      %748 = vst [vmem:[%s595] sm:$0x1] %v747
      %v749 = vld [vmem:[%s598] sm:$0x1]
      %v750 = vmul.f32 %v733, %v719
      %v751 = vsel %vm636, %v750, 0.0
      %v752 = vrot.slane %v751, 4
      %v753 = vadd.f32 %v751, %v752
      %v754 = vrot.slane %v753, 2
      %v755 = vadd.f32 %v753, %v754
      %v756 = vrot.slane %v755, 1
      %v757 = vadd.f32 %v755, %v756
      %v758 = vadd.f32 %v749, %v757
      %759 = vst [vmem:[%s598] sm:$0x1] %v758
      %v760 = vld [vmem:[%s601] sm:$0x1]
      %v761 = vadd.f32 %v733, %v719
      %v762 = vsel %vm636, %v761, 0.0
      %v763 = vrot.slane %v762, 4
      %v764 = vadd.f32 %v762, %v763
      %v765 = vrot.slane %v764, 2
      %v766 = vadd.f32 %v764, %v765
      %v767 = vrot.slane %v766, 1
      %v768 = vadd.f32 %v766, %v767
      %v769 = vadd.f32 %v760, %v768
      %770 = vst [vmem:[%s601] sm:$0x1] %v769
      %p771 = scmp.lt.s32.totalorder %s28, 1
      %s772 = scalar_select %p771, %s28, 1
      %s773 = scalar_lea.vmem %s5, %s772
      %p774 = scmp.lt.s32.totalorder %s28, 1
      %s775 = scalar_select %p774, %s28, 1
      %s776 = scalar_lea.vmem %s6, %s775
      %p777 = scmp.lt.s32.totalorder %s28, 1
      %s778 = scalar_select %p777, %s28, 1
      %s779 = scalar_lea.vmem %s7, %s778
      %p780 = scmp.lt.s32.totalorder %s28, 1
      %s781 = scalar_select %p780, %s28, 1
      %s782 = scalar_lea.vmem %s8, %s781
      %p783 = scmp.lt.s32.totalorder %s28, 1
      %s784 = scalar_select %p783, %s28, 1
      %s785 = scalar_lea.vmem %s9, %s784
      %p786 = scmp.lt.s32.totalorder %s28, 1
      %s787 = scalar_select %p786, %s28, 1
      %s788 = scalar_lea.vmem %s10, %s787
      %p789 = scmp.lt.s32.totalorder %s28, 1
      %s790 = scalar_select %p789, %s28, 1
      %s791 = scalar_lea.vmem %s11, %s790
      %p792 = scmp.lt.s32.totalorder %s28, 1
      %s793 = scalar_select %p792, %s28, 1
      %s794 = scalar_lea.vmem %s12, %s793
      // Predicated region
      $region45: #{fwd.7} parent=39 // pred_check
        %p795 = pneg %p194
      $region46: #{fwd.7} parent=39 // pred_check_branch
        %797 = sbr.rel (%p795) target = $region48
      $region47: #{fwd.7} parent=39 // pred_region
        _
      $region48: #{fwd.7} parent=39 // pred_fallthru
        _
      // Predicated region
      $region49: #{fwd.7} parent=39 // pred_check
        %p798 = pneg %p220
      $region50: #{fwd.7} parent=39 // pred_check_branch
        %800 = sbr.rel (%p798) target = $region52
      $region51: #{fwd.7} parent=39 // pred_region
        _
      $region52: #{fwd.7} parent=39 // pred_fallthru
        _
      // Predicated region
      $region53: #{fwd.7} parent=39 // pred_check
        %p801 = pneg %p246
      $region54: #{fwd.7} parent=39 // pred_check_branch
        %803 = sbr.rel (%p801) target = $region56
      $region55: #{fwd.7} parent=39 // pred_region
        _
      $region56: #{fwd.7} parent=39 // pred_fallthru
        _
      // Predicated region
      $region57: #{fwd.7} parent=39 // pred_check
        %p804 = pneg %p272
      $region58: #{fwd.7} parent=39 // pred_check_branch
        %806 = sbr.rel (%p804) target = $region60
      $region59: #{fwd.7} parent=39 // pred_region
        _
      $region60: #{fwd.7} parent=39 // pred_fallthru
        _
      // Predicated region
      $region61: #{fwd.7} parent=39 // pred_check
        %p807 = pneg %p298
      $region62: #{fwd.7} parent=39 // pred_check_branch
        %809 = sbr.rel (%p807) target = $region64
      $region63: #{fwd.7} parent=39 // pred_region
        _
      $region64: #{fwd.7} parent=39 // pred_fallthru
        _
      // Predicated region
      $region65: #{fwd.7} parent=39 // pred_check
        %p810 = pneg %p324
      $region66: #{fwd.7} parent=39 // pred_check_branch
        %812 = sbr.rel (%p810) target = $region68
      $region67: #{fwd.7} parent=39 // pred_region
        _
      $region68: #{fwd.7} parent=39 // pred_fallthru
        _
      // Predicated region
      $region69: #{fwd.7} parent=39 // pred_check
        %p813 = pneg %p350
      $region70: #{fwd.7} parent=39 // pred_check_branch
        %815 = sbr.rel (%p813) target = $region72
      $region71: #{fwd.7} parent=39 // pred_region
        _
      $region72: #{fwd.7} parent=39 // pred_fallthru
        _
      // Predicated region
      $region73: #{fwd.7} parent=39 // pred_check
        %p816 = pneg %p376
      $region74: #{fwd.7} parent=39 // pred_check_branch
        %818 = sbr.rel (%p816) target = $region76
      $region75: #{fwd.7} parent=39 // pred_region
        _
      $region76: #{fwd.7} parent=39 // pred_fallthru
        _
    $region40: #{fwd.7} parent=5 // pred_fallthru
      _
    %p819 = scmp.le.s32.totalorder 2, %s19
    // Predicated region
    $region77: #{fwd.7} parent=5 // pred_check
      %p820 = pneg %p819
    $region78: #{fwd.7} parent=5 // pred_check_branch
      %822 = sbr.rel (%p820) target = $region80
    $region79: #{fwd.7} parent=5 // pred_region
      %s823 = ssub.s32 %s19, 2
      // Predicated region
      $region81: #{fwd.7} parent=79 // pred_check
        %p824 = pneg %p200
      $region82: #{fwd.7} parent=79 // pred_check_branch
        %826 = sbr.rel (%p824) target = $region84
      $region83: #{fwd.7} parent=79 // pred_region
        %p827 = scmp.lt.s32.totalorder %s30, 1
        %s828 = scalar_select %p827, %s30, 1
        %s829 = scalar_lea.vmem %s5, %s828
      $region84: #{fwd.7} parent=79 // pred_fallthru
        _
      // Predicated region
      $region85: #{fwd.7} parent=79 // pred_check
        %p830 = pneg %p226
      $region86: #{fwd.7} parent=79 // pred_check_branch
        %832 = sbr.rel (%p830) target = $region88
      $region87: #{fwd.7} parent=79 // pred_region
        %p833 = scmp.lt.s32.totalorder %s30, 1
        %s834 = scalar_select %p833, %s30, 1
        %s835 = scalar_lea.vmem %s6, %s834
      $region88: #{fwd.7} parent=79 // pred_fallthru
        _
      // Predicated region
      $region89: #{fwd.7} parent=79 // pred_check
        %p836 = pneg %p252
      $region90: #{fwd.7} parent=79 // pred_check_branch
        %838 = sbr.rel (%p836) target = $region92
      $region91: #{fwd.7} parent=79 // pred_region
        %p839 = scmp.lt.s32.totalorder %s30, 1
        %s840 = scalar_select %p839, %s30, 1
        %s841 = scalar_lea.vmem %s7, %s840
      $region92: #{fwd.7} parent=79 // pred_fallthru
        _
      // Predicated region
      $region93: #{fwd.7} parent=79 // pred_check
        %p842 = pneg %p278
      $region94: #{fwd.7} parent=79 // pred_check_branch
        %844 = sbr.rel (%p842) target = $region96
      $region95: #{fwd.7} parent=79 // pred_region
        %p845 = scmp.lt.s32.totalorder %s30, 1
        %s846 = scalar_select %p845, %s30, 1
        %s847 = scalar_lea.vmem %s8, %s846
      $region96: #{fwd.7} parent=79 // pred_fallthru
        _
      // Predicated region
      $region97: #{fwd.7} parent=79 // pred_check
        %p848 = pneg %p304
      $region98: #{fwd.7} parent=79 // pred_check_branch
        %850 = sbr.rel (%p848) target = $region100
      $region99: #{fwd.7} parent=79 // pred_region
        %p851 = scmp.lt.s32.totalorder %s30, 1
        %s852 = scalar_select %p851, %s30, 1
        %s853 = scalar_lea.vmem %s9, %s852
      $region100: #{fwd.7} parent=79 // pred_fallthru
        _
      // Predicated region
      $region101: #{fwd.7} parent=79 // pred_check
        %p854 = pneg %p330
      $region102: #{fwd.7} parent=79 // pred_check_branch
        %856 = sbr.rel (%p854) target = $region104
      $region103: #{fwd.7} parent=79 // pred_region
        %p857 = scmp.lt.s32.totalorder %s30, 1
        %s858 = scalar_select %p857, %s30, 1
        %s859 = scalar_lea.vmem %s10, %s858
      $region104: #{fwd.7} parent=79 // pred_fallthru
        _
      // Predicated region
      $region105: #{fwd.7} parent=79 // pred_check
        %p860 = pneg %p356
      $region106: #{fwd.7} parent=79 // pred_check_branch
        %862 = sbr.rel (%p860) target = $region108
      $region107: #{fwd.7} parent=79 // pred_region
        %p863 = scmp.lt.s32.totalorder %s30, 1
        %s864 = scalar_select %p863, %s30, 1
        %s865 = scalar_lea.vmem %s11, %s864
      $region108: #{fwd.7} parent=79 // pred_fallthru
        _
      // Predicated region
      $region109: #{fwd.7} parent=79 // pred_check
        %p866 = pneg %p382
      $region110: #{fwd.7} parent=79 // pred_check_branch
        %868 = sbr.rel (%p866) target = $region112
      $region111: #{fwd.7} parent=79 // pred_region
        %p869 = scmp.lt.s32.totalorder %s30, 1
        %s870 = scalar_select %p869, %s30, 1
        %s871 = scalar_lea.vmem %s12, %s870
      $region112: #{fwd.7} parent=79 // pred_fallthru
        _
    $region80: #{fwd.7} parent=5 // pred_fallthru
      _
  $region6: #{fwd.7} parent=0 // loop_footer
    %s23 = sadd.s32 1, %s19
  $region7: #{fwd.7} parent=0 // loop_footer_branch
    %18 = sbr.rel target = $region3
  $region8: #{fwd.7} parent=0 // loop_exit
    _

// kernel: fwd.10
$region0: #{fwd.10}
  #allocation0 [shape = 'u32[]', space=smem, size = 0x4, offset = 0x4, fixed_abs, tag = 'smem constant byte address 0x4 - core index']
  #allocation1 [shape = 'u32[72,128]{1,0:T(1,128)}', space=vmem, size = 0x9000, scoped, tag = 'internal scratch']
  %s0 = inlined_call_operand.vmem [shape: f32[2,2,128], index: 0, kind: input, shape index: {}]
  %s1 = inlined_call_operand.vmem [shape: f32[2,2,128], index: 1, kind: input, shape index: {}]
  %s2 = inlined_call_operand.vmem [shape: f32[2,1,128], index: 2, kind: output, shape index: {0}]
  %s3 = inlined_call_operand.vmem [shape: f32[2,1,128], index: 3, kind: output, shape index: {1}]
  %s4 = inlined_call_operand.vmem [shape: f32[2,1,128], index: 4, kind: output, shape index: {2}]
  %5 = xla_tuple %s2, %s3, %s4
  %s6 = sld [smem:[#allocation0]]
  $region61: #{fwd.10} parent=0
    _
  %s8 = ssub.s32 1, %s6
  %s9 = scalar_select 0, %s8, %s6
  loop: start=0, step=1, limit=4
  $region2: #{fwd.10} parent=0 // loop_pre_header
    _
  $region3: #{fwd.10} parent=0 // loop_header
    %s11 = sphi 0, %s15
    %p12 = scmp.ge.s32.totalorder %s11, 4
    %s18 = sphi 0, %s30
    %s19 = sphi 0, %s26
    %s20 = sphi 0, %s18
    %s21 = sphi 0, %s19
    %s22 = sphi 0, %s20
    %s23 = sphi 0, %s21
    %s35 = sphi 0, %s37
    %s38 = sphi 0, %s35
    %s39 = sphi 0, %s38
    %s55 = sphi 0, %s39
    %s63 = sphi 0, %s65
    %s66 = sphi 0, %s63
    %s67 = sphi 0, %s66
    %s83 = sphi 0, %s67
    %s89 = sphi 0, %s91
    %s92 = sphi 0, %s89
    %s93 = sphi 0, %s92
    %s109 = sphi 0, %s93
    %s115 = sphi 0, %s117
    %s118 = sphi 0, %s115
    %s119 = sphi 0, %s118
    %s135 = sphi 0, %s119
    %s141 = sphi 0, %s143
    %s144 = sphi 0, %s141
    %s145 = sphi 0, %s144
    %s161 = sphi 0, %s145
  $region4: #{fwd.10} parent=0 // loop_header_branch
    %14 = sbr.rel (%p12) target = $region8
  $region5: #{fwd.10} parent=0 // loop_body
    %s16 = ssub.s32 %s11, 1
    %s17 = ssub.s32 %s11, 2
    %s24 = sadd.s32 1, %s19
    %p25 = scmp.ge.s32.totalorder %s24, 1
    %s26 = scalar_select %p25, 0, %s24
    %s27 = sadd.s32 1, %s18
    %s28 = scalar_select %p25, %s27, %s18
    %p29 = scmp.ge.s32.totalorder %s28, 2
    %s30 = scalar_select %p29, 0, %s28
    %s31 = ssub.s32 %s18, %s30
    %s32 = ssub.s32 %s19, %s26
    %s33 = sor.u32 %s31, %s32
    %p34 = scmp.eq.s32.totalorder %s33, 0
    %s36 = sadd.s32 %s35, 1
    %s37 = scalar_select %p34, %s35, %s36
    %p40 = pneg %p34
    %p41 = scmp.eq.s32.totalorder %s11, 1
    %p42 = por %p40, %p41
    %p43 = scmp.ne.s32.totalorder %s35, %s38
    %p44 = scmp.eq.s32.totalorder %s11, 0
    %p45 = por %p43, %p44
    %p46 = scmp.ne.s32.totalorder %s35, %s38
    %p47 = scmp.eq.s32.totalorder %s16, 1
    %p48 = por %p46, %p47
    %p49 = scmp.ne.s32.totalorder %s38, %s39
    %p50 = scmp.eq.s32.totalorder %s16, 0
    %p51 = por %p49, %p50
    %p52 = scmp.ne.s32.totalorder %s38, %s39
    %p53 = scmp.eq.s32.totalorder %s17, 1
    %p54 = por %p52, %p53
    %p56 = scmp.ne.s32.totalorder %s39, %s55
    %p57 = scmp.eq.s32.totalorder %s17, 0
    %p58 = por %p56, %p57
    %s59 = ssub.s32 %s18, %s30
    %s60 = ssub.s32 %s19, %s26
    %s61 = sor.u32 %s59, %s60
    %p62 = scmp.eq.s32.totalorder %s61, 0
    %s64 = sadd.s32 %s63, 1
    %s65 = scalar_select %p62, %s63, %s64
    %p68 = pneg %p62
    %p69 = scmp.eq.s32.totalorder %s11, 1
    %p70 = por %p68, %p69
    %p71 = scmp.ne.s32.totalorder %s63, %s66
    %p72 = scmp.eq.s32.totalorder %s11, 0
    %p73 = por %p71, %p72
    %p74 = scmp.ne.s32.totalorder %s63, %s66
    %p75 = scmp.eq.s32.totalorder %s16, 1
    %p76 = por %p74, %p75
    %p77 = scmp.ne.s32.totalorder %s66, %s67
    %p78 = scmp.eq.s32.totalorder %s16, 0
    %p79 = por %p77, %p78
    %p80 = scmp.ne.s32.totalorder %s66, %s67
    %p81 = scmp.eq.s32.totalorder %s17, 1
    %p82 = por %p80, %p81
    %p84 = scmp.ne.s32.totalorder %s67, %s83
    %p85 = scmp.eq.s32.totalorder %s17, 0
    %p86 = por %p84, %p85
    %s87 = ssub.s32 %s18, %s30
    %p88 = scmp.eq.s32.totalorder %s87, 0
    %s90 = sadd.s32 %s89, 1
    %s91 = scalar_select %p88, %s89, %s90
    %p94 = pneg %p88
    %p95 = scmp.eq.s32.totalorder %s11, 1
    %p96 = por %p94, %p95
    %p97 = scmp.ne.s32.totalorder %s89, %s92
    %p98 = scmp.eq.s32.totalorder %s11, 0
    %p99 = por %p97, %p98
    %p100 = scmp.ne.s32.totalorder %s89, %s92
    %p101 = scmp.eq.s32.totalorder %s16, 1
    %p102 = por %p100, %p101
    %p103 = scmp.ne.s32.totalorder %s92, %s93
    %p104 = scmp.eq.s32.totalorder %s16, 0
    %p105 = por %p103, %p104
    %p106 = scmp.ne.s32.totalorder %s92, %s93
    %p107 = scmp.eq.s32.totalorder %s17, 1
    %p108 = por %p106, %p107
    %p110 = scmp.ne.s32.totalorder %s93, %s109
    %p111 = scmp.eq.s32.totalorder %s17, 0
    %p112 = por %p110, %p111
    %s113 = ssub.s32 %s18, %s30
    %p114 = scmp.eq.s32.totalorder %s113, 0
    %s116 = sadd.s32 %s115, 1
    %s117 = scalar_select %p114, %s115, %s116
    %p120 = pneg %p114
    %p121 = scmp.eq.s32.totalorder %s11, 1
    %p122 = por %p120, %p121
    %p123 = scmp.ne.s32.totalorder %s115, %s118
    %p124 = scmp.eq.s32.totalorder %s11, 0
    %p125 = por %p123, %p124
    %p126 = scmp.ne.s32.totalorder %s115, %s118
    %p127 = scmp.eq.s32.totalorder %s16, 1
    %p128 = por %p126, %p127
    %p129 = scmp.ne.s32.totalorder %s118, %s119
    %p130 = scmp.eq.s32.totalorder %s16, 0
    %p131 = por %p129, %p130
    %p132 = scmp.ne.s32.totalorder %s118, %s119
    %p133 = scmp.eq.s32.totalorder %s17, 1
    %p134 = por %p132, %p133
    %p136 = scmp.ne.s32.totalorder %s119, %s135
    %p137 = scmp.eq.s32.totalorder %s17, 0
    %p138 = por %p136, %p137
    %s139 = ssub.s32 %s18, %s30
    %p140 = scmp.eq.s32.totalorder %s139, 0
    %s142 = sadd.s32 %s141, 1
    %s143 = scalar_select %p140, %s141, %s142
    %p146 = pneg %p140
    %p147 = scmp.eq.s32.totalorder %s11, 1
    %p148 = por %p146, %p147
    %p149 = scmp.ne.s32.totalorder %s141, %s144
    %p150 = scmp.eq.s32.totalorder %s11, 0
    %p151 = por %p149, %p150
    %p152 = scmp.ne.s32.totalorder %s141, %s144
    %p153 = scmp.eq.s32.totalorder %s16, 1
    %p154 = por %p152, %p153
    %p155 = scmp.ne.s32.totalorder %s144, %s145
    %p156 = scmp.eq.s32.totalorder %s16, 0
    %p157 = por %p155, %p156
    %p158 = scmp.ne.s32.totalorder %s144, %s145
    %p159 = scmp.eq.s32.totalorder %s17, 1
    %p160 = por %p158, %p159
    %p162 = scmp.ne.s32.totalorder %s145, %s161
    %p163 = scmp.eq.s32.totalorder %s17, 0
    %p164 = por %p162, %p163
    %p165 = scmp.le.s32.totalorder 1, %s11
    %p166 = scmp.lt.s32.totalorder %s11, 3
    %p167 = pnand %p165, %p166
    %p168 = pneg %p167
    // Predicated region
    $region9: #{fwd.10} parent=5 // pred_check
      _
    $region10: #{fwd.10} parent=5 // pred_check_branch
      %170 = sbr.rel (%p167) target = $region12
    $region11: #{fwd.10} parent=5 // pred_region
      %s171 = ssub.s32 %s11, 1
    $region12: #{fwd.10} parent=5 // pred_fallthru
      _
    %p172 = scmp.lt.s32.totalorder %s11, 2
    // Predicated region
    $region13: #{fwd.10} parent=5 // pred_check
      %p173 = pneg %p172
    $region14: #{fwd.10} parent=5 // pred_check_branch
      %175 = sbr.rel (%p173) target = $region16
    $region15: #{fwd.10} parent=5 // pred_region
      // Predicated region
      $region17: #{fwd.10} parent=15 // pred_check
        %p176 = pneg %p45
      $region18: #{fwd.10} parent=15 // pred_check_branch
        %178 = sbr.rel (%p176) target = $region20
      $region19: #{fwd.10} parent=15 // pred_region
        %p179 = scmp.lt.s32.totalorder %s18, 1
        %s180 = scalar_select %p179, %s18, 1
        %p181 = scmp.lt.s32.totalorder %s19, 0
        %s182 = scalar_select %p181, %s19, 0
        %s183 = sadd.s32 %s182, %s180
        %s184 = smul.addr %s183, 2
        %s185 = scalar_lea.vmem %s0, %s184
      $region20: #{fwd.10} parent=15 // pred_fallthru
        _
      // Predicated region
      $region21: #{fwd.10} parent=15 // pred_check
        %p186 = pneg %p73
      $region22: #{fwd.10} parent=15 // pred_check_branch
        %188 = sbr.rel (%p186) target = $region24
      $region23: #{fwd.10} parent=15 // pred_region
        %p189 = scmp.lt.s32.totalorder %s18, 1
        %s190 = scalar_select %p189, %s18, 1
        %p191 = scmp.lt.s32.totalorder %s19, 0
        %s192 = scalar_select %p191, %s19, 0
        %s193 = sadd.s32 %s192, %s190
        %s194 = smul.addr %s193, 2
        %s195 = scalar_lea.vmem %s1, %s194
      $region24: #{fwd.10} parent=15 // pred_fallthru
        _
    $region16: #{fwd.10} parent=5 // pred_fallthru
      _
    %p196 = scmp.le.s32.totalorder 1, %s11
    %p197 = scmp.lt.s32.totalorder %s11, 3
    %p198 = pnand %p196, %p197
    %p199 = pneg %p198
    // Predicated region
    $region25: #{fwd.10} parent=5 // pred_check
      _
    $region26: #{fwd.10} parent=5 // pred_check_branch
      %201 = sbr.rel (%p198) target = $region28
    $region27: #{fwd.10} parent=5 // pred_region
      %s202 = ssub.s32 %s11, 1
      %p203 = scmp.lt.s32.totalorder %s20, 1
      %s204 = scalar_select %p203, %s20, 1
      %p205 = scmp.lt.s32.totalorder %s21, 0
      %s206 = scalar_select %p205, %s21, 0
      %s207 = sadd.s32 %s206, %s204
      %s208 = smul.addr %s207, 2
      %s209 = scalar_lea.vmem %s0, %s208
      %p210 = pneg %p51
      %p211 = pneg %p48
      %p212 = scmp.lt.s32.totalorder %s20, 1
      %s213 = scalar_select %p212, %s20, 1
      %p214 = scmp.lt.s32.totalorder %s21, 0
      %s215 = scalar_select %p214, %s21, 0
      %s216 = sadd.s32 %s215, %s213
      %s217 = smul.addr %s216, 2
      %s218 = scalar_lea.vmem %s1, %s217
      %p219 = pneg %p79
      %p220 = pneg %p76
      %p221 = pneg %p105
      %p222 = pneg %p102
      %p223 = scmp.lt.s32.totalorder %s20, 1
      %s224 = scalar_select %p223, %s20, 1
      %s225 = scalar_lea.vmem %s2, %s224
      %p226 = pneg %p131
      %p227 = pneg %p128
      %p228 = scmp.lt.s32.totalorder %s20, 1
      %s229 = scalar_select %p228, %s20, 1
      %s230 = scalar_lea.vmem %s3, %s229
      %p231 = pneg %p157
      %p232 = pneg %p154
      %p233 = scmp.lt.s32.totalorder %s20, 1
      %s234 = scalar_select %p233, %s20, 1
      %s235 = scalar_lea.vmem %s4, %s234
      %p236 = scmp.lt.s32.totalorder %s20, 1
      %s237 = scalar_select %p236, %s20, 1
      %p238 = scmp.lt.s32.totalorder %s21, 0
      %s239 = scalar_select %p238, %s21, 0
      %s240 = sadd.s32 %s239, %s237
      %s241 = smul.addr %s240, 2
      %s242 = scalar_lea.vmem %s0, %s241
      %p243 = scmp.lt.s32.totalorder %s20, 1
      %s244 = scalar_select %p243, %s20, 1
      %p245 = scmp.lt.s32.totalorder %s21, 0
      %s246 = scalar_select %p245, %s21, 0
      %s247 = sadd.s32 %s246, %s244
      %s248 = smul.addr %s247, 2
      %s249 = scalar_lea.vmem %s1, %s248
      %p250 = scmp.lt.s32.totalorder %s20, 1
      %s251 = scalar_select %p250, %s20, 1
      %s252 = scalar_lea.vmem %s2, %s251
      %p253 = scmp.lt.s32.totalorder %s20, 1
      %s254 = scalar_select %p253, %s20, 1
      %s255 = scalar_lea.vmem %s3, %s254
      %p256 = scmp.lt.s32.totalorder %s20, 1
      %s257 = scalar_select %p256, %s20, 1
      %s258 = scalar_lea.vmem %s4, %s257
      %p259 = scmp.eq.s32.totalorder %s21, 0
      // Predicated region
      $region29: #{fwd.10} parent=27 // pred_check
        %p260 = pneg %p259
      $region30: #{fwd.10} parent=27 // pred_check_branch
        %262 = sbr.rel (%p260) target = $region32
      $region31: #{fwd.10} parent=27 // pred_region
        %263 = vst [vmem:[%s252] sm:$0x1] 0.0
        %264 = vst [vmem:[%s255] sm:$0x1] 0.0
        %265 = vst [vmem:[%s258] sm:$0x1] 0.0
      $region32: #{fwd.10} parent=27 // pred_fallthru
        _
      %v266 = vld [vmem:[%s242] sm:$0x3]
      %v267 = vld [vmem:[%s249] sm:$0x3]
      %v268 = vsub.f32 0.0, %v266
      %v269 = vmax.f32 %v268, 0.0
      %v270 = vand.u32 2147483647, %v266
      %v271 = vsub.f32 0.0, %v270
      %v272 = vmul.f32 %v271, 1.442695
      %v273 = vpow.pop %v272
      %v274 = vadd.f32 %v273, 1.0
      %v275 = vlog2.pop %v274
      %v276 = vmul.f32 %v275, 0.6931472
      %v277 = vadd.f32 %v269, %v276
      %v278 = vadd.f32 %v277, %v266
      %v279 = vsub.f32 0.0, %v277
      %v280 = vmul.f32 %v279, 1.442695
      %v281 = vpow.pop %v280
      %v282 = vld [vmem:[%s252] sm:$0x1]
      %v283 = vmul.f32 %v267, 10.0
      %v284 = vmul.f32 %v283, %v277
      %v285 = vsub.f32 1.0, %v267
      %v286 = vmul.f32 %v285, %v278
      %v287 = vadd.f32 %v284, %v286
      %vm288 = vcmask 1041408
      %v289 = vsel %vm288, %v287, 0.0
      %v290 = vrot.slane %v289, 4
      %v291 = vadd.f32 %v289, %v290
      %v292 = vrot.slane %v291, 2
      %v293 = vadd.f32 %v291, %v292
      %v294 = vrot.slane %v293, 1
      %v295 = vadd.f32 %v293, %v294
      %v296 = vadd.f32 %v282, %v295
      %297 = vst [vmem:[%s252] sm:$0x1] %v296
      %v298 = vld [vmem:[%s255] sm:$0x1]
      %v299 = vmul.f32 %v281, %v267
      %v300 = vsel %vm288, %v299, 0.0
      %v301 = vrot.slane %v300, 4
      %v302 = vadd.f32 %v300, %v301
      %v303 = vrot.slane %v302, 2
      %v304 = vadd.f32 %v302, %v303
      %v305 = vrot.slane %v304, 1
      %v306 = vadd.f32 %v304, %v305
      %v307 = vadd.f32 %v298, %v306
      %308 = vst [vmem:[%s255] sm:$0x1] %v307
      %v309 = vld [vmem:[%s258] sm:$0x1]
      %v310 = vadd.f32 %v281, %v267
      %v311 = vsel %vm288, %v310, 0.0
      %v312 = vrot.slane %v311, 4
      %v313 = vadd.f32 %v311, %v312
      %v314 = vrot.slane %v313, 2
      %v315 = vadd.f32 %v313, %v314
      %v316 = vrot.slane %v315, 1
      %v317 = vadd.f32 %v315, %v316
      %v318 = vadd.f32 %v309, %v317
      %319 = vst [vmem:[%s258] sm:$0x1] %v318
      %p320 = scmp.lt.s32.totalorder %s20, 1
      %s321 = scalar_select %p320, %s20, 1
      %s322 = scalar_lea.vmem %s2, %s321
      %p323 = scmp.lt.s32.totalorder %s20, 1
      %s324 = scalar_select %p323, %s20, 1
      %s325 = scalar_lea.vmem %s3, %s324
      %p326 = scmp.lt.s32.totalorder %s20, 1
      %s327 = scalar_select %p326, %s20, 1
      %s328 = scalar_lea.vmem %s4, %s327
      // Predicated region
      $region33: #{fwd.10} parent=27 // pred_check
        %p329 = pneg %p102
      $region34: #{fwd.10} parent=27 // pred_check_branch
        %331 = sbr.rel (%p329) target = $region36
      $region35: #{fwd.10} parent=27 // pred_region
        _
      $region36: #{fwd.10} parent=27 // pred_fallthru
        _
      // Predicated region
      $region37: #{fwd.10} parent=27 // pred_check
        %p332 = pneg %p128
      $region38: #{fwd.10} parent=27 // pred_check_branch
        %334 = sbr.rel (%p332) target = $region40
      $region39: #{fwd.10} parent=27 // pred_region
        _
      $region40: #{fwd.10} parent=27 // pred_fallthru
        _
      // Predicated region
      $region41: #{fwd.10} parent=27 // pred_check
        %p335 = pneg %p154
      $region42: #{fwd.10} parent=27 // pred_check_branch
        %337 = sbr.rel (%p335) target = $region44
      $region43: #{fwd.10} parent=27 // pred_region
        _
      $region44: #{fwd.10} parent=27 // pred_fallthru
        _
    $region28: #{fwd.10} parent=5 // pred_fallthru
      _
    %p338 = scmp.le.s32.totalorder 2, %s11
    // Predicated region
    $region45: #{fwd.10} parent=5 // pred_check
      %p339 = pneg %p338
    $region46: #{fwd.10} parent=5 // pred_check_branch
      %341 = sbr.rel (%p339) target = $region48
    $region47: #{fwd.10} parent=5 // pred_region
      %s342 = ssub.s32 %s11, 2
      // Predicated region
      $region49: #{fwd.10} parent=47 // pred_check
        %p343 = pneg %p108
      $region50: #{fwd.10} parent=47 // pred_check_branch
        %345 = sbr.rel (%p343) target = $region52
      $region51: #{fwd.10} parent=47 // pred_region
        %p346 = scmp.lt.s32.totalorder %s22, 1
        %s347 = scalar_select %p346, %s22, 1
        %s348 = scalar_lea.vmem %s2, %s347
      $region52: #{fwd.10} parent=47 // pred_fallthru
        _
      // Predicated region
      $region53: #{fwd.10} parent=47 // pred_check
        %p349 = pneg %p134
      $region54: #{fwd.10} parent=47 // pred_check_branch
        %351 = sbr.rel (%p349) target = $region56
      $region55: #{fwd.10} parent=47 // pred_region
        %p352 = scmp.lt.s32.totalorder %s22, 1
        %s353 = scalar_select %p352, %s22, 1
        %s354 = scalar_lea.vmem %s3, %s353
      $region56: #{fwd.10} parent=47 // pred_fallthru
        _
      // Predicated region
      $region57: #{fwd.10} parent=47 // pred_check
        %p355 = pneg %p160
      $region58: #{fwd.10} parent=47 // pred_check_branch
        %357 = sbr.rel (%p355) target = $region60
      $region59: #{fwd.10} parent=47 // pred_region
        %p358 = scmp.lt.s32.totalorder %s22, 1
        %s359 = scalar_select %p358, %s22, 1
        %s360 = scalar_lea.vmem %s4, %s359
      $region60: #{fwd.10} parent=47 // pred_fallthru
        _
    $region48: #{fwd.10} parent=5 // pred_fallthru
      _
  $region6: #{fwd.10} parent=0 // loop_footer
    %s15 = sadd.s32 1, %s11
  $region7: #{fwd.10} parent=0 // loop_footer_branch
    %10 = sbr.rel target = $region3
  $region8: #{fwd.10} parent=0 // loop_exit
    _

</llo_original>
